<compile_context>
chip_gen: v5e
topology: v5e:2x2
jax: 0.10.0
libtpu: 0.0.40
codegen_flags: <defaults>
</compile_context>

<pallas_src>
import functools

import jax
import jax.numpy as jnp
from jax.experimental import pallas as pl
from jax.experimental.pallas import tpu as pltpu

LANE_PAD = 128  # pad Cout to a full lane width


def _fused_cnn_kernel(x_ref, w1_ref, b1_ref, w2_ref, b2_ref,
                      o1_ref, o2_ref, xp1, xp2):
    """One image per grid step.

    x_ref : (1, H, W, Cin)          unpadded NHWC input tile
    w1_ref: (9*Cin, 128)            conv1 im2col weights, Cout zero-padded to 128
    b1_ref: (1, 128)                conv1 bias, zero-padded
    w2_ref: (9*C1, 128)             conv2 im2col weights, zero-padded
    b2_ref: (1, 128)                conv2 bias, zero-padded
    o1_ref: (1, C1, H*W)            hooked conv1 activation, channel-plane layout
    o2_ref: (1, C2, H*W)            conv2 output, channel-plane layout
    xp1   : VMEM (H+2, W+2, Cin)    halo scratch for conv1
    xp2   : VMEM (H+2, W+2, C1)     halo scratch for conv2
    """
    _, h, w, cin = x_ref.shape
    _, c1, hw = o1_ref.shape
    _, c2, _ = o2_ref.shape

    def conv3x3(xpad_ref, wmat_ref, bias_ref, src, c_in):
        # Halo handled in VMEM: zero the scratch, write the interior.
        xpad_ref[...] = jnp.zeros_like(xpad_ref)
        xpad_ref[1:h + 1, 1:w + 1, :] = src
        # im2col: one (H*W, 9*Cin) patch matrix from 9 statically shifted views.
        cols = [xpad_ref[kh:kh + h, kw:kw + w, :].reshape(hw, c_in)
                for kh in range(3) for kw in range(3)]
        patches = jnp.concatenate(cols, axis=-1)            # (H*W, 9*Cin)
        # Single MXU matmul; Cout padded to 128 -> full-vreg result + bias add.
        return jnp.dot(patches, wmat_ref[...],
                       preferred_element_type=jnp.float32) + bias_ref[...]

    # ---- conv1 (the hooked layer) ----
    acc1 = conv3x3(xp1, w1_ref, b1_ref, x_ref[0], cin)       # (H*W, 128)
    # Lane-dense store as channel planes (C1, H*W): aligned (256,128)->(128,256)
    # XLU transpose, unmasked 256-lane stores; NCHW for the caller is a free reshape.
    o1_ref[0, :, :] = jnp.transpose(acc1)[:c1, :]

    # ---- ReLU + conv2 (rest of the backbone; intermediate stays in VMEM) ----
    h1 = jnp.maximum(acc1[:, :c1], 0.0).reshape(h, w, c1)
    acc2 = conv3x3(xp2, w2_ref, b2_ref, h1, c1)              # (H*W, 128)
    o2_ref[0, :, :] = jnp.transpose(acc2)[:c2, :]


def fused_forward_pallas(x_nhwc, w1, b1, w2, b2):
    """Runs conv1+ReLU+conv2 in one pallas_call.

    x_nhwc: (N, H, W, Cin) f32.  Returns (o1, o2) in channel-plane layout
    (N, C, H*W) so NCHW is a pure reshape on the caller side.
    """
    n, h, w, cin = x_nhwc.shape
    c1 = w1.shape[-1]
    c2 = w2.shape[-1]
    hw = h * w

    # im2col weight matrices, Cout zero-padded to a full 128-lane width
    # (zero columns are free on the systolic array).
    w1m = jnp.pad(w1.reshape(9 * cin, c1).astype(jnp.float32),
                  ((0, 0), (0, LANE_PAD - c1)))
    w2m = jnp.pad(w2.reshape(9 * c1, c2).astype(jnp.float32),
                  ((0, 0), (0, LANE_PAD - c2)))
    b1p = jnp.pad(b1.reshape(1, c1).astype(jnp.float32),
                  ((0, 0), (0, LANE_PAD - c1)))
    b2p = jnp.pad(b2.reshape(1, c2).astype(jnp.float32),
                  ((0, 0), (0, LANE_PAD - c2)))

    o1, o2 = pl.pallas_call(
        _fused_cnn_kernel,
        out_shape=(jax.ShapeDtypeStruct((n, c1, hw), jnp.float32),
                   jax.ShapeDtypeStruct((n, c2, hw), jnp.float32)),
        grid_spec=pltpu.PrefetchScalarGridSpec(
            num_scalar_prefetch=0,
            grid=(n,),
            in_specs=[
                pl.BlockSpec((1, h, w, cin), lambda i: (i, 0, 0, 0)),
                pl.BlockSpec((9 * cin, LANE_PAD), lambda i: (0, 0)),
                pl.BlockSpec((1, LANE_PAD), lambda i: (0, 0)),
                pl.BlockSpec((9 * c1, LANE_PAD), lambda i: (0, 0)),
                pl.BlockSpec((1, LANE_PAD), lambda i: (0, 0)),
            ],
            out_specs=[
                pl.BlockSpec((1, c1, hw), lambda i: (i, 0, 0)),
                pl.BlockSpec((1, c2, hw), lambda i: (i, 0, 0)),
            ],
            scratch_shapes=[
                pltpu.VMEM((h + 2, w + 2, cin), jnp.float32),
                pltpu.VMEM((h + 2, w + 2, c1), jnp.float32),
            ],
        ),
        compiler_params=pltpu.CompilerParams(
            dimension_semantics=("parallel",)),   # v7x: both TensorCores busy
    )(x_nhwc, w1m, b1p, w2m, b2p)
    return o1, o2


def make_params(key, cin=4, cmid=8, cout=8):
    """Deterministic backbone parameters in HWIO layout (kH, kW, Cin, Cout)."""
    k1, k2, k3, k4 = jax.random.split(key, 4)
    w1 = jax.random.normal(k1, (3, 3, cin, cmid), jnp.float32) * 0.1
    b1 = jax.random.normal(k2, (cmid,), jnp.float32) * 0.1
    w2 = jax.random.normal(k3, (3, 3, cmid, cout), jnp.float32) * 0.1
    b2 = jax.random.normal(k4, (cout,), jnp.float32) * 0.1
    return {"conv1": (w1, b1), "conv2": (w2, b2)}


@functools.partial(jax.jit, static_argnames=("output_layer_names", "return_single"))
def model_wrapper_forward(params, images_nchw,
                          output_layer_names=("conv1",), return_single=True):
    """Equivalent of ModelWrapper.forward: run the whole backbone, capture hooked
    activations, return the (first) hooked activation in NCHW."""
    n, cin, h, w = images_nchw.shape
    w1, b1 = params["conv1"]
    w2, b2 = params["conv2"]
    c1, c2 = w1.shape[-1], w2.shape[-1]

    # Single tiny NCHW -> NHWC transpose on the input; outputs need no transpose.
    x_nhwc = jnp.transpose(images_nchw, (0, 2, 3, 1))

    o1, o2 = fused_forward_pallas(x_nhwc, w1, b1, w2, b2)

    # Channel-plane (N, C, H*W) kernel layout -> NCHW is a free reshape.
    outputs = {"conv1": o1.reshape(n, c1, h, w),
               "conv2": o2.reshape(n, c2, h, w)}
    vals = [outputs[name] for name in output_layer_names]
    return vals[0] if return_single else vals


if __name__ == "__main__":
    key = jax.random.PRNGKey(0)
    kp, kx = jax.random.split(key)

    N, C, H, W = 2, 4, 16, 16
    params = make_params(kp, cin=C, cmid=8, cout=8)
    images = jax.random.normal(kx, (N, C, H, W), jnp.float32)

    out = model_wrapper_forward(params, images)           # hooked conv1 activation
    out = jax.block_until_ready(out)
    assert out.shape == (N, 8, H, W), out.shape

    # Reference: XLA convs with the same semantics as torch Conv2d(padding=1).
    w1, b1 = params["conv1"]
    w2, b2 = params["conv2"]

    def conv_ref(x_nchw, w_hwio, b):
        return jax.lax.conv_general_dilated(
            x_nchw, jnp.transpose(w_hwio, (3, 2, 0, 1)),   # HWIO -> OIHW
            window_strides=(1, 1), padding=((1, 1), (1, 1)),
            dimension_numbers=("NCHW", "OIHW", "NCHW"),
        ) + b[None, :, None, None]

    ref1 = conv_ref(images, w1, b1)
    assert jnp.allclose(out, ref1, atol=1e-4, rtol=1e-4)

    # Also exercise return_single=False and check that the whole backbone ran.
    both = model_wrapper_forward(params, images,
                                 output_layer_names=("conv1", "conv2"),
                                 return_single=False)
    both = jax.block_until_ready(both)
    ref2 = conv_ref(jnp.maximum(ref1, 0.0), w2, b2)
    assert jnp.allclose(both[0], ref1, atol=1e-4, rtol=1e-4)
    assert jnp.allclose(both[1], ref2, atol=1e-4, rtol=1e-4)

    print("KERNEL_OK")
</pallas_src>

<mosaic_0001>
module attributes {stable_mosaic.version = 11 : i64} {
  func.func @_fused_cnn_kernel(%arg0: i32, %arg1: memref<1x16x16x4xf32, #tpu.memory_space<vmem>>, %arg2: memref<36x128xf32, #tpu.memory_space<vmem>>, %arg3: memref<1x128xf32, #tpu.memory_space<vmem>>, %arg4: memref<72x128xf32, #tpu.memory_space<vmem>>, %arg5: memref<1x128xf32, #tpu.memory_space<vmem>>, %arg6: memref<1x8x256xf32, #tpu.memory_space<vmem>>, %arg7: memref<1x8x256xf32, #tpu.memory_space<vmem>>, %arg8: memref<18x18x4xf32, #tpu.memory_space<vmem>>, %arg9: memref<18x18x8xf32, #tpu.memory_space<vmem>>) attributes {dimension_semantics = [#tpu.dimension_semantics<parallel>], iteration_bounds = array<i64: 2>, scalar_prefetch = 0 : i64, scratch_operands = 2 : i64, tpu.core_type = #tpu.core_type<tc>, window_params = [{transform_indices = @transform_0, window_bounds = array<i64: 1, 16, 16, 4>}, {pipeline_mode = #tpu.pipeline_mode<synchronous>, transform_indices = @transform_1, window_bounds = array<i64: 36, 128>}, {pipeline_mode = #tpu.pipeline_mode<synchronous>, transform_indices = @transform_2, window_bounds = array<i64: 1, 128>}, {pipeline_mode = #tpu.pipeline_mode<synchronous>, transform_indices = @transform_3, window_bounds = array<i64: 72, 128>}, {pipeline_mode = #tpu.pipeline_mode<synchronous>, transform_indices = @transform_4, window_bounds = array<i64: 1, 128>}, {transform_indices = @transform_5, window_bounds = array<i64: 1, 8, 256>}, {transform_indices = @transform_6, window_bounds = array<i64: 1, 8, 256>}]} {
    %c0 = arith.constant 0 : index
    %c0_0 = arith.constant 0 : index
    %c0_1 = arith.constant 0 : index
    %c0_2 = arith.constant 0 : index
    %0 = vector.load %arg1[%c0, %c0_0, %c0_1, %c0_2] : memref<1x16x16x4xf32, #tpu.memory_space<vmem>>, vector<1x16x16x4xf32>
    %1 = vector.shape_cast %0 : vector<1x16x16x4xf32> to vector<16x16x4xf32>
    %cst = arith.constant 0.000000e+00 : f32
    %2 = vector.broadcast %cst : f32 to vector<18x18x4xf32>
    %c0_3 = arith.constant 0 : index
    %c0_4 = arith.constant 0 : index
    %c0_5 = arith.constant 0 : index
    %3 = vector.load %arg8[%c0_3, %c0_4, %c0_5] : memref<18x18x4xf32, #tpu.memory_space<vmem>>, vector<18x18x4xf32>
    tpu.vector_store %arg8[%c0_3, %c0_4, %c0_5], %2 {strides = array<i32>} : memref<18x18x4xf32, #tpu.memory_space<vmem>>, vector<18x18x4xf32>,
    %c1 = arith.constant 1 : index
    %c1_6 = arith.constant 1 : index
    %c0_7 = arith.constant 0 : index
    %4 = vector.load %arg8[%c1, %c1_6, %c0_7] : memref<18x18x4xf32, #tpu.memory_space<vmem>>, vector<16x16x4xf32>
    tpu.vector_store %arg8[%c1, %c1_6, %c0_7], %1 {strides = array<i32>} : memref<18x18x4xf32, #tpu.memory_space<vmem>>, vector<16x16x4xf32>,
    %c0_8 = arith.constant 0 : index
    %c0_9 = arith.constant 0 : index
    %c0_10 = arith.constant 0 : index
    %5 = vector.load %arg8[%c0_8, %c0_9, %c0_10] : memref<18x18x4xf32, #tpu.memory_space<vmem>>, vector<16x16x4xf32>
    %6 = vector.shape_cast %5 : vector<16x16x4xf32> to vector<256x4xf32>
    %c0_11 = arith.constant 0 : index
    %c1_12 = arith.constant 1 : index
    %c0_13 = arith.constant 0 : index
    %7 = vector.load %arg8[%c0_11, %c1_12, %c0_13] : memref<18x18x4xf32, #tpu.memory_space<vmem>>, vector<16x16x4xf32>
    %8 = vector.shape_cast %7 : vector<16x16x4xf32> to vector<256x4xf32>
    %c0_14 = arith.constant 0 : index
    %c2 = arith.constant 2 : index
    %c0_15 = arith.constant 0 : index
    %9 = vector.load %arg8[%c0_14, %c2, %c0_15] : memref<18x18x4xf32, #tpu.memory_space<vmem>>, vector<16x16x4xf32>
    %10 = vector.shape_cast %9 : vector<16x16x4xf32> to vector<256x4xf32>
    %c1_16 = arith.constant 1 : index
    %c0_17 = arith.constant 0 : index
    %c0_18 = arith.constant 0 : index
    %11 = vector.load %arg8[%c1_16, %c0_17, %c0_18] : memref<18x18x4xf32, #tpu.memory_space<vmem>>, vector<16x16x4xf32>
    %12 = vector.shape_cast %11 : vector<16x16x4xf32> to vector<256x4xf32>
    %c1_19 = arith.constant 1 : index
    %c1_20 = arith.constant 1 : index
    %c0_21 = arith.constant 0 : index
    %13 = vector.load %arg8[%c1_19, %c1_20, %c0_21] : memref<18x18x4xf32, #tpu.memory_space<vmem>>, vector<16x16x4xf32>
    %14 = vector.shape_cast %13 : vector<16x16x4xf32> to vector<256x4xf32>
    %c1_22 = arith.constant 1 : index
    %c2_23 = arith.constant 2 : index
    %c0_24 = arith.constant 0 : index
    %15 = vector.load %arg8[%c1_22, %c2_23, %c0_24] : memref<18x18x4xf32, #tpu.memory_space<vmem>>, vector<16x16x4xf32>
    %16 = vector.shape_cast %15 : vector<16x16x4xf32> to vector<256x4xf32>
    %c2_25 = arith.constant 2 : index
    %c0_26 = arith.constant 0 : index
    %c0_27 = arith.constant 0 : index
    %17 = vector.load %arg8[%c2_25, %c0_26, %c0_27] : memref<18x18x4xf32, #tpu.memory_space<vmem>>, vector<16x16x4xf32>
    %18 = vector.shape_cast %17 : vector<16x16x4xf32> to vector<256x4xf32>
    %c2_28 = arith.constant 2 : index
    %c1_29 = arith.constant 1 : index
    %c0_30 = arith.constant 0 : index
    %19 = vector.load %arg8[%c2_28, %c1_29, %c0_30] : memref<18x18x4xf32, #tpu.memory_space<vmem>>, vector<16x16x4xf32>
    %20 = vector.shape_cast %19 : vector<16x16x4xf32> to vector<256x4xf32>
    %c2_31 = arith.constant 2 : index
    %c2_32 = arith.constant 2 : index
    %c0_33 = arith.constant 0 : index
    %21 = vector.load %arg8[%c2_31, %c2_32, %c0_33] : memref<18x18x4xf32, #tpu.memory_space<vmem>>, vector<16x16x4xf32>
    %22 = vector.shape_cast %21 : vector<16x16x4xf32> to vector<256x4xf32>
    %23 = tpu.concatenate %6, %8, %10, %12, %14, %16, %18, %20, %22 in 1 : vector<256x4xf32>, vector<256x4xf32>, vector<256x4xf32>, vector<256x4xf32>, vector<256x4xf32>, vector<256x4xf32>, vector<256x4xf32>, vector<256x4xf32>, vector<256x4xf32> -> vector<256x36xf32>
    %c0_34 = arith.constant 0 : index
    %c0_35 = arith.constant 0 : index
    %24 = vector.load %arg2[%c0_34, %c0_35] : memref<36x128xf32, #tpu.memory_space<vmem>>, vector<36x128xf32>
    %cst_36 = arith.constant dense<0.000000e+00> : vector<256x128xf32>
    %25 = tpu.matmul %23, %24, %cst_36 {dimension_numbers = #tpu.dot_dimension_numbers<[1], [0], [0], [1], [0, 0, 1, 1], [], []>} : vector<256x36xf32>, vector<36x128xf32>, vector<256x128xf32> -> vector<256x128xf32>
    %c0_37 = arith.constant 0 : index
    %c0_38 = arith.constant 0 : index
    %26 = vector.load %arg3[%c0_37, %c0_38] : memref<1x128xf32, #tpu.memory_space<vmem>>, vector<1x128xf32>
    %27 = vector.broadcast %26 : vector<1x128xf32> to vector<256x128xf32>
    %28 = arith.addf %25, %27 : vector<256x128xf32>
    %29 = tpu.transpose %28, [1, 0] : vector<256x128xf32> -> vector<128x256xf32>
    %30 = vector.extract_strided_slice %29 {offsets = [0, 0], sizes = [8, 256], strides = [1, 1]} : vector<128x256xf32> to vector<8x256xf32>
    %c0_39 = arith.constant 0 : index
    %c0_40 = arith.constant 0 : index
    %c0_41 = arith.constant 0 : index
    %31 = vector.load %arg6[%c0_39, %c0_40, %c0_41] : memref<1x8x256xf32, #tpu.memory_space<vmem>>, vector<1x8x256xf32>
    %32 = vector.shape_cast %31 : vector<1x8x256xf32> to vector<8x256xf32>
    %33 = vector.shape_cast %30 : vector<8x256xf32> to vector<1x8x256xf32>
    tpu.vector_store %arg6[%c0_39, %c0_40, %c0_41], %33 {strides = array<i32>} : memref<1x8x256xf32, #tpu.memory_space<vmem>>, vector<1x8x256xf32>,
    %34 = vector.extract_strided_slice %28 {offsets = [0, 0], sizes = [256, 8], strides = [1, 1]} : vector<256x128xf32> to vector<256x8xf32>
    %cst_42 = arith.constant 0.000000e+00 : f32
    %35 = vector.broadcast %cst_42 : f32 to vector<256x8xf32>
    %36 = arith.maximumf %34, %35 : vector<256x8xf32>
    %37 = vector.shape_cast %36 : vector<256x8xf32> to vector<16x16x8xf32>
    %cst_43 = arith.constant 0.000000e+00 : f32
    %38 = vector.broadcast %cst_43 : f32 to vector<18x18x8xf32>
    %c0_44 = arith.constant 0 : index
    %c0_45 = arith.constant 0 : index
    %c0_46 = arith.constant 0 : index
    %39 = vector.load %arg9[%c0_44, %c0_45, %c0_46] : memref<18x18x8xf32, #tpu.memory_space<vmem>>, vector<18x18x8xf32>
    tpu.vector_store %arg9[%c0_44, %c0_45, %c0_46], %38 {strides = array<i32>} : memref<18x18x8xf32, #tpu.memory_space<vmem>>, vector<18x18x8xf32>,
    %c1_47 = arith.constant 1 : index
    %c1_48 = arith.constant 1 : index
    %c0_49 = arith.constant 0 : index
    %40 = vector.load %arg9[%c1_47, %c1_48, %c0_49] : memref<18x18x8xf32, #tpu.memory_space<vmem>>, vector<16x16x8xf32>
    tpu.vector_store %arg9[%c1_47, %c1_48, %c0_49], %37 {strides = array<i32>} : memref<18x18x8xf32, #tpu.memory_space<vmem>>, vector<16x16x8xf32>,
    %c0_50 = arith.constant 0 : index
    %c0_51 = arith.constant 0 : index
    %c0_52 = arith.constant 0 : index
    %41 = vector.load %arg9[%c0_50, %c0_51, %c0_52] : memref<18x18x8xf32, #tpu.memory_space<vmem>>, vector<16x16x8xf32>
    %42 = vector.shape_cast %41 : vector<16x16x8xf32> to vector<256x8xf32>
    %c0_53 = arith.constant 0 : index
    %c1_54 = arith.constant 1 : index
    %c0_55 = arith.constant 0 : index
    %43 = vector.load %arg9[%c0_53, %c1_54, %c0_55] : memref<18x18x8xf32, #tpu.memory_space<vmem>>, vector<16x16x8xf32>
    %44 = vector.shape_cast %43 : vector<16x16x8xf32> to vector<256x8xf32>
    %c0_56 = arith.constant 0 : index
    %c2_57 = arith.constant 2 : index
    %c0_58 = arith.constant 0 : index
    %45 = vector.load %arg9[%c0_56, %c2_57, %c0_58] : memref<18x18x8xf32, #tpu.memory_space<vmem>>, vector<16x16x8xf32>
    %46 = vector.shape_cast %45 : vector<16x16x8xf32> to vector<256x8xf32>
    %c1_59 = arith.constant 1 : index
    %c0_60 = arith.constant 0 : index
    %c0_61 = arith.constant 0 : index
    %47 = vector.load %arg9[%c1_59, %c0_60, %c0_61] : memref<18x18x8xf32, #tpu.memory_space<vmem>>, vector<16x16x8xf32>
    %48 = vector.shape_cast %47 : vector<16x16x8xf32> to vector<256x8xf32>
    %c1_62 = arith.constant 1 : index
    %c1_63 = arith.constant 1 : index
    %c0_64 = arith.constant 0 : index
    %49 = vector.load %arg9[%c1_62, %c1_63, %c0_64] : memref<18x18x8xf32, #tpu.memory_space<vmem>>, vector<16x16x8xf32>
    %50 = vector.shape_cast %49 : vector<16x16x8xf32> to vector<256x8xf32>
    %c1_65 = arith.constant 1 : index
    %c2_66 = arith.constant 2 : index
    %c0_67 = arith.constant 0 : index
    %51 = vector.load %arg9[%c1_65, %c2_66, %c0_67] : memref<18x18x8xf32, #tpu.memory_space<vmem>>, vector<16x16x8xf32>
    %52 = vector.shape_cast %51 : vector<16x16x8xf32> to vector<256x8xf32>
    %c2_68 = arith.constant 2 : index
    %c0_69 = arith.constant 0 : index
    %c0_70 = arith.constant 0 : index
    %53 = vector.load %arg9[%c2_68, %c0_69, %c0_70] : memref<18x18x8xf32, #tpu.memory_space<vmem>>, vector<16x16x8xf32>
    %54 = vector.shape_cast %53 : vector<16x16x8xf32> to vector<256x8xf32>
    %c2_71 = arith.constant 2 : index
    %c1_72 = arith.constant 1 : index
    %c0_73 = arith.constant 0 : index
    %55 = vector.load %arg9[%c2_71, %c1_72, %c0_73] : memref<18x18x8xf32, #tpu.memory_space<vmem>>, vector<16x16x8xf32>
    %56 = vector.shape_cast %55 : vector<16x16x8xf32> to vector<256x8xf32>
    %c2_74 = arith.constant 2 : index
    %c2_75 = arith.constant 2 : index
    %c0_76 = arith.constant 0 : index
    %57 = vector.load %arg9[%c2_74, %c2_75, %c0_76] : memref<18x18x8xf32, #tpu.memory_space<vmem>>, vector<16x16x8xf32>
    %58 = vector.shape_cast %57 : vector<16x16x8xf32> to vector<256x8xf32>
    %59 = tpu.concatenate %42, %44, %46, %48, %50, %52, %54, %56, %58 in 1 : vector<256x8xf32>, vector<256x8xf32>, vector<256x8xf32>, vector<256x8xf32>, vector<256x8xf32>, vector<256x8xf32>, vector<256x8xf32>, vector<256x8xf32>, vector<256x8xf32> -> vector<256x72xf32>
    %c0_77 = arith.constant 0 : index
    %c0_78 = arith.constant 0 : index
    %60 = vector.load %arg4[%c0_77, %c0_78] : memref<72x128xf32, #tpu.memory_space<vmem>>, vector<72x128xf32>
    %cst_79 = arith.constant dense<0.000000e+00> : vector<256x128xf32>
    %61 = tpu.matmul %59, %60, %cst_79 {dimension_numbers = #tpu.dot_dimension_numbers<[1], [0], [0], [1], [0, 0, 1, 1], [], []>} : vector<256x72xf32>, vector<72x128xf32>, vector<256x128xf32> -> vector<256x128xf32>
    %c0_80 = arith.constant 0 : index
    %c0_81 = arith.constant 0 : index
    %62 = vector.load %arg5[%c0_80, %c0_81] : memref<1x128xf32, #tpu.memory_space<vmem>>, vector<1x128xf32>
    %63 = vector.broadcast %62 : vector<1x128xf32> to vector<256x128xf32>
    %64 = arith.addf %61, %63 : vector<256x128xf32>
    %65 = tpu.transpose %64, [1, 0] : vector<256x128xf32> -> vector<128x256xf32>
    %66 = vector.extract_strided_slice %65 {offsets = [0, 0], sizes = [8, 256], strides = [1, 1]} : vector<128x256xf32> to vector<8x256xf32>
    %c0_82 = arith.constant 0 : index
    %c0_83 = arith.constant 0 : index
    %c0_84 = arith.constant 0 : index
    %67 = vector.load %arg7[%c0_82, %c0_83, %c0_84] : memref<1x8x256xf32, #tpu.memory_space<vmem>>, vector<1x8x256xf32>
    %68 = vector.shape_cast %67 : vector<1x8x256xf32> to vector<8x256xf32>
    %69 = vector.shape_cast %66 : vector<8x256xf32> to vector<1x8x256xf32>
    tpu.vector_store %arg7[%c0_82, %c0_83, %c0_84], %69 {strides = array<i32>} : memref<1x8x256xf32, #tpu.memory_space<vmem>>, vector<1x8x256xf32>,
    return
  }
  func.func @transform_0(%arg0: i32) -> (i32, i32, i32, i32) {
    %c0_i32 = arith.constant 0 : i32
    %c0_i32_0 = arith.constant 0 : i32
    %c0_i32_1 = arith.constant 0 : i32
    %c0_i32_2 = arith.constant 0 : i32
    return %arg0, %c0_i32, %c0_i32_0, %c0_i32_1 : i32, i32, i32, i32
  }
  func.func @transform_1(%arg0: i32) -> (i32, i32) {
    %c0_i32 = arith.constant 0 : i32
    %c0_i32_0 = arith.constant 0 : i32
    %c0_i32_1 = arith.constant 0 : i32
    return %c0_i32, %c0_i32_0 : i32, i32
  }
  func.func @transform_2(%arg0: i32) -> (i32, i32) {
    %c0_i32 = arith.constant 0 : i32
    %c0_i32_0 = arith.constant 0 : i32
    %c0_i32_1 = arith.constant 0 : i32
    return %c0_i32, %c0_i32_0 : i32, i32
  }
  func.func @transform_3(%arg0: i32) -> (i32, i32) {
    %c0_i32 = arith.constant 0 : i32
    %c0_i32_0 = arith.constant 0 : i32
    %c0_i32_1 = arith.constant 0 : i32
    return %c0_i32, %c0_i32_0 : i32, i32
  }
  func.func @transform_4(%arg0: i32) -> (i32, i32) {
    %c0_i32 = arith.constant 0 : i32
    %c0_i32_0 = arith.constant 0 : i32
    %c0_i32_1 = arith.constant 0 : i32
    return %c0_i32, %c0_i32_0 : i32, i32
  }
  func.func @transform_5(%arg0: i32) -> (i32, i32, i32) {
    %c0_i32 = arith.constant 0 : i32
    %c0_i32_0 = arith.constant 0 : i32
    %c0_i32_1 = arith.constant 0 : i32
    return %arg0, %c0_i32, %c0_i32_0 : i32, i32, i32
  }
  func.func @transform_6(%arg0: i32) -> (i32, i32, i32) {
    %c0_i32 = arith.constant 0 : i32
    %c0_i32_0 = arith.constant 0 : i32
    %c0_i32_1 = arith.constant 0 : i32
    return %arg0, %c0_i32, %c0_i32_0 : i32, i32, i32
  }
}

</mosaic_0001>

<llo_original>
// kernel: model_wrapper_forward.1
$region0: #{model_wrapper_forward.1}
  #allocation0 [shape = 'u32[]', space=smem, size = 0x4, offset = 0x4, fixed_abs, tag = 'smem constant byte address 0x4 - core index']
  #allocation1 [shape = 'u32[72,128]{1,0:T(1,128)}', space=vmem, size = 0x9000, scoped, tag = 'internal scratch']
  #allocation2 [shape = 'f32[18,18,4]{2,1,0:T(8,128)}', space=vmem, size = 0x36000, scoped, tag = 'scratch operand']
  #allocation3 [shape = 'f32[18,18,8]{2,1,0:T(8,128)}', space=vmem, size = 0x36000, scoped, tag = 'scratch operand']
  %s0 = inlined_call_operand.vmem [shape: f32[2,16,16,4], index: 0, kind: input, shape index: {}]
  %s1 = inlined_call_operand.vmem [shape: f32[36,128], index: 1, kind: input, shape index: {}]
  %s2 = inlined_call_operand.vmem [shape: f32[1,128], index: 2, kind: input, shape index: {}]
  %s3 = inlined_call_operand.vmem [shape: f32[72,128], index: 3, kind: input, shape index: {}]
  %s4 = inlined_call_operand.vmem [shape: f32[1,128], index: 4, kind: input, shape index: {}]
  %s5 = inlined_call_operand.vmem [shape: f32[2,8,256], index: 5, kind: output, shape index: {0}]
  %s6 = inlined_call_operand.hbm [shape: f32[2,8,256], index: 6, kind: output, shape index: {1}]
  %7 = xla_tuple %s5, %s6
  %s8 = sld [smem:[#allocation0]]
  $region61: #{model_wrapper_forward.1} parent=0
    _
  %s10 = ssub.s32 1, %s8
  %s11 = scalar_select 0, %s10, %s8
  $region1: #{model_wrapper_forward.1} parent=0
    #allocation4 [shape = 'u8[16384]{0}', space=vmem, size = 0x4000, scoped, tag = 'output window, operand 1']
    #allocation5 [shape = 's32[2]{0}', space=sflag, size = 0x8, scoped, tag = 'scoped memory for model_wrapper_forward.1']
    %12 = vsyncpa [#allocation5], 0
    %s13 = scalar_lea.sflag [#allocation5], 1
    %14 = vsyncpa %s13, 0
    loop: start=0, step=1, limit=4
    $region2: #{model_wrapper_forward.1} parent=1 // loop_pre_header
      _
    $region3: #{model_wrapper_forward.1} parent=1 // loop_header
      %s16 = sphi 0, %s20
      %p17 = scmp.ge.s32.totalorder %s16, 4
      %s26 = sphi 0, %s28
      %s29 = sphi 0, %s26
      %s30 = sphi 0, %s29
      %s46 = sphi 0, %s30
      %s50 = sphi 0, %s50
      %s52 = sphi 0, %s50
      %s53 = sphi 0, %s52
      %s67 = sphi 0, %s53
      %s71 = sphi 0, %s71
      %s73 = sphi 0, %s71
      %s74 = sphi 0, %s73
      %s88 = sphi 0, %s74
      %s92 = sphi 0, %s92
      %s94 = sphi 0, %s92
      %s95 = sphi 0, %s94
      %s109 = sphi 0, %s95
      %s113 = sphi 0, %s113
      %s115 = sphi 0, %s113
      %s116 = sphi 0, %s115
      %s130 = sphi 0, %s116
      %s136 = sphi 0, %s138
      %s139 = sphi 0, %s136
      %s140 = sphi 0, %s139
      %s156 = sphi 0, %s140
      %s162 = sphi 0, %s164
      %s165 = sphi 0, %s162
      %s166 = sphi 0, %s165
      %s182 = sphi 0, %s166
    $region4: #{model_wrapper_forward.1} parent=1 // loop_header_branch
      %19 = sbr.rel (%p17) target = $region8
    $region5: #{model_wrapper_forward.1} parent=1 // loop_body
      %s21 = ssub.s32 %s16, 1
      %s22 = ssub.s32 %s16, 2
      %s23 = sadd.s32 %s16, 1
      %s24 = ssub.s32 %s16, %s23
      %p25 = scmp.eq.s32.totalorder %s24, 0
      %s27 = sadd.s32 %s26, 1
      %s28 = scalar_select %p25, %s26, %s27
      %p31 = pneg %p25
      %p32 = scmp.eq.s32.totalorder %s16, 1
      %p33 = por %p31, %p32
      %p34 = scmp.ne.s32.totalorder %s26, %s29
      %p35 = scmp.eq.s32.totalorder %s16, 0
      %p36 = por %p34, %p35
      %p37 = scmp.ne.s32.totalorder %s26, %s29
      %p38 = scmp.eq.s32.totalorder %s21, 1
      %p39 = por %p37, %p38
      %p40 = scmp.ne.s32.totalorder %s29, %s30
      %p41 = scmp.eq.s32.totalorder %s21, 0
      %p42 = por %p40, %p41
      %p43 = scmp.ne.s32.totalorder %s29, %s30
      %p44 = scmp.eq.s32.totalorder %s22, 1
      %p45 = por %p43, %p44
      %p47 = scmp.ne.s32.totalorder %s30, %s46
      %p48 = scmp.eq.s32.totalorder %s22, 0
      %p49 = por %p47, %p48
      %s51 = sadd.s32 %s50, 1
      %p54 = scmp.eq.s32.totalorder %s16, 1
      %p55 = scmp.ne.s32.totalorder %s50, %s52
      %p56 = scmp.eq.s32.totalorder %s16, 0
      %p57 = por %p55, %p56
      %p58 = scmp.ne.s32.totalorder %s50, %s52
      %p59 = scmp.eq.s32.totalorder %s21, 1
      %p60 = por %p58, %p59
      %p61 = scmp.ne.s32.totalorder %s52, %s53
      %p62 = scmp.eq.s32.totalorder %s21, 0
      %p63 = por %p61, %p62
      %p64 = scmp.ne.s32.totalorder %s52, %s53
      %p65 = scmp.eq.s32.totalorder %s22, 1
      %p66 = por %p64, %p65
      %p68 = scmp.ne.s32.totalorder %s53, %s67
      %p69 = scmp.eq.s32.totalorder %s22, 0
      %p70 = por %p68, %p69
      %s72 = sadd.s32 %s71, 1
      %p75 = scmp.eq.s32.totalorder %s16, 1
      %p76 = scmp.ne.s32.totalorder %s71, %s73
      %p77 = scmp.eq.s32.totalorder %s16, 0
      %p78 = por %p76, %p77
      %p79 = scmp.ne.s32.totalorder %s71, %s73
      %p80 = scmp.eq.s32.totalorder %s21, 1
      %p81 = por %p79, %p80
      %p82 = scmp.ne.s32.totalorder %s73, %s74
      %p83 = scmp.eq.s32.totalorder %s21, 0
      %p84 = por %p82, %p83
      %p85 = scmp.ne.s32.totalorder %s73, %s74
      %p86 = scmp.eq.s32.totalorder %s22, 1
      %p87 = por %p85, %p86
      %p89 = scmp.ne.s32.totalorder %s74, %s88
      %p90 = scmp.eq.s32.totalorder %s22, 0
      %p91 = por %p89, %p90
      %s93 = sadd.s32 %s92, 1
      %p96 = scmp.eq.s32.totalorder %s16, 1
      %p97 = scmp.ne.s32.totalorder %s92, %s94
      %p98 = scmp.eq.s32.totalorder %s16, 0
      %p99 = por %p97, %p98
      %p100 = scmp.ne.s32.totalorder %s92, %s94
      %p101 = scmp.eq.s32.totalorder %s21, 1
      %p102 = por %p100, %p101
      %p103 = scmp.ne.s32.totalorder %s94, %s95
      %p104 = scmp.eq.s32.totalorder %s21, 0
      %p105 = por %p103, %p104
      %p106 = scmp.ne.s32.totalorder %s94, %s95
      %p107 = scmp.eq.s32.totalorder %s22, 1
      %p108 = por %p106, %p107
      %p110 = scmp.ne.s32.totalorder %s95, %s109
      %p111 = scmp.eq.s32.totalorder %s22, 0
      %p112 = por %p110, %p111
      %s114 = sadd.s32 %s113, 1
      %p117 = scmp.eq.s32.totalorder %s16, 1
      %p118 = scmp.ne.s32.totalorder %s113, %s115
      %p119 = scmp.eq.s32.totalorder %s16, 0
      %p120 = por %p118, %p119
      %p121 = scmp.ne.s32.totalorder %s113, %s115
      %p122 = scmp.eq.s32.totalorder %s21, 1
      %p123 = por %p121, %p122
      %p124 = scmp.ne.s32.totalorder %s115, %s116
      %p125 = scmp.eq.s32.totalorder %s21, 0
      %p126 = por %p124, %p125
      %p127 = scmp.ne.s32.totalorder %s115, %s116
      %p128 = scmp.eq.s32.totalorder %s22, 1
      %p129 = por %p127, %p128
      %p131 = scmp.ne.s32.totalorder %s116, %s130
      %p132 = scmp.eq.s32.totalorder %s22, 0
      %p133 = por %p131, %p132
      %s134 = ssub.s32 %s16, %s23
      %p135 = scmp.eq.s32.totalorder %s134, 0
      %s137 = sadd.s32 %s136, 1
      %s138 = scalar_select %p135, %s136, %s137
      %p141 = pneg %p135
      %p142 = scmp.eq.s32.totalorder %s16, 1
      %p143 = por %p141, %p142
      %p144 = scmp.ne.s32.totalorder %s136, %s139
      %p145 = scmp.eq.s32.totalorder %s16, 0
      %p146 = por %p144, %p145
      %p147 = scmp.ne.s32.totalorder %s136, %s139
      %p148 = scmp.eq.s32.totalorder %s21, 1
      %p149 = por %p147, %p148
      %p150 = scmp.ne.s32.totalorder %s139, %s140
      %p151 = scmp.eq.s32.totalorder %s21, 0
      %p152 = por %p150, %p151
      %p153 = scmp.ne.s32.totalorder %s139, %s140
      %p154 = scmp.eq.s32.totalorder %s22, 1
      %p155 = por %p153, %p154
      %p157 = scmp.ne.s32.totalorder %s140, %s156
      %p158 = scmp.eq.s32.totalorder %s22, 0
      %p159 = por %p157, %p158
      %s160 = ssub.s32 %s16, %s23
      %p161 = scmp.eq.s32.totalorder %s160, 0
      %s163 = sadd.s32 %s162, 1
      %s164 = scalar_select %p161, %s162, %s163
      %p167 = pneg %p161
      %p168 = scmp.eq.s32.totalorder %s16, 1
      %p169 = por %p167, %p168
      %p170 = scmp.ne.s32.totalorder %s162, %s165
      %p171 = scmp.eq.s32.totalorder %s16, 0
      %p172 = por %p170, %p171
      %p173 = scmp.ne.s32.totalorder %s162, %s165
      %p174 = scmp.eq.s32.totalorder %s21, 1
      %p175 = por %p173, %p174
      %p176 = scmp.ne.s32.totalorder %s165, %s166
      %p177 = scmp.eq.s32.totalorder %s21, 0
      %p178 = por %p176, %p177
      %p179 = scmp.ne.s32.totalorder %s165, %s166
      %p180 = scmp.eq.s32.totalorder %s22, 1
      %p181 = por %p179, %p180
      %p183 = scmp.ne.s32.totalorder %s166, %s182
      %p184 = scmp.eq.s32.totalorder %s22, 0
      %p185 = por %p183, %p184
      %p186 = scmp.le.s32.totalorder 1, %s16
      %p187 = scmp.lt.s32.totalorder %s16, 3
      %p188 = pnand %p186, %p187
      %p189 = pneg %p188
      // Predicated region
      $region9: #{model_wrapper_forward.1} parent=5 // pred_check
        _
      $region10: #{model_wrapper_forward.1} parent=5 // pred_check_branch
        %191 = sbr.rel (%p188) target = $region12
      $region11: #{model_wrapper_forward.1} parent=5 // pred_region
        %s192 = ssub.s32 %s16, 1
        // Predicated region
        $region13: #{model_wrapper_forward.1} parent=11 // pred_check
          %p193 = pneg %p63
        $region14: #{model_wrapper_forward.1} parent=11 // pred_check_branch
          %195 = sbr.rel (%p193) target = $region16
        $region15: #{model_wrapper_forward.1} parent=11 // pred_region
          _
        $region16: #{model_wrapper_forward.1} parent=11 // pred_fallthru
          _
        // Predicated region
        $region17: #{model_wrapper_forward.1} parent=11 // pred_check
          %p196 = pneg %p84
        $region18: #{model_wrapper_forward.1} parent=11 // pred_check_branch
          %198 = sbr.rel (%p196) target = $region20
        $region19: #{model_wrapper_forward.1} parent=11 // pred_region
          _
        $region20: #{model_wrapper_forward.1} parent=11 // pred_fallthru
          _
        // Predicated region
        $region21: #{model_wrapper_forward.1} parent=11 // pred_check
          %p199 = pneg %p105
        $region22: #{model_wrapper_forward.1} parent=11 // pred_check_branch
          %201 = sbr.rel (%p199) target = $region24
        $region23: #{model_wrapper_forward.1} parent=11 // pred_region
          _
        $region24: #{model_wrapper_forward.1} parent=11 // pred_fallthru
          _
        // Predicated region
        $region25: #{model_wrapper_forward.1} parent=11 // pred_check
          %p202 = pneg %p126
        $region26: #{model_wrapper_forward.1} parent=11 // pred_check_branch
          %204 = sbr.rel (%p202) target = $region28
        $region27: #{model_wrapper_forward.1} parent=11 // pred_region
          _
        $region28: #{model_wrapper_forward.1} parent=11 // pred_fallthru
          _
      $region12: #{model_wrapper_forward.1} parent=5 // pred_fallthru
        _
      %p205 = scmp.lt.s32.totalorder %s16, 2
      // Predicated region
      $region29: #{model_wrapper_forward.1} parent=5 // pred_check
        %p206 = pneg %p205
      $region30: #{model_wrapper_forward.1} parent=5 // pred_check_branch
        %208 = sbr.rel (%p206) target = $region32
      $region31: #{model_wrapper_forward.1} parent=5 // pred_region
        // Predicated region
        $region33: #{model_wrapper_forward.1} parent=31 // pred_check
          %p209 = pneg %p36
        $region34: #{model_wrapper_forward.1} parent=31 // pred_check_branch
          %211 = sbr.rel (%p209) target = $region36
        $region35: #{model_wrapper_forward.1} parent=31 // pred_region
          %p212 = scmp.lt.s32.totalorder %s16, 1
          %s213 = scalar_select %p212, %s16, 1
          %s214 = smul.addr %s213, 32
          %s215 = smul.addr %s214, 8
          %s216 = scalar_lea.vmem %s0, %s215
        $region36: #{model_wrapper_forward.1} parent=31 // pred_fallthru
          _
      $region32: #{model_wrapper_forward.1} parent=5 // pred_fallthru
        _
      %p217 = scmp.le.s32.totalorder 1, %s16
      %p218 = scmp.lt.s32.totalorder %s16, 3
      %p219 = pnand %p217, %p218
      %p220 = pneg %p219
      // Predicated region
      $region37: #{model_wrapper_forward.1} parent=5 // pred_check
        _
      $region38: #{model_wrapper_forward.1} parent=5 // pred_check_branch
        %222 = sbr.rel (%p219) target = $region40
      $region39: #{model_wrapper_forward.1} parent=5 // pred_region
        %s223 = ssub.s32 %s16, 1
        %p224 = scmp.lt.s32.totalorder %s21, 1
        %s225 = scalar_select %p224, %s21, 1
        %s226 = smul.addr %s225, 32
        %s227 = smul.addr %s226, 8
        %s228 = scalar_lea.vmem %s0, %s227
        %p229 = pneg %p42
        %p230 = pneg %p39
        %p231 = pneg %p63
        %p232 = pneg %p60
        %p233 = pneg %p84
        %p234 = pneg %p81
        %p235 = pneg %p105
        %p236 = pneg %p102
        %p237 = pneg %p126
        %p238 = pneg %p123
        %p239 = pneg %p152
        %p240 = pneg %p149
        %p241 = scmp.lt.s32.totalorder %s21, 1
        %s242 = scalar_select %p241, %s21, 1
        %s243 = smul.addr %s242, 2
        %s244 = smul.addr %s243, 8
        %s245 = scalar_lea.vmem %s5, %s244
        %p246 = pneg %p178
        %p247 = pneg %p175
        %s248 = sand.u32 %s165, 1
        %s249 = scalar_lea.sflag [#allocation5], %s248
        %s250 = sand.u32 %s165, 1
        %s251 = smul.addr %s250, 16
        %s252 = scalar_lea.vmem [#allocation4], %s251
        %p253 = scmp.lt.s32.totalorder %s21, 1
        %s254 = scalar_select %p253, %s21, 1
        %s255 = smul.addr %s254, 32
        %s256 = smul.addr %s255, 8
        %s257 = scalar_lea.vmem %s0, %s256
        %p258 = scmp.lt.s32.totalorder %s21, 1
        %s259 = scalar_select %p258, %s21, 1
        %s260 = smul.addr %s259, 2
        %s261 = smul.addr %s260, 8
        %s262 = scalar_lea.vmem %s5, %s261
        %v263 = vld [vmem:[%s257] sm:$0xff]
        %v264 = vld [vmem:[%s257 + $0x8] sm:$0xff]
        %v265 = vld [vmem:[%s257 + $0x10] sm:$0xff]
        %v266 = vld [vmem:[%s257 + $0x18] sm:$0xff]
        %v267 = vld [vmem:[%s257 + $0x20] sm:$0xff]
        %v268 = vld [vmem:[%s257 + $0x28] sm:$0xff]
        %v269 = vld [vmem:[%s257 + $0x30] sm:$0xff]
        %v270 = vld [vmem:[%s257 + $0x38] sm:$0xff]
        %v271 = vld [vmem:[%s257 + $0x40] sm:$0xff]
        %v272 = vld [vmem:[%s257 + $0x48] sm:$0xff]
        %v273 = vld [vmem:[%s257 + $0x50] sm:$0xff]
        %v274 = vld [vmem:[%s257 + $0x58] sm:$0xff]
        %v275 = vld [vmem:[%s257 + $0x60] sm:$0xff]
        %v276 = vld [vmem:[%s257 + $0x68] sm:$0xff]
        %v277 = vld [vmem:[%s257 + $0x70] sm:$0xff]
        %v278 = vld [vmem:[%s257 + $0x78] sm:$0xff]
        %v279 = vld [vmem:[%s257 + $0x80] sm:$0xff]
        %v280 = vld [vmem:[%s257 + $0x88] sm:$0xff]
        %v281 = vld [vmem:[%s257 + $0x90] sm:$0xff]
        %v282 = vld [vmem:[%s257 + $0x98] sm:$0xff]
        %v283 = vld [vmem:[%s257 + $0xa0] sm:$0xff]
        %v284 = vld [vmem:[%s257 + $0xa8] sm:$0xff]
        %v285 = vld [vmem:[%s257 + $0xb0] sm:$0xff]
        %v286 = vld [vmem:[%s257 + $0xb8] sm:$0xff]
        %v287 = vld [vmem:[%s257 + $0xc0] sm:$0xff]
        %v288 = vld [vmem:[%s257 + $0xc8] sm:$0xff]
        %v289 = vld [vmem:[%s257 + $0xd0] sm:$0xff]
        %v290 = vld [vmem:[%s257 + $0xd8] sm:$0xff]
        %v291 = vld [vmem:[%s257 + $0xe0] sm:$0xff]
        %v292 = vld [vmem:[%s257 + $0xe8] sm:$0xff]
        %v293 = vld [vmem:[%s257 + $0xf0] sm:$0xff]
        %v294 = vld [vmem:[%s257 + $0xf8] sm:$0xff]
        %vm295 = vcmask 31744
        %296 = vst.msk [vmem:[#allocation2] sm:$0xff] %vm295, 0.0
        %297 = vst.msk [vmem:[#allocation2 + $0x8] sm:$0xff] %vm295, 0.0
        %vm298 = vcmask 25600
        %299 = vst.msk [vmem:[#allocation2 + $0x10] sm:$0x3] %vm298, 0.0
        %300 = vst.msk [vmem:[#allocation2 + $0x18] sm:$0xff] %vm295, 0.0
        %301 = vst.msk [vmem:[#allocation2 + $0x20] sm:$0xff] %vm295, 0.0
        %302 = vst.msk [vmem:[#allocation2 + $0x28] sm:$0x3] %vm298, 0.0
        %303 = vst.msk [vmem:[#allocation2 + $0x30] sm:$0xff] %vm295, 0.0
        %304 = vst.msk [vmem:[#allocation2 + $0x38] sm:$0xff] %vm295, 0.0
        %305 = vst.msk [vmem:[#allocation2 + $0x40] sm:$0x3] %vm298, 0.0
        %306 = vst.msk [vmem:[#allocation2 + $0x48] sm:$0xff] %vm295, 0.0
        %307 = vst.msk [vmem:[#allocation2 + $0x50] sm:$0xff] %vm295, 0.0
        %308 = vst.msk [vmem:[#allocation2 + $0x58] sm:$0x3] %vm298, 0.0
        %309 = vst.msk [vmem:[#allocation2 + $0x60] sm:$0xff] %vm295, 0.0
        %310 = vst.msk [vmem:[#allocation2 + $0x68] sm:$0xff] %vm295, 0.0
        %311 = vst.msk [vmem:[#allocation2 + $0x70] sm:$0x3] %vm298, 0.0
        %312 = vst.msk [vmem:[#allocation2 + $0x78] sm:$0xff] %vm295, 0.0
        %313 = vst.msk [vmem:[#allocation2 + $0x80] sm:$0xff] %vm295, 0.0
        %314 = vst.msk [vmem:[#allocation2 + $0x88] sm:$0x3] %vm298, 0.0
        %315 = vst.msk [vmem:[#allocation2 + $0x90] sm:$0xff] %vm295, 0.0
        %316 = vst.msk [vmem:[#allocation2 + $0x98] sm:$0xff] %vm295, 0.0
        %317 = vst.msk [vmem:[#allocation2 + $0xa0] sm:$0x3] %vm298, 0.0
        %318 = vst.msk [vmem:[#allocation2 + $0xa8] sm:$0xff] %vm295, 0.0
        %319 = vst.msk [vmem:[#allocation2 + $0xb0] sm:$0xff] %vm295, 0.0
        %320 = vst.msk [vmem:[#allocation2 + $0xb8] sm:$0x3] %vm298, 0.0
        %321 = vst.msk [vmem:[#allocation2 + $0xc0] sm:$0xff] %vm295, 0.0
        %322 = vst.msk [vmem:[#allocation2 + $0xc8] sm:$0xff] %vm295, 0.0
        %323 = vst.msk [vmem:[#allocation2 + $0xd0] sm:$0x3] %vm298, 0.0
        %324 = vst.msk [vmem:[#allocation2 + $0xd8] sm:$0xff] %vm295, 0.0
        %325 = vst.msk [vmem:[#allocation2 + $0xe0] sm:$0xff] %vm295, 0.0
        %326 = vst.msk [vmem:[#allocation2 + $0xe8] sm:$0x3] %vm298, 0.0
        %327 = vst.msk [vmem:[#allocation2 + $0xf0] sm:$0xff] %vm295, 0.0
        %328 = vst.msk [vmem:[#allocation2 + $0xf8] sm:$0xff] %vm295, 0.0
        %329 = vst.msk [vmem:[#allocation2 + $0x100] sm:$0x3] %vm298, 0.0
        %330 = vst.msk [vmem:[#allocation2 + $0x108] sm:$0xff] %vm295, 0.0
        %331 = vst.msk [vmem:[#allocation2 + $0x110] sm:$0xff] %vm295, 0.0
        %332 = vst.msk [vmem:[#allocation2 + $0x118] sm:$0x3] %vm298, 0.0
        %333 = vst.msk [vmem:[#allocation2 + $0x120] sm:$0xff] %vm295, 0.0
        %334 = vst.msk [vmem:[#allocation2 + $0x128] sm:$0xff] %vm295, 0.0
        %335 = vst.msk [vmem:[#allocation2 + $0x130] sm:$0x3] %vm298, 0.0
        %336 = vst.msk [vmem:[#allocation2 + $0x138] sm:$0xff] %vm295, 0.0
        %337 = vst.msk [vmem:[#allocation2 + $0x140] sm:$0xff] %vm295, 0.0
        %338 = vst.msk [vmem:[#allocation2 + $0x148] sm:$0x3] %vm298, 0.0
        %339 = vst.msk [vmem:[#allocation2 + $0x150] sm:$0xff] %vm295, 0.0
        %340 = vst.msk [vmem:[#allocation2 + $0x158] sm:$0xff] %vm295, 0.0
        %341 = vst.msk [vmem:[#allocation2 + $0x160] sm:$0x3] %vm298, 0.0
        %342 = vst.msk [vmem:[#allocation2 + $0x168] sm:$0xff] %vm295, 0.0
        %343 = vst.msk [vmem:[#allocation2 + $0x170] sm:$0xff] %vm295, 0.0
        %344 = vst.msk [vmem:[#allocation2 + $0x178] sm:$0x3] %vm298, 0.0
        %345 = vst.msk [vmem:[#allocation2 + $0x180] sm:$0xff] %vm295, 0.0
        %346 = vst.msk [vmem:[#allocation2 + $0x188] sm:$0xff] %vm295, 0.0
        %347 = vst.msk [vmem:[#allocation2 + $0x190] sm:$0x3] %vm298, 0.0
        %348 = vst.msk [vmem:[#allocation2 + $0x198] sm:$0xff] %vm295, 0.0
        %349 = vst.msk [vmem:[#allocation2 + $0x1a0] sm:$0xff] %vm295, 0.0
        %350 = vst.msk [vmem:[#allocation2 + $0x1a8] sm:$0x3] %vm298, 0.0
        %s351 = scalar_lea.vmem [#allocation2], 24
        %352 = vst.msk [vmem:[%s351 + $0x1] sm:$0xff] %vm295, %v263
        %353 = vst.msk [vmem:[%s351 + $0x9] sm:$0xff] %vm295, %v264
        %354 = vst.msk [vmem:[%s351 + $0x19] sm:$0xff] %vm295, %v265
        %355 = vst.msk [vmem:[%s351 + $0x21] sm:$0xff] %vm295, %v266
        %356 = vst.msk [vmem:[%s351 + $0x31] sm:$0xff] %vm295, %v267
        %357 = vst.msk [vmem:[%s351 + $0x39] sm:$0xff] %vm295, %v268
        %358 = vst.msk [vmem:[%s351 + $0x49] sm:$0xff] %vm295, %v269
        %359 = vst.msk [vmem:[%s351 + $0x51] sm:$0xff] %vm295, %v270
        %360 = vst.msk [vmem:[%s351 + $0x61] sm:$0xff] %vm295, %v271
        %361 = vst.msk [vmem:[%s351 + $0x69] sm:$0xff] %vm295, %v272
        %362 = vst.msk [vmem:[%s351 + $0x79] sm:$0xff] %vm295, %v273
        %363 = vst.msk [vmem:[%s351 + $0x81] sm:$0xff] %vm295, %v274
        %364 = vst.msk [vmem:[%s351 + $0x91] sm:$0xff] %vm295, %v275
        %365 = vst.msk [vmem:[%s351 + $0x99] sm:$0xff] %vm295, %v276
        %366 = vst.msk [vmem:[%s351 + $0xa9] sm:$0xff] %vm295, %v277
        %367 = vst.msk [vmem:[%s351 + $0xb1] sm:$0xff] %vm295, %v278
        %368 = vst.msk [vmem:[%s351 + $0xc1] sm:$0xff] %vm295, %v279
        %369 = vst.msk [vmem:[%s351 + $0xc9] sm:$0xff] %vm295, %v280
        %370 = vst.msk [vmem:[%s351 + $0xd9] sm:$0xff] %vm295, %v281
        %371 = vst.msk [vmem:[%s351 + $0xe1] sm:$0xff] %vm295, %v282
        %372 = vst.msk [vmem:[%s351 + $0xf1] sm:$0xff] %vm295, %v283
        %373 = vst.msk [vmem:[%s351 + $0xf9] sm:$0xff] %vm295, %v284
        %374 = vst.msk [vmem:[%s351 + $0x109] sm:$0xff] %vm295, %v285
        %375 = vst.msk [vmem:[%s351 + $0x111] sm:$0xff] %vm295, %v286
        %376 = vst.msk [vmem:[%s351 + $0x121] sm:$0xff] %vm295, %v287
        %377 = vst.msk [vmem:[%s351 + $0x129] sm:$0xff] %vm295, %v288
        %378 = vst.msk [vmem:[%s351 + $0x139] sm:$0xff] %vm295, %v289
        %379 = vst.msk [vmem:[%s351 + $0x141] sm:$0xff] %vm295, %v290
        %380 = vst.msk [vmem:[%s351 + $0x151] sm:$0xff] %vm295, %v291
        %381 = vst.msk [vmem:[%s351 + $0x159] sm:$0xff] %vm295, %v292
        %382 = vst.msk [vmem:[%s351 + $0x169] sm:$0xff] %vm295, %v293
        %383 = vst.msk [vmem:[%s351 + $0x171] sm:$0xff] %vm295, %v294
        %v384 = vld [vmem:[#allocation2] sm:$0xff]
        %v385 = vld [vmem:[#allocation2 + $0x8] sm:$0xff]
        %v386 = vld [vmem:[#allocation2 + $0x18] sm:$0xff]
        %v387 = vld [vmem:[#allocation2 + $0x20] sm:$0xff]
        %v388 = vld [vmem:[#allocation2 + $0x30] sm:$0xff]
        %v389 = vld [vmem:[#allocation2 + $0x38] sm:$0xff]
        %v390 = vld [vmem:[#allocation2 + $0x48] sm:$0xff]
        %v391 = vld [vmem:[#allocation2 + $0x50] sm:$0xff]
        %v392 = vld [vmem:[#allocation2 + $0x60] sm:$0xff]
        %v393 = vld [vmem:[#allocation2 + $0x68] sm:$0xff]
        %v394 = vld [vmem:[#allocation2 + $0x78] sm:$0xff]
        %v395 = vld [vmem:[#allocation2 + $0x80] sm:$0xff]
        %v396 = vld [vmem:[#allocation2 + $0x90] sm:$0xff]
        %v397 = vld [vmem:[#allocation2 + $0x98] sm:$0xff]
        %v398 = vld [vmem:[#allocation2 + $0xa8] sm:$0xff]
        %v399 = vld [vmem:[#allocation2 + $0xb0] sm:$0xff]
        %v400 = vld [vmem:[#allocation2 + $0xc0] sm:$0xff]
        %v401 = vld [vmem:[#allocation2 + $0xc8] sm:$0xff]
        %v402 = vld [vmem:[#allocation2 + $0xd8] sm:$0xff]
        %v403 = vld [vmem:[#allocation2 + $0xe0] sm:$0xff]
        %v404 = vld [vmem:[#allocation2 + $0xf0] sm:$0xff]
        %v405 = vld [vmem:[#allocation2 + $0xf8] sm:$0xff]
        %v406 = vld [vmem:[#allocation2 + $0x108] sm:$0xff]
        %v407 = vld [vmem:[#allocation2 + $0x110] sm:$0xff]
        %v408 = vld [vmem:[#allocation2 + $0x120] sm:$0xff]
        %v409 = vld [vmem:[#allocation2 + $0x128] sm:$0xff]
        %v410 = vld [vmem:[#allocation2 + $0x138] sm:$0xff]
        %v411 = vld [vmem:[#allocation2 + $0x140] sm:$0xff]
        %v412 = vld [vmem:[#allocation2 + $0x150] sm:$0xff]
        %v413 = vld [vmem:[#allocation2 + $0x158] sm:$0xff]
        %v414 = vld [vmem:[#allocation2 + $0x168] sm:$0xff]
        %v415 = vld [vmem:[#allocation2 + $0x170] sm:$0xff]
        %v416 = vld [vmem:[#allocation2 + $0x1] sm:$0xff]
        %v417 = vld [vmem:[#allocation2 + $0x9] sm:$0xff]
        %v418 = vld [vmem:[#allocation2 + $0x19] sm:$0xff]
        %v419 = vld [vmem:[#allocation2 + $0x21] sm:$0xff]
        %v420 = vld [vmem:[#allocation2 + $0x31] sm:$0xff]
        %v421 = vld [vmem:[#allocation2 + $0x39] sm:$0xff]
        %v422 = vld [vmem:[#allocation2 + $0x49] sm:$0xff]
        %v423 = vld [vmem:[#allocation2 + $0x51] sm:$0xff]
        %v424 = vld [vmem:[#allocation2 + $0x61] sm:$0xff]
        %v425 = vld [vmem:[#allocation2 + $0x69] sm:$0xff]
        %v426 = vld [vmem:[#allocation2 + $0x79] sm:$0xff]
        %v427 = vld [vmem:[#allocation2 + $0x81] sm:$0xff]
        %v428 = vld [vmem:[#allocation2 + $0x91] sm:$0xff]
        %v429 = vld [vmem:[#allocation2 + $0x99] sm:$0xff]
        %v430 = vld [vmem:[#allocation2 + $0xa9] sm:$0xff]
        %v431 = vld [vmem:[#allocation2 + $0xb1] sm:$0xff]
        %v432 = vld [vmem:[#allocation2 + $0xc1] sm:$0xff]
        %v433 = vld [vmem:[#allocation2 + $0xc9] sm:$0xff]
        %v434 = vld [vmem:[#allocation2 + $0xd9] sm:$0xff]
        %v435 = vld [vmem:[#allocation2 + $0xe1] sm:$0xff]
        %v436 = vld [vmem:[#allocation2 + $0xf1] sm:$0xff]
        %v437 = vld [vmem:[#allocation2 + $0xf9] sm:$0xff]
        %v438 = vld [vmem:[#allocation2 + $0x109] sm:$0xff]
        %v439 = vld [vmem:[#allocation2 + $0x111] sm:$0xff]
        %v440 = vld [vmem:[#allocation2 + $0x121] sm:$0xff]
        %v441 = vld [vmem:[#allocation2 + $0x129] sm:$0xff]
        %v442 = vld [vmem:[#allocation2 + $0x139] sm:$0xff]
        %v443 = vld [vmem:[#allocation2 + $0x141] sm:$0xff]
        %v444 = vld [vmem:[#allocation2 + $0x151] sm:$0xff]
        %v445 = vld [vmem:[#allocation2 + $0x159] sm:$0xff]
        %v446 = vld [vmem:[#allocation2 + $0x169] sm:$0xff]
        %v447 = vld [vmem:[#allocation2 + $0x171] sm:$0xff]
        %v448 = vld [vmem:[#allocation2 + $0x2] sm:$0xff]
        %v449 = vld [vmem:[#allocation2 + $0xa] sm:$0xff]
        %v450 = vld [vmem:[#allocation2 + $0x1a] sm:$0xff]
        %v451 = vld [vmem:[#allocation2 + $0x22] sm:$0xff]
        %v452 = vld [vmem:[#allocation2 + $0x32] sm:$0xff]
        %v453 = vld [vmem:[#allocation2 + $0x3a] sm:$0xff]
        %v454 = vld [vmem:[#allocation2 + $0x4a] sm:$0xff]
        %v455 = vld [vmem:[#allocation2 + $0x52] sm:$0xff]
        %v456 = vld [vmem:[#allocation2 + $0x62] sm:$0xff]
        %v457 = vld [vmem:[#allocation2 + $0x6a] sm:$0xff]
        %v458 = vld [vmem:[#allocation2 + $0x7a] sm:$0xff]
        %v459 = vld [vmem:[#allocation2 + $0x82] sm:$0xff]
        %v460 = vld [vmem:[#allocation2 + $0x92] sm:$0xff]
        %v461 = vld [vmem:[#allocation2 + $0x9a] sm:$0xff]
        %v462 = vld [vmem:[#allocation2 + $0xaa] sm:$0xff]
        %v463 = vld [vmem:[#allocation2 + $0xb2] sm:$0xff]
        %v464 = vld [vmem:[#allocation2 + $0xc2] sm:$0xff]
        %v465 = vld [vmem:[#allocation2 + $0xca] sm:$0xff]
        %v466 = vld [vmem:[#allocation2 + $0xda] sm:$0xff]
        %v467 = vld [vmem:[#allocation2 + $0xe2] sm:$0xff]
        %v468 = vld [vmem:[#allocation2 + $0xf2] sm:$0xff]
        %v469 = vld [vmem:[#allocation2 + $0xfa] sm:$0xff]
        %v470 = vld [vmem:[#allocation2 + $0x10a] sm:$0xff]
        %v471 = vld [vmem:[#allocation2 + $0x112] sm:$0xff]
        %v472 = vld [vmem:[#allocation2 + $0x122] sm:$0xff]
        %v473 = vld [vmem:[#allocation2 + $0x12a] sm:$0xff]
        %v474 = vld [vmem:[#allocation2 + $0x13a] sm:$0xff]
        %v475 = vld [vmem:[#allocation2 + $0x142] sm:$0xff]
        %v476 = vld [vmem:[#allocation2 + $0x152] sm:$0xff]
        %v477 = vld [vmem:[#allocation2 + $0x15a] sm:$0xff]
        %v478 = vld [vmem:[#allocation2 + $0x16a] sm:$0xff]
        %v479 = vld [vmem:[#allocation2 + $0x172] sm:$0xff]
        %v480 = vld [vmem:[%s351] sm:$0xff]
        %v481 = vld [vmem:[%s351 + $0x8] sm:$0xff]
        %v482 = vld [vmem:[%s351 + $0x18] sm:$0xff]
        %v483 = vld [vmem:[%s351 + $0x20] sm:$0xff]
        %v484 = vld [vmem:[%s351 + $0x30] sm:$0xff]
        %v485 = vld [vmem:[%s351 + $0x38] sm:$0xff]
        %v486 = vld [vmem:[%s351 + $0x48] sm:$0xff]
        %v487 = vld [vmem:[%s351 + $0x50] sm:$0xff]
        %v488 = vld [vmem:[%s351 + $0x60] sm:$0xff]
        %v489 = vld [vmem:[%s351 + $0x68] sm:$0xff]
        %v490 = vld [vmem:[%s351 + $0x78] sm:$0xff]
        %v491 = vld [vmem:[%s351 + $0x80] sm:$0xff]
        %v492 = vld [vmem:[%s351 + $0x90] sm:$0xff]
        %v493 = vld [vmem:[%s351 + $0x98] sm:$0xff]
        %v494 = vld [vmem:[%s351 + $0xa8] sm:$0xff]
        %v495 = vld [vmem:[%s351 + $0xb0] sm:$0xff]
        %v496 = vld [vmem:[%s351 + $0xc0] sm:$0xff]
        %v497 = vld [vmem:[%s351 + $0xc8] sm:$0xff]
        %v498 = vld [vmem:[%s351 + $0xd8] sm:$0xff]
        %v499 = vld [vmem:[%s351 + $0xe0] sm:$0xff]
        %v500 = vld [vmem:[%s351 + $0xf0] sm:$0xff]
        %v501 = vld [vmem:[%s351 + $0xf8] sm:$0xff]
        %v502 = vld [vmem:[%s351 + $0x108] sm:$0xff]
        %v503 = vld [vmem:[%s351 + $0x110] sm:$0xff]
        %v504 = vld [vmem:[%s351 + $0x120] sm:$0xff]
        %v505 = vld [vmem:[%s351 + $0x128] sm:$0xff]
        %v506 = vld [vmem:[%s351 + $0x138] sm:$0xff]
        %v507 = vld [vmem:[%s351 + $0x140] sm:$0xff]
        %v508 = vld [vmem:[%s351 + $0x150] sm:$0xff]
        %v509 = vld [vmem:[%s351 + $0x158] sm:$0xff]
        %v510 = vld [vmem:[%s351 + $0x168] sm:$0xff]
        %v511 = vld [vmem:[%s351 + $0x170] sm:$0xff]
        %v512 = vld [vmem:[%s351 + $0x1] sm:$0xff]
        %v513 = vld [vmem:[%s351 + $0x9] sm:$0xff]
        %v514 = vld [vmem:[%s351 + $0x19] sm:$0xff]
        %v515 = vld [vmem:[%s351 + $0x21] sm:$0xff]
        %v516 = vld [vmem:[%s351 + $0x31] sm:$0xff]
        %v517 = vld [vmem:[%s351 + $0x39] sm:$0xff]
        %v518 = vld [vmem:[%s351 + $0x49] sm:$0xff]
        %v519 = vld [vmem:[%s351 + $0x51] sm:$0xff]
        %v520 = vld [vmem:[%s351 + $0x61] sm:$0xff]
        %v521 = vld [vmem:[%s351 + $0x69] sm:$0xff]
        %v522 = vld [vmem:[%s351 + $0x79] sm:$0xff]
        %v523 = vld [vmem:[%s351 + $0x81] sm:$0xff]
        %v524 = vld [vmem:[%s351 + $0x91] sm:$0xff]
        %v525 = vld [vmem:[%s351 + $0x99] sm:$0xff]
        %v526 = vld [vmem:[%s351 + $0xa9] sm:$0xff]
        %v527 = vld [vmem:[%s351 + $0xb1] sm:$0xff]
        %v528 = vld [vmem:[%s351 + $0xc1] sm:$0xff]
        %v529 = vld [vmem:[%s351 + $0xc9] sm:$0xff]
        %v530 = vld [vmem:[%s351 + $0xd9] sm:$0xff]
        %v531 = vld [vmem:[%s351 + $0xe1] sm:$0xff]
        %v532 = vld [vmem:[%s351 + $0xf1] sm:$0xff]
        %v533 = vld [vmem:[%s351 + $0xf9] sm:$0xff]
        %v534 = vld [vmem:[%s351 + $0x109] sm:$0xff]
        %v535 = vld [vmem:[%s351 + $0x111] sm:$0xff]
        %v536 = vld [vmem:[%s351 + $0x121] sm:$0xff]
        %v537 = vld [vmem:[%s351 + $0x129] sm:$0xff]
        %v538 = vld [vmem:[%s351 + $0x139] sm:$0xff]
        %v539 = vld [vmem:[%s351 + $0x141] sm:$0xff]
        %v540 = vld [vmem:[%s351 + $0x151] sm:$0xff]
        %v541 = vld [vmem:[%s351 + $0x159] sm:$0xff]
        %v542 = vld [vmem:[%s351 + $0x169] sm:$0xff]
        %v543 = vld [vmem:[%s351 + $0x171] sm:$0xff]
        %v544 = vld [vmem:[%s351 + $0x2] sm:$0xff]
        %v545 = vld [vmem:[%s351 + $0xa] sm:$0xff]
        %v546 = vld [vmem:[%s351 + $0x1a] sm:$0xff]
        %v547 = vld [vmem:[%s351 + $0x22] sm:$0xff]
        %v548 = vld [vmem:[%s351 + $0x32] sm:$0xff]
        %v549 = vld [vmem:[%s351 + $0x3a] sm:$0xff]
        %v550 = vld [vmem:[%s351 + $0x4a] sm:$0xff]
        %v551 = vld [vmem:[%s351 + $0x52] sm:$0xff]
        %v552 = vld [vmem:[%s351 + $0x62] sm:$0xff]
        %v553 = vld [vmem:[%s351 + $0x6a] sm:$0xff]
        %v554 = vld [vmem:[%s351 + $0x7a] sm:$0xff]
        %v555 = vld [vmem:[%s351 + $0x82] sm:$0xff]
        %v556 = vld [vmem:[%s351 + $0x92] sm:$0xff]
        %v557 = vld [vmem:[%s351 + $0x9a] sm:$0xff]
        %v558 = vld [vmem:[%s351 + $0xaa] sm:$0xff]
        %v559 = vld [vmem:[%s351 + $0xb2] sm:$0xff]
        %v560 = vld [vmem:[%s351 + $0xc2] sm:$0xff]
        %v561 = vld [vmem:[%s351 + $0xca] sm:$0xff]
        %v562 = vld [vmem:[%s351 + $0xda] sm:$0xff]
        %v563 = vld [vmem:[%s351 + $0xe2] sm:$0xff]
        %v564 = vld [vmem:[%s351 + $0xf2] sm:$0xff]
        %v565 = vld [vmem:[%s351 + $0xfa] sm:$0xff]
        %v566 = vld [vmem:[%s351 + $0x10a] sm:$0xff]
        %v567 = vld [vmem:[%s351 + $0x112] sm:$0xff]
        %v568 = vld [vmem:[%s351 + $0x122] sm:$0xff]
        %v569 = vld [vmem:[%s351 + $0x12a] sm:$0xff]
        %v570 = vld [vmem:[%s351 + $0x13a] sm:$0xff]
        %v571 = vld [vmem:[%s351 + $0x142] sm:$0xff]
        %v572 = vld [vmem:[%s351 + $0x152] sm:$0xff]
        %v573 = vld [vmem:[%s351 + $0x15a] sm:$0xff]
        %v574 = vld [vmem:[%s351 + $0x16a] sm:$0xff]
        %v575 = vld [vmem:[%s351 + $0x172] sm:$0xff]
        %s576 = scalar_lea.vmem [#allocation2], 48
        %v577 = vld [vmem:[%s576] sm:$0xff]
        %v578 = vld [vmem:[%s576 + $0x8] sm:$0xff]
        %v579 = vld [vmem:[%s576 + $0x18] sm:$0xff]
        %v580 = vld [vmem:[%s576 + $0x20] sm:$0xff]
        %v581 = vld [vmem:[%s576 + $0x30] sm:$0xff]
        %v582 = vld [vmem:[%s576 + $0x38] sm:$0xff]
        %v583 = vld [vmem:[%s576 + $0x48] sm:$0xff]
        %v584 = vld [vmem:[%s576 + $0x50] sm:$0xff]
        %v585 = vld [vmem:[%s576 + $0x60] sm:$0xff]
        %v586 = vld [vmem:[%s576 + $0x68] sm:$0xff]
        %v587 = vld [vmem:[%s576 + $0x78] sm:$0xff]
        %v588 = vld [vmem:[%s576 + $0x80] sm:$0xff]
        %v589 = vld [vmem:[%s576 + $0x90] sm:$0xff]
        %v590 = vld [vmem:[%s576 + $0x98] sm:$0xff]
        %v591 = vld [vmem:[%s576 + $0xa8] sm:$0xff]
        %v592 = vld [vmem:[%s576 + $0xb0] sm:$0xff]
        %v593 = vld [vmem:[%s576 + $0xc0] sm:$0xff]
        %v594 = vld [vmem:[%s576 + $0xc8] sm:$0xff]
        %v595 = vld [vmem:[%s576 + $0xd8] sm:$0xff]
        %v596 = vld [vmem:[%s576 + $0xe0] sm:$0xff]
        %v597 = vld [vmem:[%s576 + $0xf0] sm:$0xff]
        %v598 = vld [vmem:[%s576 + $0xf8] sm:$0xff]
        %v599 = vld [vmem:[%s576 + $0x108] sm:$0xff]
        %v600 = vld [vmem:[%s576 + $0x110] sm:$0xff]
        %v601 = vld [vmem:[%s576 + $0x120] sm:$0xff]
        %v602 = vld [vmem:[%s576 + $0x128] sm:$0xff]
        %v603 = vld [vmem:[%s576 + $0x138] sm:$0xff]
        %v604 = vld [vmem:[%s576 + $0x140] sm:$0xff]
        %v605 = vld [vmem:[%s576 + $0x150] sm:$0xff]
        %v606 = vld [vmem:[%s576 + $0x158] sm:$0xff]
        %v607 = vld [vmem:[%s576 + $0x168] sm:$0xff]
        %v608 = vld [vmem:[%s576 + $0x170] sm:$0xff]
        %v609 = vld [vmem:[%s576 + $0x1] sm:$0xff]
        %v610 = vld [vmem:[%s576 + $0x9] sm:$0xff]
        %v611 = vld [vmem:[%s576 + $0x19] sm:$0xff]
        %v612 = vld [vmem:[%s576 + $0x21] sm:$0xff]
        %v613 = vld [vmem:[%s576 + $0x31] sm:$0xff]
        %v614 = vld [vmem:[%s576 + $0x39] sm:$0xff]
        %v615 = vld [vmem:[%s576 + $0x49] sm:$0xff]
        %v616 = vld [vmem:[%s576 + $0x51] sm:$0xff]
        %v617 = vld [vmem:[%s576 + $0x61] sm:$0xff]
        %v618 = vld [vmem:[%s576 + $0x69] sm:$0xff]
        %v619 = vld [vmem:[%s576 + $0x79] sm:$0xff]
        %v620 = vld [vmem:[%s576 + $0x81] sm:$0xff]
        %v621 = vld [vmem:[%s576 + $0x91] sm:$0xff]
        %v622 = vld [vmem:[%s576 + $0x99] sm:$0xff]
        %v623 = vld [vmem:[%s576 + $0xa9] sm:$0xff]
        %v624 = vld [vmem:[%s576 + $0xb1] sm:$0xff]
        %v625 = vld [vmem:[%s576 + $0xc1] sm:$0xff]
        %v626 = vld [vmem:[%s576 + $0xc9] sm:$0xff]
        %v627 = vld [vmem:[%s576 + $0xd9] sm:$0xff]
        %v628 = vld [vmem:[%s576 + $0xe1] sm:$0xff]
        %v629 = vld [vmem:[%s576 + $0xf1] sm:$0xff]
        %v630 = vld [vmem:[%s576 + $0xf9] sm:$0xff]
        %v631 = vld [vmem:[%s576 + $0x109] sm:$0xff]
        %v632 = vld [vmem:[%s576 + $0x111] sm:$0xff]
        %v633 = vld [vmem:[%s576 + $0x121] sm:$0xff]
        %v634 = vld [vmem:[%s576 + $0x129] sm:$0xff]
        %v635 = vld [vmem:[%s576 + $0x139] sm:$0xff]
        %v636 = vld [vmem:[%s576 + $0x141] sm:$0xff]
        %v637 = vld [vmem:[%s576 + $0x151] sm:$0xff]
        %v638 = vld [vmem:[%s576 + $0x159] sm:$0xff]
        %v639 = vld [vmem:[%s576 + $0x169] sm:$0xff]
        %v640 = vld [vmem:[%s576 + $0x171] sm:$0xff]
        %v641 = vld [vmem:[%s576 + $0x2] sm:$0xff]
        %v642 = vld [vmem:[%s576 + $0xa] sm:$0xff]
        %v643 = vld [vmem:[%s576 + $0x1a] sm:$0xff]
        %v644 = vld [vmem:[%s576 + $0x22] sm:$0xff]
        %v645 = vld [vmem:[%s576 + $0x32] sm:$0xff]
        %v646 = vld [vmem:[%s576 + $0x3a] sm:$0xff]
        %v647 = vld [vmem:[%s576 + $0x4a] sm:$0xff]
        %v648 = vld [vmem:[%s576 + $0x52] sm:$0xff]
        %v649 = vld [vmem:[%s576 + $0x62] sm:$0xff]
        %v650 = vld [vmem:[%s576 + $0x6a] sm:$0xff]
        %v651 = vld [vmem:[%s576 + $0x7a] sm:$0xff]
        %v652 = vld [vmem:[%s576 + $0x82] sm:$0xff]
        %v653 = vld [vmem:[%s576 + $0x92] sm:$0xff]
        %v654 = vld [vmem:[%s576 + $0x9a] sm:$0xff]
        %v655 = vld [vmem:[%s576 + $0xaa] sm:$0xff]
        %v656 = vld [vmem:[%s576 + $0xb2] sm:$0xff]
        %v657 = vld [vmem:[%s576 + $0xc2] sm:$0xff]
        %v658 = vld [vmem:[%s576 + $0xca] sm:$0xff]
        %v659 = vld [vmem:[%s576 + $0xda] sm:$0xff]
        %v660 = vld [vmem:[%s576 + $0xe2] sm:$0xff]
        %v661 = vld [vmem:[%s576 + $0xf2] sm:$0xff]
        %v662 = vld [vmem:[%s576 + $0xfa] sm:$0xff]
        %v663 = vld [vmem:[%s576 + $0x10a] sm:$0xff]
        %v664 = vld [vmem:[%s576 + $0x112] sm:$0xff]
        %v665 = vld [vmem:[%s576 + $0x122] sm:$0xff]
        %v666 = vld [vmem:[%s576 + $0x12a] sm:$0xff]
        %v667 = vld [vmem:[%s576 + $0x13a] sm:$0xff]
        %v668 = vld [vmem:[%s576 + $0x142] sm:$0xff]
        %v669 = vld [vmem:[%s576 + $0x152] sm:$0xff]
        %v670 = vld [vmem:[%s576 + $0x15a] sm:$0xff]
        %v671 = vld [vmem:[%s576 + $0x16a] sm:$0xff]
        %v672 = vld [vmem:[%s576 + $0x172] sm:$0xff]
        %705 = vrot.lane.b32.xlu0 %v416, 4
        %v706 = vpop.permute.xlu0 %705
        %707 = vrot.lane.b32.xlu0 %v417, 4
        %v708 = vpop.permute.xlu0 %707
        %709 = vrot.lane.b32.xlu0 %v418, 4
        %v710 = vpop.permute.xlu0 %709
        %711 = vrot.lane.b32.xlu0 %v419, 4
        %v712 = vpop.permute.xlu0 %711
        %713 = vrot.lane.b32.xlu0 %v420, 4
        %v714 = vpop.permute.xlu0 %713
        %715 = vrot.lane.b32.xlu0 %v421, 4
        %v716 = vpop.permute.xlu0 %715
        %717 = vrot.lane.b32.xlu0 %v422, 4
        %v718 = vpop.permute.xlu0 %717
        %719 = vrot.lane.b32.xlu0 %v423, 4
        %v720 = vpop.permute.xlu0 %719
        %721 = vrot.lane.b32.xlu0 %v424, 4
        %v722 = vpop.permute.xlu0 %721
        %723 = vrot.lane.b32.xlu0 %v425, 4
        %v724 = vpop.permute.xlu0 %723
        %725 = vrot.lane.b32.xlu0 %v426, 4
        %v726 = vpop.permute.xlu0 %725
        %727 = vrot.lane.b32.xlu0 %v427, 4
        %v728 = vpop.permute.xlu0 %727
        %729 = vrot.lane.b32.xlu0 %v428, 4
        %v730 = vpop.permute.xlu0 %729
        %731 = vrot.lane.b32.xlu0 %v429, 4
        %v732 = vpop.permute.xlu0 %731
        %733 = vrot.lane.b32.xlu0 %v430, 4
        %v734 = vpop.permute.xlu0 %733
        %735 = vrot.lane.b32.xlu0 %v431, 4
        %v736 = vpop.permute.xlu0 %735
        %737 = vrot.lane.b32.xlu0 %v432, 4
        %v738 = vpop.permute.xlu0 %737
        %739 = vrot.lane.b32.xlu0 %v433, 4
        %v740 = vpop.permute.xlu0 %739
        %741 = vrot.lane.b32.xlu0 %v434, 4
        %v742 = vpop.permute.xlu0 %741
        %743 = vrot.lane.b32.xlu0 %v435, 4
        %v744 = vpop.permute.xlu0 %743
        %745 = vrot.lane.b32.xlu0 %v436, 4
        %v746 = vpop.permute.xlu0 %745
        %747 = vrot.lane.b32.xlu0 %v437, 4
        %v748 = vpop.permute.xlu0 %747
        %749 = vrot.lane.b32.xlu0 %v438, 4
        %v750 = vpop.permute.xlu0 %749
        %751 = vrot.lane.b32.xlu0 %v439, 4
        %v752 = vpop.permute.xlu0 %751
        %753 = vrot.lane.b32.xlu0 %v440, 4
        %v754 = vpop.permute.xlu0 %753
        %755 = vrot.lane.b32.xlu0 %v441, 4
        %v756 = vpop.permute.xlu0 %755
        %757 = vrot.lane.b32.xlu0 %v442, 4
        %v758 = vpop.permute.xlu0 %757
        %759 = vrot.lane.b32.xlu0 %v443, 4
        %v760 = vpop.permute.xlu0 %759
        %761 = vrot.lane.b32.xlu0 %v444, 4
        %v762 = vpop.permute.xlu0 %761
        %763 = vrot.lane.b32.xlu0 %v445, 4
        %v764 = vpop.permute.xlu0 %763
        %765 = vrot.lane.b32.xlu0 %v446, 4
        %v766 = vpop.permute.xlu0 %765
        %767 = vrot.lane.b32.xlu0 %v447, 4
        %v768 = vpop.permute.xlu0 %767
        %833 = vrot.lane.b32.xlu0 %v448, 8
        %v834 = vpop.permute.xlu0 %833
        %835 = vrot.lane.b32.xlu0 %v449, 8
        %v836 = vpop.permute.xlu0 %835
        %837 = vrot.lane.b32.xlu0 %v450, 8
        %v838 = vpop.permute.xlu0 %837
        %839 = vrot.lane.b32.xlu0 %v451, 8
        %v840 = vpop.permute.xlu0 %839
        %841 = vrot.lane.b32.xlu0 %v452, 8
        %v842 = vpop.permute.xlu0 %841
        %843 = vrot.lane.b32.xlu0 %v453, 8
        %v844 = vpop.permute.xlu0 %843
        %845 = vrot.lane.b32.xlu0 %v454, 8
        %v846 = vpop.permute.xlu0 %845
        %847 = vrot.lane.b32.xlu0 %v455, 8
        %v848 = vpop.permute.xlu0 %847
        %849 = vrot.lane.b32.xlu0 %v456, 8
        %v850 = vpop.permute.xlu0 %849
        %851 = vrot.lane.b32.xlu0 %v457, 8
        %v852 = vpop.permute.xlu0 %851
        %853 = vrot.lane.b32.xlu0 %v458, 8
        %v854 = vpop.permute.xlu0 %853
        %855 = vrot.lane.b32.xlu0 %v459, 8
        %v856 = vpop.permute.xlu0 %855
        %857 = vrot.lane.b32.xlu0 %v460, 8
        %v858 = vpop.permute.xlu0 %857
        %859 = vrot.lane.b32.xlu0 %v461, 8
        %v860 = vpop.permute.xlu0 %859
        %861 = vrot.lane.b32.xlu0 %v462, 8
        %v862 = vpop.permute.xlu0 %861
        %863 = vrot.lane.b32.xlu0 %v463, 8
        %v864 = vpop.permute.xlu0 %863
        %865 = vrot.lane.b32.xlu0 %v464, 8
        %v866 = vpop.permute.xlu0 %865
        %867 = vrot.lane.b32.xlu0 %v465, 8
        %v868 = vpop.permute.xlu0 %867
        %869 = vrot.lane.b32.xlu0 %v466, 8
        %v870 = vpop.permute.xlu0 %869
        %871 = vrot.lane.b32.xlu0 %v467, 8
        %v872 = vpop.permute.xlu0 %871
        %873 = vrot.lane.b32.xlu0 %v468, 8
        %v874 = vpop.permute.xlu0 %873
        %875 = vrot.lane.b32.xlu0 %v469, 8
        %v876 = vpop.permute.xlu0 %875
        %877 = vrot.lane.b32.xlu0 %v470, 8
        %v878 = vpop.permute.xlu0 %877
        %879 = vrot.lane.b32.xlu0 %v471, 8
        %v880 = vpop.permute.xlu0 %879
        %881 = vrot.lane.b32.xlu0 %v472, 8
        %v882 = vpop.permute.xlu0 %881
        %883 = vrot.lane.b32.xlu0 %v473, 8
        %v884 = vpop.permute.xlu0 %883
        %885 = vrot.lane.b32.xlu0 %v474, 8
        %v886 = vpop.permute.xlu0 %885
        %887 = vrot.lane.b32.xlu0 %v475, 8
        %v888 = vpop.permute.xlu0 %887
        %889 = vrot.lane.b32.xlu0 %v476, 8
        %v890 = vpop.permute.xlu0 %889
        %891 = vrot.lane.b32.xlu0 %v477, 8
        %v892 = vpop.permute.xlu0 %891
        %893 = vrot.lane.b32.xlu0 %v478, 8
        %v894 = vpop.permute.xlu0 %893
        %895 = vrot.lane.b32.xlu0 %v479, 8
        %v896 = vpop.permute.xlu0 %895
        %961 = vrot.lane.b32.xlu0 %v480, 12
        %v962 = vpop.permute.xlu0 %961
        %963 = vrot.lane.b32.xlu0 %v481, 12
        %v964 = vpop.permute.xlu0 %963
        %965 = vrot.lane.b32.xlu0 %v482, 12
        %v966 = vpop.permute.xlu0 %965
        %967 = vrot.lane.b32.xlu0 %v483, 12
        %v968 = vpop.permute.xlu0 %967
        %969 = vrot.lane.b32.xlu0 %v484, 12
        %v970 = vpop.permute.xlu0 %969
        %971 = vrot.lane.b32.xlu0 %v485, 12
        %v972 = vpop.permute.xlu0 %971
        %973 = vrot.lane.b32.xlu0 %v486, 12
        %v974 = vpop.permute.xlu0 %973
        %975 = vrot.lane.b32.xlu0 %v487, 12
        %v976 = vpop.permute.xlu0 %975
        %977 = vrot.lane.b32.xlu0 %v488, 12
        %v978 = vpop.permute.xlu0 %977
        %979 = vrot.lane.b32.xlu0 %v489, 12
        %v980 = vpop.permute.xlu0 %979
        %981 = vrot.lane.b32.xlu0 %v490, 12
        %v982 = vpop.permute.xlu0 %981
        %983 = vrot.lane.b32.xlu0 %v491, 12
        %v984 = vpop.permute.xlu0 %983
        %985 = vrot.lane.b32.xlu0 %v492, 12
        %v986 = vpop.permute.xlu0 %985
        %987 = vrot.lane.b32.xlu0 %v493, 12
        %v988 = vpop.permute.xlu0 %987
        %989 = vrot.lane.b32.xlu0 %v494, 12
        %v990 = vpop.permute.xlu0 %989
        %991 = vrot.lane.b32.xlu0 %v495, 12
        %v992 = vpop.permute.xlu0 %991
        %993 = vrot.lane.b32.xlu0 %v496, 12
        %v994 = vpop.permute.xlu0 %993
        %995 = vrot.lane.b32.xlu0 %v497, 12
        %v996 = vpop.permute.xlu0 %995
        %997 = vrot.lane.b32.xlu0 %v498, 12
        %v998 = vpop.permute.xlu0 %997
        %999 = vrot.lane.b32.xlu0 %v499, 12
        %v1000 = vpop.permute.xlu0 %999
        %1001 = vrot.lane.b32.xlu0 %v500, 12
        %v1002 = vpop.permute.xlu0 %1001
        %1003 = vrot.lane.b32.xlu0 %v501, 12
        %v1004 = vpop.permute.xlu0 %1003
        %1005 = vrot.lane.b32.xlu0 %v502, 12
        %v1006 = vpop.permute.xlu0 %1005
        %1007 = vrot.lane.b32.xlu0 %v503, 12
        %v1008 = vpop.permute.xlu0 %1007
        %1009 = vrot.lane.b32.xlu0 %v504, 12
        %v1010 = vpop.permute.xlu0 %1009
        %1011 = vrot.lane.b32.xlu0 %v505, 12
        %v1012 = vpop.permute.xlu0 %1011
        %1013 = vrot.lane.b32.xlu0 %v506, 12
        %v1014 = vpop.permute.xlu0 %1013
        %1015 = vrot.lane.b32.xlu0 %v507, 12
        %v1016 = vpop.permute.xlu0 %1015
        %1017 = vrot.lane.b32.xlu0 %v508, 12
        %v1018 = vpop.permute.xlu0 %1017
        %1019 = vrot.lane.b32.xlu0 %v509, 12
        %v1020 = vpop.permute.xlu0 %1019
        %1021 = vrot.lane.b32.xlu0 %v510, 12
        %v1022 = vpop.permute.xlu0 %1021
        %1023 = vrot.lane.b32.xlu0 %v511, 12
        %v1024 = vpop.permute.xlu0 %1023
        %1089 = vrot.lane.b32.xlu0 %v512, 16
        %v1090 = vpop.permute.xlu0 %1089
        %1091 = vrot.lane.b32.xlu0 %v513, 16
        %v1092 = vpop.permute.xlu0 %1091
        %1093 = vrot.lane.b32.xlu0 %v514, 16
        %v1094 = vpop.permute.xlu0 %1093
        %1095 = vrot.lane.b32.xlu0 %v515, 16
        %v1096 = vpop.permute.xlu0 %1095
        %1097 = vrot.lane.b32.xlu0 %v516, 16
        %v1098 = vpop.permute.xlu0 %1097
        %1099 = vrot.lane.b32.xlu0 %v517, 16
        %v1100 = vpop.permute.xlu0 %1099
        %1101 = vrot.lane.b32.xlu0 %v518, 16
        %v1102 = vpop.permute.xlu0 %1101
        %1103 = vrot.lane.b32.xlu0 %v519, 16
        %v1104 = vpop.permute.xlu0 %1103
        %1105 = vrot.lane.b32.xlu0 %v520, 16
        %v1106 = vpop.permute.xlu0 %1105
        %1107 = vrot.lane.b32.xlu0 %v521, 16
        %v1108 = vpop.permute.xlu0 %1107
        %1109 = vrot.lane.b32.xlu0 %v522, 16
        %v1110 = vpop.permute.xlu0 %1109
        %1111 = vrot.lane.b32.xlu0 %v523, 16
        %v1112 = vpop.permute.xlu0 %1111
        %1113 = vrot.lane.b32.xlu0 %v524, 16
        %v1114 = vpop.permute.xlu0 %1113
        %1115 = vrot.lane.b32.xlu0 %v525, 16
        %v1116 = vpop.permute.xlu0 %1115
        %1117 = vrot.lane.b32.xlu0 %v526, 16
        %v1118 = vpop.permute.xlu0 %1117
        %1119 = vrot.lane.b32.xlu0 %v527, 16
        %v1120 = vpop.permute.xlu0 %1119
        %1121 = vrot.lane.b32.xlu0 %v528, 16
        %v1122 = vpop.permute.xlu0 %1121
        %1123 = vrot.lane.b32.xlu0 %v529, 16
        %v1124 = vpop.permute.xlu0 %1123
        %1125 = vrot.lane.b32.xlu0 %v530, 16
        %v1126 = vpop.permute.xlu0 %1125
        %1127 = vrot.lane.b32.xlu0 %v531, 16
        %v1128 = vpop.permute.xlu0 %1127
        %1129 = vrot.lane.b32.xlu0 %v532, 16
        %v1130 = vpop.permute.xlu0 %1129
        %1131 = vrot.lane.b32.xlu0 %v533, 16
        %v1132 = vpop.permute.xlu0 %1131
        %1133 = vrot.lane.b32.xlu0 %v534, 16
        %v1134 = vpop.permute.xlu0 %1133
        %1135 = vrot.lane.b32.xlu0 %v535, 16
        %v1136 = vpop.permute.xlu0 %1135
        %1137 = vrot.lane.b32.xlu0 %v536, 16
        %v1138 = vpop.permute.xlu0 %1137
        %1139 = vrot.lane.b32.xlu0 %v537, 16
        %v1140 = vpop.permute.xlu0 %1139
        %1141 = vrot.lane.b32.xlu0 %v538, 16
        %v1142 = vpop.permute.xlu0 %1141
        %1143 = vrot.lane.b32.xlu0 %v539, 16
        %v1144 = vpop.permute.xlu0 %1143
        %1145 = vrot.lane.b32.xlu0 %v540, 16
        %v1146 = vpop.permute.xlu0 %1145
        %1147 = vrot.lane.b32.xlu0 %v541, 16
        %v1148 = vpop.permute.xlu0 %1147
        %1149 = vrot.lane.b32.xlu0 %v542, 16
        %v1150 = vpop.permute.xlu0 %1149
        %1151 = vrot.lane.b32.xlu0 %v543, 16
        %v1152 = vpop.permute.xlu0 %1151
        %1217 = vrot.lane.b32.xlu0 %v544, 20
        %v1218 = vpop.permute.xlu0 %1217
        %1219 = vrot.lane.b32.xlu0 %v545, 20
        %v1220 = vpop.permute.xlu0 %1219
        %1221 = vrot.lane.b32.xlu0 %v546, 20
        %v1222 = vpop.permute.xlu0 %1221
        %1223 = vrot.lane.b32.xlu0 %v547, 20
        %v1224 = vpop.permute.xlu0 %1223
        %1225 = vrot.lane.b32.xlu0 %v548, 20
        %v1226 = vpop.permute.xlu0 %1225
        %1227 = vrot.lane.b32.xlu0 %v549, 20
        %v1228 = vpop.permute.xlu0 %1227
        %1229 = vrot.lane.b32.xlu0 %v550, 20
        %v1230 = vpop.permute.xlu0 %1229
        %1231 = vrot.lane.b32.xlu0 %v551, 20
        %v1232 = vpop.permute.xlu0 %1231
        %1233 = vrot.lane.b32.xlu0 %v552, 20
        %v1234 = vpop.permute.xlu0 %1233
        %1235 = vrot.lane.b32.xlu0 %v553, 20
        %v1236 = vpop.permute.xlu0 %1235
        %1237 = vrot.lane.b32.xlu0 %v554, 20
        %v1238 = vpop.permute.xlu0 %1237
        %1239 = vrot.lane.b32.xlu0 %v555, 20
        %v1240 = vpop.permute.xlu0 %1239
        %1241 = vrot.lane.b32.xlu0 %v556, 20
        %v1242 = vpop.permute.xlu0 %1241
        %1243 = vrot.lane.b32.xlu0 %v557, 20
        %v1244 = vpop.permute.xlu0 %1243
        %1245 = vrot.lane.b32.xlu0 %v558, 20
        %v1246 = vpop.permute.xlu0 %1245
        %1247 = vrot.lane.b32.xlu0 %v559, 20
        %v1248 = vpop.permute.xlu0 %1247
        %1249 = vrot.lane.b32.xlu0 %v560, 20
        %v1250 = vpop.permute.xlu0 %1249
        %1251 = vrot.lane.b32.xlu0 %v561, 20
        %v1252 = vpop.permute.xlu0 %1251
        %1253 = vrot.lane.b32.xlu0 %v562, 20
        %v1254 = vpop.permute.xlu0 %1253
        %1255 = vrot.lane.b32.xlu0 %v563, 20
        %v1256 = vpop.permute.xlu0 %1255
        %1257 = vrot.lane.b32.xlu0 %v564, 20
        %v1258 = vpop.permute.xlu0 %1257
        %1259 = vrot.lane.b32.xlu0 %v565, 20
        %v1260 = vpop.permute.xlu0 %1259
        %1261 = vrot.lane.b32.xlu0 %v566, 20
        %v1262 = vpop.permute.xlu0 %1261
        %1263 = vrot.lane.b32.xlu0 %v567, 20
        %v1264 = vpop.permute.xlu0 %1263
        %1265 = vrot.lane.b32.xlu0 %v568, 20
        %v1266 = vpop.permute.xlu0 %1265
        %1267 = vrot.lane.b32.xlu0 %v569, 20
        %v1268 = vpop.permute.xlu0 %1267
        %1269 = vrot.lane.b32.xlu0 %v570, 20
        %v1270 = vpop.permute.xlu0 %1269
        %1271 = vrot.lane.b32.xlu0 %v571, 20
        %v1272 = vpop.permute.xlu0 %1271
        %1273 = vrot.lane.b32.xlu0 %v572, 20
        %v1274 = vpop.permute.xlu0 %1273
        %1275 = vrot.lane.b32.xlu0 %v573, 20
        %v1276 = vpop.permute.xlu0 %1275
        %1277 = vrot.lane.b32.xlu0 %v574, 20
        %v1278 = vpop.permute.xlu0 %1277
        %1279 = vrot.lane.b32.xlu0 %v575, 20
        %v1280 = vpop.permute.xlu0 %1279
        %1345 = vrot.lane.b32.xlu0 %v577, 24
        %v1346 = vpop.permute.xlu0 %1345
        %1347 = vrot.lane.b32.xlu0 %v578, 24
        %v1348 = vpop.permute.xlu0 %1347
        %1349 = vrot.lane.b32.xlu0 %v579, 24
        %v1350 = vpop.permute.xlu0 %1349
        %1351 = vrot.lane.b32.xlu0 %v580, 24
        %v1352 = vpop.permute.xlu0 %1351
        %1353 = vrot.lane.b32.xlu0 %v581, 24
        %v1354 = vpop.permute.xlu0 %1353
        %1355 = vrot.lane.b32.xlu0 %v582, 24
        %v1356 = vpop.permute.xlu0 %1355
        %1357 = vrot.lane.b32.xlu0 %v583, 24
        %v1358 = vpop.permute.xlu0 %1357
        %1359 = vrot.lane.b32.xlu0 %v584, 24
        %v1360 = vpop.permute.xlu0 %1359
        %1361 = vrot.lane.b32.xlu0 %v585, 24
        %v1362 = vpop.permute.xlu0 %1361
        %1363 = vrot.lane.b32.xlu0 %v586, 24
        %v1364 = vpop.permute.xlu0 %1363
        %1365 = vrot.lane.b32.xlu0 %v587, 24
        %v1366 = vpop.permute.xlu0 %1365
        %1367 = vrot.lane.b32.xlu0 %v588, 24
        %v1368 = vpop.permute.xlu0 %1367
        %1369 = vrot.lane.b32.xlu0 %v589, 24
        %v1370 = vpop.permute.xlu0 %1369
        %1371 = vrot.lane.b32.xlu0 %v590, 24
        %v1372 = vpop.permute.xlu0 %1371
        %1373 = vrot.lane.b32.xlu0 %v591, 24
        %v1374 = vpop.permute.xlu0 %1373
        %1375 = vrot.lane.b32.xlu0 %v592, 24
        %v1376 = vpop.permute.xlu0 %1375
        %1377 = vrot.lane.b32.xlu0 %v593, 24
        %v1378 = vpop.permute.xlu0 %1377
        %1379 = vrot.lane.b32.xlu0 %v594, 24
        %v1380 = vpop.permute.xlu0 %1379
        %1381 = vrot.lane.b32.xlu0 %v595, 24
        %v1382 = vpop.permute.xlu0 %1381
        %1383 = vrot.lane.b32.xlu0 %v596, 24
        %v1384 = vpop.permute.xlu0 %1383
        %1385 = vrot.lane.b32.xlu0 %v597, 24
        %v1386 = vpop.permute.xlu0 %1385
        %1387 = vrot.lane.b32.xlu0 %v598, 24
        %v1388 = vpop.permute.xlu0 %1387
        %1389 = vrot.lane.b32.xlu0 %v599, 24
        %v1390 = vpop.permute.xlu0 %1389
        %1391 = vrot.lane.b32.xlu0 %v600, 24
        %v1392 = vpop.permute.xlu0 %1391
        %1393 = vrot.lane.b32.xlu0 %v601, 24
        %v1394 = vpop.permute.xlu0 %1393
        %1395 = vrot.lane.b32.xlu0 %v602, 24
        %v1396 = vpop.permute.xlu0 %1395
        %1397 = vrot.lane.b32.xlu0 %v603, 24
        %v1398 = vpop.permute.xlu0 %1397
        %1399 = vrot.lane.b32.xlu0 %v604, 24
        %v1400 = vpop.permute.xlu0 %1399
        %1401 = vrot.lane.b32.xlu0 %v605, 24
        %v1402 = vpop.permute.xlu0 %1401
        %1403 = vrot.lane.b32.xlu0 %v606, 24
        %v1404 = vpop.permute.xlu0 %1403
        %1405 = vrot.lane.b32.xlu0 %v607, 24
        %v1406 = vpop.permute.xlu0 %1405
        %1407 = vrot.lane.b32.xlu0 %v608, 24
        %v1408 = vpop.permute.xlu0 %1407
        %1473 = vrot.lane.b32.xlu0 %v609, 28
        %v1474 = vpop.permute.xlu0 %1473
        %1475 = vrot.lane.b32.xlu0 %v610, 28
        %v1476 = vpop.permute.xlu0 %1475
        %1477 = vrot.lane.b32.xlu0 %v611, 28
        %v1478 = vpop.permute.xlu0 %1477
        %1479 = vrot.lane.b32.xlu0 %v612, 28
        %v1480 = vpop.permute.xlu0 %1479
        %1481 = vrot.lane.b32.xlu0 %v613, 28
        %v1482 = vpop.permute.xlu0 %1481
        %1483 = vrot.lane.b32.xlu0 %v614, 28
        %v1484 = vpop.permute.xlu0 %1483
        %1485 = vrot.lane.b32.xlu0 %v615, 28
        %v1486 = vpop.permute.xlu0 %1485
        %1487 = vrot.lane.b32.xlu0 %v616, 28
        %v1488 = vpop.permute.xlu0 %1487
        %1489 = vrot.lane.b32.xlu0 %v617, 28
        %v1490 = vpop.permute.xlu0 %1489
        %1491 = vrot.lane.b32.xlu0 %v618, 28
        %v1492 = vpop.permute.xlu0 %1491
        %1493 = vrot.lane.b32.xlu0 %v619, 28
        %v1494 = vpop.permute.xlu0 %1493
        %1495 = vrot.lane.b32.xlu0 %v620, 28
        %v1496 = vpop.permute.xlu0 %1495
        %1497 = vrot.lane.b32.xlu0 %v621, 28
        %v1498 = vpop.permute.xlu0 %1497
        %1499 = vrot.lane.b32.xlu0 %v622, 28
        %v1500 = vpop.permute.xlu0 %1499
        %1501 = vrot.lane.b32.xlu0 %v623, 28
        %v1502 = vpop.permute.xlu0 %1501
        %1503 = vrot.lane.b32.xlu0 %v624, 28
        %v1504 = vpop.permute.xlu0 %1503
        %1505 = vrot.lane.b32.xlu0 %v625, 28
        %v1506 = vpop.permute.xlu0 %1505
        %1507 = vrot.lane.b32.xlu0 %v626, 28
        %v1508 = vpop.permute.xlu0 %1507
        %1509 = vrot.lane.b32.xlu0 %v627, 28
        %v1510 = vpop.permute.xlu0 %1509
        %1511 = vrot.lane.b32.xlu0 %v628, 28
        %v1512 = vpop.permute.xlu0 %1511
        %1513 = vrot.lane.b32.xlu0 %v629, 28
        %v1514 = vpop.permute.xlu0 %1513
        %1515 = vrot.lane.b32.xlu0 %v630, 28
        %v1516 = vpop.permute.xlu0 %1515
        %1517 = vrot.lane.b32.xlu0 %v631, 28
        %v1518 = vpop.permute.xlu0 %1517
        %1519 = vrot.lane.b32.xlu0 %v632, 28
        %v1520 = vpop.permute.xlu0 %1519
        %1521 = vrot.lane.b32.xlu0 %v633, 28
        %v1522 = vpop.permute.xlu0 %1521
        %1523 = vrot.lane.b32.xlu0 %v634, 28
        %v1524 = vpop.permute.xlu0 %1523
        %1525 = vrot.lane.b32.xlu0 %v635, 28
        %v1526 = vpop.permute.xlu0 %1525
        %1527 = vrot.lane.b32.xlu0 %v636, 28
        %v1528 = vpop.permute.xlu0 %1527
        %1529 = vrot.lane.b32.xlu0 %v637, 28
        %v1530 = vpop.permute.xlu0 %1529
        %1531 = vrot.lane.b32.xlu0 %v638, 28
        %v1532 = vpop.permute.xlu0 %1531
        %1533 = vrot.lane.b32.xlu0 %v639, 28
        %v1534 = vpop.permute.xlu0 %1533
        %1535 = vrot.lane.b32.xlu0 %v640, 28
        %v1536 = vpop.permute.xlu0 %1535
        %1601 = vrot.lane.b32.xlu0 %v641, 32
        %v1602 = vpop.permute.xlu0 %1601
        %1603 = vrot.lane.b32.xlu0 %v642, 32
        %v1604 = vpop.permute.xlu0 %1603
        %1605 = vrot.lane.b32.xlu0 %v643, 32
        %v1606 = vpop.permute.xlu0 %1605
        %1607 = vrot.lane.b32.xlu0 %v644, 32
        %v1608 = vpop.permute.xlu0 %1607
        %1609 = vrot.lane.b32.xlu0 %v645, 32
        %v1610 = vpop.permute.xlu0 %1609
        %1611 = vrot.lane.b32.xlu0 %v646, 32
        %v1612 = vpop.permute.xlu0 %1611
        %1613 = vrot.lane.b32.xlu0 %v647, 32
        %v1614 = vpop.permute.xlu0 %1613
        %1615 = vrot.lane.b32.xlu0 %v648, 32
        %v1616 = vpop.permute.xlu0 %1615
        %1617 = vrot.lane.b32.xlu0 %v649, 32
        %v1618 = vpop.permute.xlu0 %1617
        %1619 = vrot.lane.b32.xlu0 %v650, 32
        %v1620 = vpop.permute.xlu0 %1619
        %1621 = vrot.lane.b32.xlu0 %v651, 32
        %v1622 = vpop.permute.xlu0 %1621
        %1623 = vrot.lane.b32.xlu0 %v652, 32
        %v1624 = vpop.permute.xlu0 %1623
        %1625 = vrot.lane.b32.xlu0 %v653, 32
        %v1626 = vpop.permute.xlu0 %1625
        %1627 = vrot.lane.b32.xlu0 %v654, 32
        %v1628 = vpop.permute.xlu0 %1627
        %1629 = vrot.lane.b32.xlu0 %v655, 32
        %v1630 = vpop.permute.xlu0 %1629
        %1631 = vrot.lane.b32.xlu0 %v656, 32
        %v1632 = vpop.permute.xlu0 %1631
        %1633 = vrot.lane.b32.xlu0 %v657, 32
        %v1634 = vpop.permute.xlu0 %1633
        %1635 = vrot.lane.b32.xlu0 %v658, 32
        %v1636 = vpop.permute.xlu0 %1635
        %1637 = vrot.lane.b32.xlu0 %v659, 32
        %v1638 = vpop.permute.xlu0 %1637
        %1639 = vrot.lane.b32.xlu0 %v660, 32
        %v1640 = vpop.permute.xlu0 %1639
        %1641 = vrot.lane.b32.xlu0 %v661, 32
        %v1642 = vpop.permute.xlu0 %1641
        %1643 = vrot.lane.b32.xlu0 %v662, 32
        %v1644 = vpop.permute.xlu0 %1643
        %1645 = vrot.lane.b32.xlu0 %v663, 32
        %v1646 = vpop.permute.xlu0 %1645
        %1647 = vrot.lane.b32.xlu0 %v664, 32
        %v1648 = vpop.permute.xlu0 %1647
        %1649 = vrot.lane.b32.xlu0 %v665, 32
        %v1650 = vpop.permute.xlu0 %1649
        %1651 = vrot.lane.b32.xlu0 %v666, 32
        %v1652 = vpop.permute.xlu0 %1651
        %1653 = vrot.lane.b32.xlu0 %v667, 32
        %v1654 = vpop.permute.xlu0 %1653
        %1655 = vrot.lane.b32.xlu0 %v668, 32
        %v1656 = vpop.permute.xlu0 %1655
        %1657 = vrot.lane.b32.xlu0 %v669, 32
        %v1658 = vpop.permute.xlu0 %1657
        %1659 = vrot.lane.b32.xlu0 %v670, 32
        %v1660 = vpop.permute.xlu0 %1659
        %1661 = vrot.lane.b32.xlu0 %v671, 32
        %v1662 = vpop.permute.xlu0 %1661
        %1663 = vrot.lane.b32.xlu0 %v672, 32
        %v1664 = vpop.permute.xlu0 %1663
        %v1697 = vsel %vm295, %v384, %v706
        %v1698 = vsel %vm295, %v385, %v708
        %v1699 = vsel %vm295, %v386, %v710
        %v1700 = vsel %vm295, %v387, %v712
        %v1701 = vsel %vm295, %v388, %v714
        %v1702 = vsel %vm295, %v389, %v716
        %v1703 = vsel %vm295, %v390, %v718
        %v1704 = vsel %vm295, %v391, %v720
        %v1705 = vsel %vm295, %v392, %v722
        %v1706 = vsel %vm295, %v393, %v724
        %v1707 = vsel %vm295, %v394, %v726
        %v1708 = vsel %vm295, %v395, %v728
        %v1709 = vsel %vm295, %v396, %v730
        %v1710 = vsel %vm295, %v397, %v732
        %v1711 = vsel %vm295, %v398, %v734
        %v1712 = vsel %vm295, %v399, %v736
        %v1713 = vsel %vm295, %v400, %v738
        %v1714 = vsel %vm295, %v401, %v740
        %v1715 = vsel %vm295, %v402, %v742
        %v1716 = vsel %vm295, %v403, %v744
        %v1717 = vsel %vm295, %v404, %v746
        %v1718 = vsel %vm295, %v405, %v748
        %v1719 = vsel %vm295, %v406, %v750
        %v1720 = vsel %vm295, %v407, %v752
        %v1721 = vsel %vm295, %v408, %v754
        %v1722 = vsel %vm295, %v409, %v756
        %v1723 = vsel %vm295, %v410, %v758
        %v1724 = vsel %vm295, %v411, %v760
        %v1725 = vsel %vm295, %v412, %v762
        %v1726 = vsel %vm295, %v413, %v764
        %v1727 = vsel %vm295, %v414, %v766
        %v1728 = vsel %vm295, %v415, %v768
        %vm1729 = vcmask 64512
        %v1730 = vsel %vm1729, %v1697, %v834
        %v1731 = vsel %vm1729, %v1698, %v836
        %v1732 = vsel %vm1729, %v1699, %v838
        %v1733 = vsel %vm1729, %v1700, %v840
        %v1734 = vsel %vm1729, %v1701, %v842
        %v1735 = vsel %vm1729, %v1702, %v844
        %v1736 = vsel %vm1729, %v1703, %v846
        %v1737 = vsel %vm1729, %v1704, %v848
        %v1738 = vsel %vm1729, %v1705, %v850
        %v1739 = vsel %vm1729, %v1706, %v852
        %v1740 = vsel %vm1729, %v1707, %v854
        %v1741 = vsel %vm1729, %v1708, %v856
        %v1742 = vsel %vm1729, %v1709, %v858
        %v1743 = vsel %vm1729, %v1710, %v860
        %v1744 = vsel %vm1729, %v1711, %v862
        %v1745 = vsel %vm1729, %v1712, %v864
        %v1746 = vsel %vm1729, %v1713, %v866
        %v1747 = vsel %vm1729, %v1714, %v868
        %v1748 = vsel %vm1729, %v1715, %v870
        %v1749 = vsel %vm1729, %v1716, %v872
        %v1750 = vsel %vm1729, %v1717, %v874
        %v1751 = vsel %vm1729, %v1718, %v876
        %v1752 = vsel %vm1729, %v1719, %v878
        %v1753 = vsel %vm1729, %v1720, %v880
        %v1754 = vsel %vm1729, %v1721, %v882
        %v1755 = vsel %vm1729, %v1722, %v884
        %v1756 = vsel %vm1729, %v1723, %v886
        %v1757 = vsel %vm1729, %v1724, %v888
        %v1758 = vsel %vm1729, %v1725, %v890
        %v1759 = vsel %vm1729, %v1726, %v892
        %v1760 = vsel %vm1729, %v1727, %v894
        %v1761 = vsel %vm1729, %v1728, %v896
        %vm1762 = vcmask 97280
        %v1763 = vsel %vm1762, %v1730, %v962
        %v1764 = vsel %vm1762, %v1731, %v964
        %v1765 = vsel %vm1762, %v1732, %v966
        %v1766 = vsel %vm1762, %v1733, %v968
        %v1767 = vsel %vm1762, %v1734, %v970
        %v1768 = vsel %vm1762, %v1735, %v972
        %v1769 = vsel %vm1762, %v1736, %v974
        %v1770 = vsel %vm1762, %v1737, %v976
        %v1771 = vsel %vm1762, %v1738, %v978
        %v1772 = vsel %vm1762, %v1739, %v980
        %v1773 = vsel %vm1762, %v1740, %v982
        %v1774 = vsel %vm1762, %v1741, %v984
        %v1775 = vsel %vm1762, %v1742, %v986
        %v1776 = vsel %vm1762, %v1743, %v988
        %v1777 = vsel %vm1762, %v1744, %v990
        %v1778 = vsel %vm1762, %v1745, %v992
        %v1779 = vsel %vm1762, %v1746, %v994
        %v1780 = vsel %vm1762, %v1747, %v996
        %v1781 = vsel %vm1762, %v1748, %v998
        %v1782 = vsel %vm1762, %v1749, %v1000
        %v1783 = vsel %vm1762, %v1750, %v1002
        %v1784 = vsel %vm1762, %v1751, %v1004
        %v1785 = vsel %vm1762, %v1752, %v1006
        %v1786 = vsel %vm1762, %v1753, %v1008
        %v1787 = vsel %vm1762, %v1754, %v1010
        %v1788 = vsel %vm1762, %v1755, %v1012
        %v1789 = vsel %vm1762, %v1756, %v1014
        %v1790 = vsel %vm1762, %v1757, %v1016
        %v1791 = vsel %vm1762, %v1758, %v1018
        %v1792 = vsel %vm1762, %v1759, %v1020
        %v1793 = vsel %vm1762, %v1760, %v1022
        %v1794 = vsel %vm1762, %v1761, %v1024
        %vm1795 = vcmask 130048
        %v1796 = vsel %vm1795, %v1763, %v1090
        %v1797 = vsel %vm1795, %v1764, %v1092
        %v1798 = vsel %vm1795, %v1765, %v1094
        %v1799 = vsel %vm1795, %v1766, %v1096
        %v1800 = vsel %vm1795, %v1767, %v1098
        %v1801 = vsel %vm1795, %v1768, %v1100
        %v1802 = vsel %vm1795, %v1769, %v1102
        %v1803 = vsel %vm1795, %v1770, %v1104
        %v1804 = vsel %vm1795, %v1771, %v1106
        %v1805 = vsel %vm1795, %v1772, %v1108
        %v1806 = vsel %vm1795, %v1773, %v1110
        %v1807 = vsel %vm1795, %v1774, %v1112
        %v1808 = vsel %vm1795, %v1775, %v1114
        %v1809 = vsel %vm1795, %v1776, %v1116
        %v1810 = vsel %vm1795, %v1777, %v1118
        %v1811 = vsel %vm1795, %v1778, %v1120
        %v1812 = vsel %vm1795, %v1779, %v1122
        %v1813 = vsel %vm1795, %v1780, %v1124
        %v1814 = vsel %vm1795, %v1781, %v1126
        %v1815 = vsel %vm1795, %v1782, %v1128
        %v1816 = vsel %vm1795, %v1783, %v1130
        %v1817 = vsel %vm1795, %v1784, %v1132
        %v1818 = vsel %vm1795, %v1785, %v1134
        %v1819 = vsel %vm1795, %v1786, %v1136
        %v1820 = vsel %vm1795, %v1787, %v1138
        %v1821 = vsel %vm1795, %v1788, %v1140
        %v1822 = vsel %vm1795, %v1789, %v1142
        %v1823 = vsel %vm1795, %v1790, %v1144
        %v1824 = vsel %vm1795, %v1791, %v1146
        %v1825 = vsel %vm1795, %v1792, %v1148
        %v1826 = vsel %vm1795, %v1793, %v1150
        %v1827 = vsel %vm1795, %v1794, %v1152
        %vm1828 = vcmask 162816
        %v1829 = vsel %vm1828, %v1796, %v1218
        %v1830 = vsel %vm1828, %v1797, %v1220
        %v1831 = vsel %vm1828, %v1798, %v1222
        %v1832 = vsel %vm1828, %v1799, %v1224
        %v1833 = vsel %vm1828, %v1800, %v1226
        %v1834 = vsel %vm1828, %v1801, %v1228
        %v1835 = vsel %vm1828, %v1802, %v1230
        %v1836 = vsel %vm1828, %v1803, %v1232
        %v1837 = vsel %vm1828, %v1804, %v1234
        %v1838 = vsel %vm1828, %v1805, %v1236
        %v1839 = vsel %vm1828, %v1806, %v1238
        %v1840 = vsel %vm1828, %v1807, %v1240
        %v1841 = vsel %vm1828, %v1808, %v1242
        %v1842 = vsel %vm1828, %v1809, %v1244
        %v1843 = vsel %vm1828, %v1810, %v1246
        %v1844 = vsel %vm1828, %v1811, %v1248
        %v1845 = vsel %vm1828, %v1812, %v1250
        %v1846 = vsel %vm1828, %v1813, %v1252
        %v1847 = vsel %vm1828, %v1814, %v1254
        %v1848 = vsel %vm1828, %v1815, %v1256
        %v1849 = vsel %vm1828, %v1816, %v1258
        %v1850 = vsel %vm1828, %v1817, %v1260
        %v1851 = vsel %vm1828, %v1818, %v1262
        %v1852 = vsel %vm1828, %v1819, %v1264
        %v1853 = vsel %vm1828, %v1820, %v1266
        %v1854 = vsel %vm1828, %v1821, %v1268
        %v1855 = vsel %vm1828, %v1822, %v1270
        %v1856 = vsel %vm1828, %v1823, %v1272
        %v1857 = vsel %vm1828, %v1824, %v1274
        %v1858 = vsel %vm1828, %v1825, %v1276
        %v1859 = vsel %vm1828, %v1826, %v1278
        %v1860 = vsel %vm1828, %v1827, %v1280
        %vm1861 = vcmask 195584
        %v1862 = vsel %vm1861, %v1829, %v1346
        %v1863 = vsel %vm1861, %v1830, %v1348
        %v1864 = vsel %vm1861, %v1831, %v1350
        %v1865 = vsel %vm1861, %v1832, %v1352
        %v1866 = vsel %vm1861, %v1833, %v1354
        %v1867 = vsel %vm1861, %v1834, %v1356
        %v1868 = vsel %vm1861, %v1835, %v1358
        %v1869 = vsel %vm1861, %v1836, %v1360
        %v1870 = vsel %vm1861, %v1837, %v1362
        %v1871 = vsel %vm1861, %v1838, %v1364
        %v1872 = vsel %vm1861, %v1839, %v1366
        %v1873 = vsel %vm1861, %v1840, %v1368
        %v1874 = vsel %vm1861, %v1841, %v1370
        %v1875 = vsel %vm1861, %v1842, %v1372
        %v1876 = vsel %vm1861, %v1843, %v1374
        %v1877 = vsel %vm1861, %v1844, %v1376
        %v1878 = vsel %vm1861, %v1845, %v1378
        %v1879 = vsel %vm1861, %v1846, %v1380
        %v1880 = vsel %vm1861, %v1847, %v1382
        %v1881 = vsel %vm1861, %v1848, %v1384
        %v1882 = vsel %vm1861, %v1849, %v1386
        %v1883 = vsel %vm1861, %v1850, %v1388
        %v1884 = vsel %vm1861, %v1851, %v1390
        %v1885 = vsel %vm1861, %v1852, %v1392
        %v1886 = vsel %vm1861, %v1853, %v1394
        %v1887 = vsel %vm1861, %v1854, %v1396
        %v1888 = vsel %vm1861, %v1855, %v1398
        %v1889 = vsel %vm1861, %v1856, %v1400
        %v1890 = vsel %vm1861, %v1857, %v1402
        %v1891 = vsel %vm1861, %v1858, %v1404
        %v1892 = vsel %vm1861, %v1859, %v1406
        %v1893 = vsel %vm1861, %v1860, %v1408
        %vm1894 = vcmask 228352
        %v1895 = vsel %vm1894, %v1862, %v1474
        %v1896 = vsel %vm1894, %v1863, %v1476
        %v1897 = vsel %vm1894, %v1864, %v1478
        %v1898 = vsel %vm1894, %v1865, %v1480
        %v1899 = vsel %vm1894, %v1866, %v1482
        %v1900 = vsel %vm1894, %v1867, %v1484
        %v1901 = vsel %vm1894, %v1868, %v1486
        %v1902 = vsel %vm1894, %v1869, %v1488
        %v1903 = vsel %vm1894, %v1870, %v1490
        %v1904 = vsel %vm1894, %v1871, %v1492
        %v1905 = vsel %vm1894, %v1872, %v1494
        %v1906 = vsel %vm1894, %v1873, %v1496
        %v1907 = vsel %vm1894, %v1874, %v1498
        %v1908 = vsel %vm1894, %v1875, %v1500
        %v1909 = vsel %vm1894, %v1876, %v1502
        %v1910 = vsel %vm1894, %v1877, %v1504
        %v1911 = vsel %vm1894, %v1878, %v1506
        %v1912 = vsel %vm1894, %v1879, %v1508
        %v1913 = vsel %vm1894, %v1880, %v1510
        %v1914 = vsel %vm1894, %v1881, %v1512
        %v1915 = vsel %vm1894, %v1882, %v1514
        %v1916 = vsel %vm1894, %v1883, %v1516
        %v1917 = vsel %vm1894, %v1884, %v1518
        %v1918 = vsel %vm1894, %v1885, %v1520
        %v1919 = vsel %vm1894, %v1886, %v1522
        %v1920 = vsel %vm1894, %v1887, %v1524
        %v1921 = vsel %vm1894, %v1888, %v1526
        %v1922 = vsel %vm1894, %v1889, %v1528
        %v1923 = vsel %vm1894, %v1890, %v1530
        %v1924 = vsel %vm1894, %v1891, %v1532
        %v1925 = vsel %vm1894, %v1892, %v1534
        %v1926 = vsel %vm1894, %v1893, %v1536
        %vm1927 = vcmask 261120
        %v1928 = vsel %vm1927, %v1895, %v1602
        %v1929 = vsel %vm1927, %v1896, %v1604
        %v1930 = vsel %vm1927, %v1897, %v1606
        %v1931 = vsel %vm1927, %v1898, %v1608
        %v1932 = vsel %vm1927, %v1899, %v1610
        %v1933 = vsel %vm1927, %v1900, %v1612
        %v1934 = vsel %vm1927, %v1901, %v1614
        %v1935 = vsel %vm1927, %v1902, %v1616
        %v1936 = vsel %vm1927, %v1903, %v1618
        %v1937 = vsel %vm1927, %v1904, %v1620
        %v1938 = vsel %vm1927, %v1905, %v1622
        %v1939 = vsel %vm1927, %v1906, %v1624
        %v1940 = vsel %vm1927, %v1907, %v1626
        %v1941 = vsel %vm1927, %v1908, %v1628
        %v1942 = vsel %vm1927, %v1909, %v1630
        %v1943 = vsel %vm1927, %v1910, %v1632
        %v1944 = vsel %vm1927, %v1911, %v1634
        %v1945 = vsel %vm1927, %v1912, %v1636
        %v1946 = vsel %vm1927, %v1913, %v1638
        %v1947 = vsel %vm1927, %v1914, %v1640
        %v1948 = vsel %vm1927, %v1915, %v1642
        %v1949 = vsel %vm1927, %v1916, %v1644
        %v1950 = vsel %vm1927, %v1917, %v1646
        %v1951 = vsel %vm1927, %v1918, %v1648
        %v1952 = vsel %vm1927, %v1919, %v1650
        %v1953 = vsel %vm1927, %v1920, %v1652
        %v1954 = vsel %vm1927, %v1921, %v1654
        %v1955 = vsel %vm1927, %v1922, %v1656
        %v1956 = vsel %vm1927, %v1923, %v1658
        %v1957 = vsel %vm1927, %v1924, %v1660
        %v1958 = vsel %vm1927, %v1925, %v1662
        %v1959 = vsel %vm1927, %v1926, %v1664
        %v1960 = vld [vmem:[%s1] sm:$0xff]
        %v1961 = vld [vmem:[%s1 + $0x8] sm:$0xff]
        %v1962 = vld [vmem:[%s1 + $0x10] sm:$0xff]
        %v1963 = vld [vmem:[%s1 + $0x18] sm:$0xff]
        %v1964 = vld [vmem:[%s1 + $0x20] sm:$0xf]
        %v1965 = vld [vmem:[%s2] sm:$0x1]
        %v1967 = vperm.slane %v1965, 0
        %vm1969 = vcmask 293888
        %v1971 = vsel %vm1969, %v1928, 0
        %v1974 = vsel %vm1969, %v1929, 0
        %v1977 = vsel %vm1969, %v1930, 0
        %v1980 = vsel %vm1969, %v1931, 0
        %v1983 = vsel %vm1969, %v1932, 0
        %v1986 = vsel %vm1969, %v1933, 0
        %v1989 = vsel %vm1969, %v1934, 0
        %v1992 = vsel %vm1969, %v1935, 0
        %v1995 = vsel %vm1969, %v1936, 0
        %v1998 = vsel %vm1969, %v1937, 0
        %v2001 = vsel %vm1969, %v1938, 0
        %v2004 = vsel %vm1969, %v1939, 0
        %v2007 = vsel %vm1969, %v1940, 0
        %v2010 = vsel %vm1969, %v1941, 0
        %v2013 = vsel %vm1969, %v1942, 0
        %v2016 = vsel %vm1969, %v1943, 0
        %v2019 = vsel %vm1969, %v1944, 0
        %v2022 = vsel %vm1969, %v1945, 0
        %v2025 = vsel %vm1969, %v1946, 0
        %v2028 = vsel %vm1969, %v1947, 0
        %v2031 = vsel %vm1969, %v1948, 0
        %v2034 = vsel %vm1969, %v1949, 0
        %v2037 = vsel %vm1969, %v1950, 0
        %v2040 = vsel %vm1969, %v1951, 0
        %v2043 = vsel %vm1969, %v1952, 0
        %v2046 = vsel %vm1969, %v1953, 0
        %v2049 = vsel %vm1969, %v1954, 0
        %v2052 = vsel %vm1969, %v1955, 0
        %v2055 = vsel %vm1969, %v1956, 0
        %v2058 = vsel %vm1969, %v1957, 0
        %v2061 = vsel %vm1969, %v1958, 0
        %v2064 = vsel %vm1969, %v1959, 0
        %vm2066 = vcmask 1043456
        %v2068 = vsel %vm2066, %v1964, 0
        %2070 = vmatpush.msra.mxu0 0.0
        %2071 = vmatpush.msra.mxu0 0.0
        %2072 = vmatpush.msra.mxu0 0.0
        %2073 = vmatpush.msra.mxu0 0.0
        %2074 = vmatpush.msra.mxu0 0.0
        %2075 = vmatpush.msra.mxu0 0.0
        %2076 = vmatpush.msra.mxu0 0.0
        %2077 = vmatpush.msra.mxu0 0.0
        %2078 = vmatpush.msra.mxu0 0.0
        %2079 = vmatpush.msra.mxu0 0.0
        %2080 = vmatpush.msra.mxu0 0.0
        %2081 = vmatpush.msra.mxu0 %v2068
        %2082 = vmatpush.msra.mxu0 %v1963
        %2083 = vmatpush.msra.mxu0 %v1962
        %2084 = vmatpush.msra.mxu0 %v1961
        %2085 = vmatpush.msra.mxu0 %v1960
        %2086 = vmatmul.f32.gmra.mxu0 %v1971
        %v2087 = vpop.f32.mrf.mxu0
        %v2088 = vadd.f32 %v1967, %v2087
        %2089 = vmatmul.f32.gmra.mxu0 %v1974
        %v2090 = vpop.f32.mrf.mxu0
        %v2091 = vadd.f32 %v1967, %v2090
        %2092 = vmatmul.f32.gmra.mxu0 %v1977
        %v2093 = vpop.f32.mrf.mxu0
        %v2094 = vadd.f32 %v1967, %v2093
        %2095 = vmatmul.f32.gmra.mxu0 %v1980
        %v2096 = vpop.f32.mrf.mxu0
        %v2097 = vadd.f32 %v1967, %v2096
        %2098 = vmatmul.f32.gmra.mxu0 %v1983
        %v2099 = vpop.f32.mrf.mxu0
        %v2100 = vadd.f32 %v1967, %v2099
        %2101 = vmatmul.f32.gmra.mxu0 %v1986
        %v2102 = vpop.f32.mrf.mxu0
        %v2103 = vadd.f32 %v1967, %v2102
        %2104 = vmatmul.f32.gmra.mxu0 %v1989
        %v2105 = vpop.f32.mrf.mxu0
        %v2106 = vadd.f32 %v1967, %v2105
        %2107 = vmatmul.f32.gmra.mxu0 %v1992
        %v2108 = vpop.f32.mrf.mxu0
        %v2109 = vadd.f32 %v1967, %v2108
        %2110 = vmatmul.f32.gmra.mxu0 %v1995
        %v2111 = vpop.f32.mrf.mxu0
        %v2112 = vadd.f32 %v1967, %v2111
        %2113 = vmatmul.f32.gmra.mxu0 %v1998
        %v2114 = vpop.f32.mrf.mxu0
        %v2115 = vadd.f32 %v1967, %v2114
        %2116 = vmatmul.f32.gmra.mxu0 %v2001
        %v2117 = vpop.f32.mrf.mxu0
        %v2118 = vadd.f32 %v1967, %v2117
        %2119 = vmatmul.f32.gmra.mxu0 %v2004
        %v2120 = vpop.f32.mrf.mxu0
        %v2121 = vadd.f32 %v1967, %v2120
        %2122 = vmatmul.f32.gmra.mxu0 %v2007
        %v2123 = vpop.f32.mrf.mxu0
        %v2124 = vadd.f32 %v1967, %v2123
        %2125 = vmatmul.f32.gmra.mxu0 %v2010
        %v2126 = vpop.f32.mrf.mxu0
        %v2127 = vadd.f32 %v1967, %v2126
        %2128 = vmatmul.f32.gmra.mxu0 %v2013
        %v2129 = vpop.f32.mrf.mxu0
        %v2130 = vadd.f32 %v1967, %v2129
        %2131 = vmatmul.f32.gmra.mxu0 %v2016
        %v2132 = vpop.f32.mrf.mxu0
        %v2133 = vadd.f32 %v1967, %v2132
        %2134 = vmatmul.f32.gmra.mxu0 %v2019
        %v2135 = vpop.f32.mrf.mxu0
        %v2136 = vadd.f32 %v1967, %v2135
        %2137 = vmatmul.f32.gmra.mxu0 %v2022
        %v2138 = vpop.f32.mrf.mxu0
        %v2139 = vadd.f32 %v1967, %v2138
        %2140 = vmatmul.f32.gmra.mxu0 %v2025
        %v2141 = vpop.f32.mrf.mxu0
        %v2142 = vadd.f32 %v1967, %v2141
        %2143 = vmatmul.f32.gmra.mxu0 %v2028
        %v2144 = vpop.f32.mrf.mxu0
        %v2145 = vadd.f32 %v1967, %v2144
        %2146 = vmatmul.f32.gmra.mxu0 %v2031
        %v2147 = vpop.f32.mrf.mxu0
        %v2148 = vadd.f32 %v1967, %v2147
        %2149 = vmatmul.f32.gmra.mxu0 %v2034
        %v2150 = vpop.f32.mrf.mxu0
        %v2151 = vadd.f32 %v1967, %v2150
        %2152 = vmatmul.f32.gmra.mxu0 %v2037
        %v2153 = vpop.f32.mrf.mxu0
        %v2154 = vadd.f32 %v1967, %v2153
        %2155 = vmatmul.f32.gmra.mxu0 %v2040
        %v2156 = vpop.f32.mrf.mxu0
        %v2157 = vadd.f32 %v1967, %v2156
        %2158 = vmatmul.f32.gmra.mxu0 %v2043
        %v2159 = vpop.f32.mrf.mxu0
        %v2160 = vadd.f32 %v1967, %v2159
        %2161 = vmatmul.f32.gmra.mxu0 %v2046
        %v2162 = vpop.f32.mrf.mxu0
        %v2163 = vadd.f32 %v1967, %v2162
        %2164 = vmatmul.f32.gmra.mxu0 %v2049
        %v2165 = vpop.f32.mrf.mxu0
        %v2166 = vadd.f32 %v1967, %v2165
        %2167 = vmatmul.f32.gmra.mxu0 %v2052
        %v2168 = vpop.f32.mrf.mxu0
        %v2169 = vadd.f32 %v1967, %v2168
        %2170 = vmatmul.f32.gmra.mxu0 %v2055
        %v2171 = vpop.f32.mrf.mxu0
        %v2172 = vadd.f32 %v1967, %v2171
        %2173 = vmatmul.f32.gmra.mxu0 %v2058
        %v2174 = vpop.f32.mrf.mxu0
        %v2175 = vadd.f32 %v1967, %v2174
        %2176 = vmatmul.f32.gmra.mxu0 %v2061
        %v2177 = vpop.f32.mrf.mxu0
        %v2178 = vadd.f32 %v1967, %v2177
        %2179 = vmatmul.f32.gmra.mxu0 %v2064
        %v2180 = vpop.f32.mrf.mxu0
        %v2181 = vadd.f32 %v1967, %v2180
        %2182 = vdwg.mxu0
        %2183 = vxpose.xlu0.b32.start [1/16] %v2088, 128
        %2184 = vxpose.xlu0.b32.cont [2/16] %v2091, 128
        %2185 = vxpose.xlu0.b32.cont [3/16] %v2094, 128
        %2186 = vxpose.xlu0.b32.cont [4/16] %v2097, 128
        %2187 = vxpose.xlu0.b32.cont [5/16] %v2100, 128
        %2188 = vxpose.xlu0.b32.cont [6/16] %v2103, 128
        %2189 = vxpose.xlu0.b32.cont [7/16] %v2106, 128
        %2190 = vxpose.xlu0.b32.cont [8/16] %v2109, 128
        %2191 = vxpose.xlu0.b32.cont [9/16] %v2112, 128
        %2192 = vxpose.xlu0.b32.cont [10/16] %v2115, 128
        %2193 = vxpose.xlu0.b32.cont [11/16] %v2118, 128
        %2194 = vxpose.xlu0.b32.cont [12/16] %v2121, 128
        %2195 = vxpose.xlu0.b32.cont [13/16] %v2124, 128
        %2196 = vxpose.xlu0.b32.cont [14/16] %v2127, 128
        %2197 = vxpose.xlu0.b32.cont [15/16] %v2130, 128
        %2198 = vxpose.xlu0.b32.end [16/16] %v2133, 128
        %v2199 = vpop.trf.xlu0
        %v2200 = vpop.trf.xlu0
        %v2201 = vpop.trf.xlu0
        %v2202 = vpop.trf.xlu0
        %v2203 = vpop.trf.xlu0
        %v2204 = vpop.trf.xlu0
        %v2205 = vpop.trf.xlu0
        %v2206 = vpop.trf.xlu0
        %v2207 = vpop.trf.xlu0
        %v2208 = vpop.trf.xlu0
        %v2209 = vpop.trf.xlu0
        %v2210 = vpop.trf.xlu0
        %v2211 = vpop.trf.xlu0
        %v2212 = vpop.trf.xlu0
        %v2213 = vpop.trf.xlu0
        %v2214 = vpop.trf.xlu0
        %2215 = vxpose.xlu0.b32.start [1/16] %v2136, 128
        %2216 = vxpose.xlu0.b32.cont [2/16] %v2139, 128
        %2217 = vxpose.xlu0.b32.cont [3/16] %v2142, 128
        %2218 = vxpose.xlu0.b32.cont [4/16] %v2145, 128
        %2219 = vxpose.xlu0.b32.cont [5/16] %v2148, 128
        %2220 = vxpose.xlu0.b32.cont [6/16] %v2151, 128
        %2221 = vxpose.xlu0.b32.cont [7/16] %v2154, 128
        %2222 = vxpose.xlu0.b32.cont [8/16] %v2157, 128
        %2223 = vxpose.xlu0.b32.cont [9/16] %v2160, 128
        %2224 = vxpose.xlu0.b32.cont [10/16] %v2163, 128
        %2225 = vxpose.xlu0.b32.cont [11/16] %v2166, 128
        %2226 = vxpose.xlu0.b32.cont [12/16] %v2169, 128
        %2227 = vxpose.xlu0.b32.cont [13/16] %v2172, 128
        %2228 = vxpose.xlu0.b32.cont [14/16] %v2175, 128
        %2229 = vxpose.xlu0.b32.cont [15/16] %v2178, 128
        %2230 = vxpose.xlu0.b32.end [16/16] %v2181, 128
        %v2231 = vpop.trf.xlu0
        %v2232 = vpop.trf.xlu0
        %v2233 = vpop.trf.xlu0
        %v2234 = vpop.trf.xlu0
        %v2235 = vpop.trf.xlu0
        %v2236 = vpop.trf.xlu0
        %v2237 = vpop.trf.xlu0
        %v2238 = vpop.trf.xlu0
        %v2239 = vpop.trf.xlu0
        %v2240 = vpop.trf.xlu0
        %v2241 = vpop.trf.xlu0
        %v2242 = vpop.trf.xlu0
        %v2243 = vpop.trf.xlu0
        %v2244 = vpop.trf.xlu0
        %v2245 = vpop.trf.xlu0
        %v2246 = vpop.trf.xlu0
        %2247 = vst [vmem:[%s262] sm:$0xff] %v2199
        %2248 = vst [vmem:[%s262 + $0x8] sm:$0xff] %v2231
        %v2249 = vmax.f32 %v2088, 0.0
        %v2250 = vmax.f32 %v2091, 0.0
        %v2251 = vmax.f32 %v2094, 0.0
        %v2252 = vmax.f32 %v2097, 0.0
        %v2253 = vmax.f32 %v2100, 0.0
        %v2254 = vmax.f32 %v2103, 0.0
        %v2255 = vmax.f32 %v2106, 0.0
        %v2256 = vmax.f32 %v2109, 0.0
        %v2257 = vmax.f32 %v2112, 0.0
        %v2258 = vmax.f32 %v2115, 0.0
        %v2259 = vmax.f32 %v2118, 0.0
        %v2260 = vmax.f32 %v2121, 0.0
        %v2261 = vmax.f32 %v2124, 0.0
        %v2262 = vmax.f32 %v2127, 0.0
        %v2263 = vmax.f32 %v2130, 0.0
        %v2264 = vmax.f32 %v2133, 0.0
        %v2265 = vmax.f32 %v2136, 0.0
        %v2266 = vmax.f32 %v2139, 0.0
        %v2267 = vmax.f32 %v2142, 0.0
        %v2268 = vmax.f32 %v2145, 0.0
        %v2269 = vmax.f32 %v2148, 0.0
        %v2270 = vmax.f32 %v2151, 0.0
        %v2271 = vmax.f32 %v2154, 0.0
        %v2272 = vmax.f32 %v2157, 0.0
        %v2273 = vmax.f32 %v2160, 0.0
        %v2274 = vmax.f32 %v2163, 0.0
        %v2275 = vmax.f32 %v2166, 0.0
        %v2276 = vmax.f32 %v2169, 0.0
        %v2277 = vmax.f32 %v2172, 0.0
        %v2278 = vmax.f32 %v2175, 0.0
        %v2279 = vmax.f32 %v2178, 0.0
        %v2280 = vmax.f32 %v2181, 0.0
        %2281 = vst.msk [vmem:[#allocation3] sm:$0xff] %vm1729, 0.0
        %2282 = vst.msk [vmem:[#allocation3 + $0x8] sm:$0xff] %vm1729, 0.0
        %vm2283 = vcmask 58368
        %2284 = vst.msk [vmem:[#allocation3 + $0x10] sm:$0x3] %vm2283, 0.0
        %2285 = vst.msk [vmem:[#allocation3 + $0x18] sm:$0xff] %vm1729, 0.0
        %2286 = vst.msk [vmem:[#allocation3 + $0x20] sm:$0xff] %vm1729, 0.0
        %2287 = vst.msk [vmem:[#allocation3 + $0x28] sm:$0x3] %vm2283, 0.0
        %2288 = vst.msk [vmem:[#allocation3 + $0x30] sm:$0xff] %vm1729, 0.0
        %2289 = vst.msk [vmem:[#allocation3 + $0x38] sm:$0xff] %vm1729, 0.0
        %2290 = vst.msk [vmem:[#allocation3 + $0x40] sm:$0x3] %vm2283, 0.0
        %2291 = vst.msk [vmem:[#allocation3 + $0x48] sm:$0xff] %vm1729, 0.0
        %2292 = vst.msk [vmem:[#allocation3 + $0x50] sm:$0xff] %vm1729, 0.0
        %2293 = vst.msk [vmem:[#allocation3 + $0x58] sm:$0x3] %vm2283, 0.0
        %2294 = vst.msk [vmem:[#allocation3 + $0x60] sm:$0xff] %vm1729, 0.0
        %2295 = vst.msk [vmem:[#allocation3 + $0x68] sm:$0xff] %vm1729, 0.0
        %2296 = vst.msk [vmem:[#allocation3 + $0x70] sm:$0x3] %vm2283, 0.0
        %2297 = vst.msk [vmem:[#allocation3 + $0x78] sm:$0xff] %vm1729, 0.0
        %2298 = vst.msk [vmem:[#allocation3 + $0x80] sm:$0xff] %vm1729, 0.0
        %2299 = vst.msk [vmem:[#allocation3 + $0x88] sm:$0x3] %vm2283, 0.0
        %2300 = vst.msk [vmem:[#allocation3 + $0x90] sm:$0xff] %vm1729, 0.0
        %2301 = vst.msk [vmem:[#allocation3 + $0x98] sm:$0xff] %vm1729, 0.0
        %2302 = vst.msk [vmem:[#allocation3 + $0xa0] sm:$0x3] %vm2283, 0.0
        %2303 = vst.msk [vmem:[#allocation3 + $0xa8] sm:$0xff] %vm1729, 0.0
        %2304 = vst.msk [vmem:[#allocation3 + $0xb0] sm:$0xff] %vm1729, 0.0
        %2305 = vst.msk [vmem:[#allocation3 + $0xb8] sm:$0x3] %vm2283, 0.0
        %2306 = vst.msk [vmem:[#allocation3 + $0xc0] sm:$0xff] %vm1729, 0.0
        %2307 = vst.msk [vmem:[#allocation3 + $0xc8] sm:$0xff] %vm1729, 0.0
        %2308 = vst.msk [vmem:[#allocation3 + $0xd0] sm:$0x3] %vm2283, 0.0
        %2309 = vst.msk [vmem:[#allocation3 + $0xd8] sm:$0xff] %vm1729, 0.0
        %2310 = vst.msk [vmem:[#allocation3 + $0xe0] sm:$0xff] %vm1729, 0.0
        %2311 = vst.msk [vmem:[#allocation3 + $0xe8] sm:$0x3] %vm2283, 0.0
        %2312 = vst.msk [vmem:[#allocation3 + $0xf0] sm:$0xff] %vm1729, 0.0
        %2313 = vst.msk [vmem:[#allocation3 + $0xf8] sm:$0xff] %vm1729, 0.0
        %2314 = vst.msk [vmem:[#allocation3 + $0x100] sm:$0x3] %vm2283, 0.0
        %2315 = vst.msk [vmem:[#allocation3 + $0x108] sm:$0xff] %vm1729, 0.0
        %2316 = vst.msk [vmem:[#allocation3 + $0x110] sm:$0xff] %vm1729, 0.0
        %2317 = vst.msk [vmem:[#allocation3 + $0x118] sm:$0x3] %vm2283, 0.0
        %2318 = vst.msk [vmem:[#allocation3 + $0x120] sm:$0xff] %vm1729, 0.0
        %2319 = vst.msk [vmem:[#allocation3 + $0x128] sm:$0xff] %vm1729, 0.0
        %2320 = vst.msk [vmem:[#allocation3 + $0x130] sm:$0x3] %vm2283, 0.0
        %2321 = vst.msk [vmem:[#allocation3 + $0x138] sm:$0xff] %vm1729, 0.0
        %2322 = vst.msk [vmem:[#allocation3 + $0x140] sm:$0xff] %vm1729, 0.0
        %2323 = vst.msk [vmem:[#allocation3 + $0x148] sm:$0x3] %vm2283, 0.0
        %2324 = vst.msk [vmem:[#allocation3 + $0x150] sm:$0xff] %vm1729, 0.0
        %2325 = vst.msk [vmem:[#allocation3 + $0x158] sm:$0xff] %vm1729, 0.0
        %2326 = vst.msk [vmem:[#allocation3 + $0x160] sm:$0x3] %vm2283, 0.0
        %2327 = vst.msk [vmem:[#allocation3 + $0x168] sm:$0xff] %vm1729, 0.0
        %2328 = vst.msk [vmem:[#allocation3 + $0x170] sm:$0xff] %vm1729, 0.0
        %2329 = vst.msk [vmem:[#allocation3 + $0x178] sm:$0x3] %vm2283, 0.0
        %2330 = vst.msk [vmem:[#allocation3 + $0x180] sm:$0xff] %vm1729, 0.0
        %2331 = vst.msk [vmem:[#allocation3 + $0x188] sm:$0xff] %vm1729, 0.0
        %2332 = vst.msk [vmem:[#allocation3 + $0x190] sm:$0x3] %vm2283, 0.0
        %2333 = vst.msk [vmem:[#allocation3 + $0x198] sm:$0xff] %vm1729, 0.0
        %2334 = vst.msk [vmem:[#allocation3 + $0x1a0] sm:$0xff] %vm1729, 0.0
        %2335 = vst.msk [vmem:[#allocation3 + $0x1a8] sm:$0x3] %vm2283, 0.0
        %s2336 = scalar_lea.vmem [#allocation3], 24
        %2337 = vst.msk [vmem:[%s2336 + $0x1] sm:$0xff] %vm1729, %v2249
        %2338 = vst.msk [vmem:[%s2336 + $0x9] sm:$0xff] %vm1729, %v2250
        %2339 = vst.msk [vmem:[%s2336 + $0x19] sm:$0xff] %vm1729, %v2251
        %2340 = vst.msk [vmem:[%s2336 + $0x21] sm:$0xff] %vm1729, %v2252
        %2341 = vst.msk [vmem:[%s2336 + $0x31] sm:$0xff] %vm1729, %v2253
        %2342 = vst.msk [vmem:[%s2336 + $0x39] sm:$0xff] %vm1729, %v2254
        %2343 = vst.msk [vmem:[%s2336 + $0x49] sm:$0xff] %vm1729, %v2255
        %2344 = vst.msk [vmem:[%s2336 + $0x51] sm:$0xff] %vm1729, %v2256
        %2345 = vst.msk [vmem:[%s2336 + $0x61] sm:$0xff] %vm1729, %v2257
        %2346 = vst.msk [vmem:[%s2336 + $0x69] sm:$0xff] %vm1729, %v2258
        %2347 = vst.msk [vmem:[%s2336 + $0x79] sm:$0xff] %vm1729, %v2259
        %2348 = vst.msk [vmem:[%s2336 + $0x81] sm:$0xff] %vm1729, %v2260
        %2349 = vst.msk [vmem:[%s2336 + $0x91] sm:$0xff] %vm1729, %v2261
        %2350 = vst.msk [vmem:[%s2336 + $0x99] sm:$0xff] %vm1729, %v2262
        %2351 = vst.msk [vmem:[%s2336 + $0xa9] sm:$0xff] %vm1729, %v2263
        %2352 = vst.msk [vmem:[%s2336 + $0xb1] sm:$0xff] %vm1729, %v2264
        %2353 = vst.msk [vmem:[%s2336 + $0xc1] sm:$0xff] %vm1729, %v2265
        %2354 = vst.msk [vmem:[%s2336 + $0xc9] sm:$0xff] %vm1729, %v2266
        %2355 = vst.msk [vmem:[%s2336 + $0xd9] sm:$0xff] %vm1729, %v2267
        %2356 = vst.msk [vmem:[%s2336 + $0xe1] sm:$0xff] %vm1729, %v2268
        %2357 = vst.msk [vmem:[%s2336 + $0xf1] sm:$0xff] %vm1729, %v2269
        %2358 = vst.msk [vmem:[%s2336 + $0xf9] sm:$0xff] %vm1729, %v2270
        %2359 = vst.msk [vmem:[%s2336 + $0x109] sm:$0xff] %vm1729, %v2271
        %2360 = vst.msk [vmem:[%s2336 + $0x111] sm:$0xff] %vm1729, %v2272
        %2361 = vst.msk [vmem:[%s2336 + $0x121] sm:$0xff] %vm1729, %v2273
        %2362 = vst.msk [vmem:[%s2336 + $0x129] sm:$0xff] %vm1729, %v2274
        %2363 = vst.msk [vmem:[%s2336 + $0x139] sm:$0xff] %vm1729, %v2275
        %2364 = vst.msk [vmem:[%s2336 + $0x141] sm:$0xff] %vm1729, %v2276
        %2365 = vst.msk [vmem:[%s2336 + $0x151] sm:$0xff] %vm1729, %v2277
        %2366 = vst.msk [vmem:[%s2336 + $0x159] sm:$0xff] %vm1729, %v2278
        %2367 = vst.msk [vmem:[%s2336 + $0x169] sm:$0xff] %vm1729, %v2279
        %2368 = vst.msk [vmem:[%s2336 + $0x171] sm:$0xff] %vm1729, %v2280
        %v2369 = vld [vmem:[#allocation3] sm:$0xff]
        %v2370 = vld [vmem:[#allocation3 + $0x8] sm:$0xff]
        %v2371 = vld [vmem:[#allocation3 + $0x18] sm:$0xff]
        %v2372 = vld [vmem:[#allocation3 + $0x20] sm:$0xff]
        %v2373 = vld [vmem:[#allocation3 + $0x30] sm:$0xff]
        %v2374 = vld [vmem:[#allocation3 + $0x38] sm:$0xff]
        %v2375 = vld [vmem:[#allocation3 + $0x48] sm:$0xff]
        %v2376 = vld [vmem:[#allocation3 + $0x50] sm:$0xff]
        %v2377 = vld [vmem:[#allocation3 + $0x60] sm:$0xff]
        %v2378 = vld [vmem:[#allocation3 + $0x68] sm:$0xff]
        %v2379 = vld [vmem:[#allocation3 + $0x78] sm:$0xff]
        %v2380 = vld [vmem:[#allocation3 + $0x80] sm:$0xff]
        %v2381 = vld [vmem:[#allocation3 + $0x90] sm:$0xff]
        %v2382 = vld [vmem:[#allocation3 + $0x98] sm:$0xff]
        %v2383 = vld [vmem:[#allocation3 + $0xa8] sm:$0xff]
        %v2384 = vld [vmem:[#allocation3 + $0xb0] sm:$0xff]
        %v2385 = vld [vmem:[#allocation3 + $0xc0] sm:$0xff]
        %v2386 = vld [vmem:[#allocation3 + $0xc8] sm:$0xff]
        %v2387 = vld [vmem:[#allocation3 + $0xd8] sm:$0xff]
        %v2388 = vld [vmem:[#allocation3 + $0xe0] sm:$0xff]
        %v2389 = vld [vmem:[#allocation3 + $0xf0] sm:$0xff]
        %v2390 = vld [vmem:[#allocation3 + $0xf8] sm:$0xff]
        %v2391 = vld [vmem:[#allocation3 + $0x108] sm:$0xff]
        %v2392 = vld [vmem:[#allocation3 + $0x110] sm:$0xff]
        %v2393 = vld [vmem:[#allocation3 + $0x120] sm:$0xff]
        %v2394 = vld [vmem:[#allocation3 + $0x128] sm:$0xff]
        %v2395 = vld [vmem:[#allocation3 + $0x138] sm:$0xff]
        %v2396 = vld [vmem:[#allocation3 + $0x140] sm:$0xff]
        %v2397 = vld [vmem:[#allocation3 + $0x150] sm:$0xff]
        %v2398 = vld [vmem:[#allocation3 + $0x158] sm:$0xff]
        %v2399 = vld [vmem:[#allocation3 + $0x168] sm:$0xff]
        %v2400 = vld [vmem:[#allocation3 + $0x170] sm:$0xff]
        %v2401 = vld [vmem:[#allocation3 + $0x1] sm:$0xff]
        %v2402 = vld [vmem:[#allocation3 + $0x9] sm:$0xff]
        %v2403 = vld [vmem:[#allocation3 + $0x19] sm:$0xff]
        %v2404 = vld [vmem:[#allocation3 + $0x21] sm:$0xff]
        %v2405 = vld [vmem:[#allocation3 + $0x31] sm:$0xff]
        %v2406 = vld [vmem:[#allocation3 + $0x39] sm:$0xff]
        %v2407 = vld [vmem:[#allocation3 + $0x49] sm:$0xff]
        %v2408 = vld [vmem:[#allocation3 + $0x51] sm:$0xff]
        %v2409 = vld [vmem:[#allocation3 + $0x61] sm:$0xff]
        %v2410 = vld [vmem:[#allocation3 + $0x69] sm:$0xff]
        %v2411 = vld [vmem:[#allocation3 + $0x79] sm:$0xff]
        %v2412 = vld [vmem:[#allocation3 + $0x81] sm:$0xff]
        %v2413 = vld [vmem:[#allocation3 + $0x91] sm:$0xff]
        %v2414 = vld [vmem:[#allocation3 + $0x99] sm:$0xff]
        %v2415 = vld [vmem:[#allocation3 + $0xa9] sm:$0xff]
        %v2416 = vld [vmem:[#allocation3 + $0xb1] sm:$0xff]
        %v2417 = vld [vmem:[#allocation3 + $0xc1] sm:$0xff]
        %v2418 = vld [vmem:[#allocation3 + $0xc9] sm:$0xff]
        %v2419 = vld [vmem:[#allocation3 + $0xd9] sm:$0xff]
        %v2420 = vld [vmem:[#allocation3 + $0xe1] sm:$0xff]
        %v2421 = vld [vmem:[#allocation3 + $0xf1] sm:$0xff]
        %v2422 = vld [vmem:[#allocation3 + $0xf9] sm:$0xff]
        %v2423 = vld [vmem:[#allocation3 + $0x109] sm:$0xff]
        %v2424 = vld [vmem:[#allocation3 + $0x111] sm:$0xff]
        %v2425 = vld [vmem:[#allocation3 + $0x121] sm:$0xff]
        %v2426 = vld [vmem:[#allocation3 + $0x129] sm:$0xff]
        %v2427 = vld [vmem:[#allocation3 + $0x139] sm:$0xff]
        %v2428 = vld [vmem:[#allocation3 + $0x141] sm:$0xff]
        %v2429 = vld [vmem:[#allocation3 + $0x151] sm:$0xff]
        %v2430 = vld [vmem:[#allocation3 + $0x159] sm:$0xff]
        %v2431 = vld [vmem:[#allocation3 + $0x169] sm:$0xff]
        %v2432 = vld [vmem:[#allocation3 + $0x171] sm:$0xff]
        %v2433 = vld [vmem:[#allocation3 + $0x2] sm:$0xff]
        %v2434 = vld [vmem:[#allocation3 + $0xa] sm:$0xff]
        %v2435 = vld [vmem:[#allocation3 + $0x1a] sm:$0xff]
        %v2436 = vld [vmem:[#allocation3 + $0x22] sm:$0xff]
        %v2437 = vld [vmem:[#allocation3 + $0x32] sm:$0xff]
        %v2438 = vld [vmem:[#allocation3 + $0x3a] sm:$0xff]
        %v2439 = vld [vmem:[#allocation3 + $0x4a] sm:$0xff]
        %v2440 = vld [vmem:[#allocation3 + $0x52] sm:$0xff]
        %v2441 = vld [vmem:[#allocation3 + $0x62] sm:$0xff]
        %v2442 = vld [vmem:[#allocation3 + $0x6a] sm:$0xff]
        %v2443 = vld [vmem:[#allocation3 + $0x7a] sm:$0xff]
        %v2444 = vld [vmem:[#allocation3 + $0x82] sm:$0xff]
        %v2445 = vld [vmem:[#allocation3 + $0x92] sm:$0xff]
        %v2446 = vld [vmem:[#allocation3 + $0x9a] sm:$0xff]
        %v2447 = vld [vmem:[#allocation3 + $0xaa] sm:$0xff]
        %v2448 = vld [vmem:[#allocation3 + $0xb2] sm:$0xff]
        %v2449 = vld [vmem:[#allocation3 + $0xc2] sm:$0xff]
        %v2450 = vld [vmem:[#allocation3 + $0xca] sm:$0xff]
        %v2451 = vld [vmem:[#allocation3 + $0xda] sm:$0xff]
        %v2452 = vld [vmem:[#allocation3 + $0xe2] sm:$0xff]
        %v2453 = vld [vmem:[#allocation3 + $0xf2] sm:$0xff]
        %v2454 = vld [vmem:[#allocation3 + $0xfa] sm:$0xff]
        %v2455 = vld [vmem:[#allocation3 + $0x10a] sm:$0xff]
        %v2456 = vld [vmem:[#allocation3 + $0x112] sm:$0xff]
        %v2457 = vld [vmem:[#allocation3 + $0x122] sm:$0xff]
        %v2458 = vld [vmem:[#allocation3 + $0x12a] sm:$0xff]
        %v2459 = vld [vmem:[#allocation3 + $0x13a] sm:$0xff]
        %v2460 = vld [vmem:[#allocation3 + $0x142] sm:$0xff]
        %v2461 = vld [vmem:[#allocation3 + $0x152] sm:$0xff]
        %v2462 = vld [vmem:[#allocation3 + $0x15a] sm:$0xff]
        %v2463 = vld [vmem:[#allocation3 + $0x16a] sm:$0xff]
        %v2464 = vld [vmem:[#allocation3 + $0x172] sm:$0xff]
        %v2465 = vld [vmem:[%s2336] sm:$0xff]
        %v2466 = vld [vmem:[%s2336 + $0x8] sm:$0xff]
        %v2467 = vld [vmem:[%s2336 + $0x18] sm:$0xff]
        %v2468 = vld [vmem:[%s2336 + $0x20] sm:$0xff]
        %v2469 = vld [vmem:[%s2336 + $0x30] sm:$0xff]
        %v2470 = vld [vmem:[%s2336 + $0x38] sm:$0xff]
        %v2471 = vld [vmem:[%s2336 + $0x48] sm:$0xff]
        %v2472 = vld [vmem:[%s2336 + $0x50] sm:$0xff]
        %v2473 = vld [vmem:[%s2336 + $0x60] sm:$0xff]
        %v2474 = vld [vmem:[%s2336 + $0x68] sm:$0xff]
        %v2475 = vld [vmem:[%s2336 + $0x78] sm:$0xff]
        %v2476 = vld [vmem:[%s2336 + $0x80] sm:$0xff]
        %v2477 = vld [vmem:[%s2336 + $0x90] sm:$0xff]
        %v2478 = vld [vmem:[%s2336 + $0x98] sm:$0xff]
        %v2479 = vld [vmem:[%s2336 + $0xa8] sm:$0xff]
        %v2480 = vld [vmem:[%s2336 + $0xb0] sm:$0xff]
        %v2481 = vld [vmem:[%s2336 + $0xc0] sm:$0xff]
        %v2482 = vld [vmem:[%s2336 + $0xc8] sm:$0xff]
        %v2483 = vld [vmem:[%s2336 + $0xd8] sm:$0xff]
        %v2484 = vld [vmem:[%s2336 + $0xe0] sm:$0xff]
        %v2485 = vld [vmem:[%s2336 + $0xf0] sm:$0xff]
        %v2486 = vld [vmem:[%s2336 + $0xf8] sm:$0xff]
        %v2487 = vld [vmem:[%s2336 + $0x108] sm:$0xff]
        %v2488 = vld [vmem:[%s2336 + $0x110] sm:$0xff]
        %v2489 = vld [vmem:[%s2336 + $0x120] sm:$0xff]
        %v2490 = vld [vmem:[%s2336 + $0x128] sm:$0xff]
        %v2491 = vld [vmem:[%s2336 + $0x138] sm:$0xff]
        %v2492 = vld [vmem:[%s2336 + $0x140] sm:$0xff]
        %v2493 = vld [vmem:[%s2336 + $0x150] sm:$0xff]
        %v2494 = vld [vmem:[%s2336 + $0x158] sm:$0xff]
        %v2495 = vld [vmem:[%s2336 + $0x168] sm:$0xff]
        %v2496 = vld [vmem:[%s2336 + $0x170] sm:$0xff]
        %v2497 = vld [vmem:[%s2336 + $0x1] sm:$0xff]
        %v2498 = vld [vmem:[%s2336 + $0x9] sm:$0xff]
        %v2499 = vld [vmem:[%s2336 + $0x19] sm:$0xff]
        %v2500 = vld [vmem:[%s2336 + $0x21] sm:$0xff]
        %v2501 = vld [vmem:[%s2336 + $0x31] sm:$0xff]
        %v2502 = vld [vmem:[%s2336 + $0x39] sm:$0xff]
        %v2503 = vld [vmem:[%s2336 + $0x49] sm:$0xff]
        %v2504 = vld [vmem:[%s2336 + $0x51] sm:$0xff]
        %v2505 = vld [vmem:[%s2336 + $0x61] sm:$0xff]
        %v2506 = vld [vmem:[%s2336 + $0x69] sm:$0xff]
        %v2507 = vld [vmem:[%s2336 + $0x79] sm:$0xff]
        %v2508 = vld [vmem:[%s2336 + $0x81] sm:$0xff]
        %v2509 = vld [vmem:[%s2336 + $0x91] sm:$0xff]
        %v2510 = vld [vmem:[%s2336 + $0x99] sm:$0xff]
        %v2511 = vld [vmem:[%s2336 + $0xa9] sm:$0xff]
        %v2512 = vld [vmem:[%s2336 + $0xb1] sm:$0xff]
        %v2513 = vld [vmem:[%s2336 + $0xc1] sm:$0xff]
        %v2514 = vld [vmem:[%s2336 + $0xc9] sm:$0xff]
        %v2515 = vld [vmem:[%s2336 + $0xd9] sm:$0xff]
        %v2516 = vld [vmem:[%s2336 + $0xe1] sm:$0xff]
        %v2517 = vld [vmem:[%s2336 + $0xf1] sm:$0xff]
        %v2518 = vld [vmem:[%s2336 + $0xf9] sm:$0xff]
        %v2519 = vld [vmem:[%s2336 + $0x109] sm:$0xff]
        %v2520 = vld [vmem:[%s2336 + $0x111] sm:$0xff]
        %v2521 = vld [vmem:[%s2336 + $0x121] sm:$0xff]
        %v2522 = vld [vmem:[%s2336 + $0x129] sm:$0xff]
        %v2523 = vld [vmem:[%s2336 + $0x139] sm:$0xff]
        %v2524 = vld [vmem:[%s2336 + $0x141] sm:$0xff]
        %v2525 = vld [vmem:[%s2336 + $0x151] sm:$0xff]
        %v2526 = vld [vmem:[%s2336 + $0x159] sm:$0xff]
        %v2527 = vld [vmem:[%s2336 + $0x169] sm:$0xff]
        %v2528 = vld [vmem:[%s2336 + $0x171] sm:$0xff]
        %v2529 = vld [vmem:[%s2336 + $0x2] sm:$0xff]
        %v2530 = vld [vmem:[%s2336 + $0xa] sm:$0xff]
        %v2531 = vld [vmem:[%s2336 + $0x1a] sm:$0xff]
        %v2532 = vld [vmem:[%s2336 + $0x22] sm:$0xff]
        %v2533 = vld [vmem:[%s2336 + $0x32] sm:$0xff]
        %v2534 = vld [vmem:[%s2336 + $0x3a] sm:$0xff]
        %v2535 = vld [vmem:[%s2336 + $0x4a] sm:$0xff]
        %v2536 = vld [vmem:[%s2336 + $0x52] sm:$0xff]
        %v2537 = vld [vmem:[%s2336 + $0x62] sm:$0xff]
        %v2538 = vld [vmem:[%s2336 + $0x6a] sm:$0xff]
        %v2539 = vld [vmem:[%s2336 + $0x7a] sm:$0xff]
        %v2540 = vld [vmem:[%s2336 + $0x82] sm:$0xff]
        %v2541 = vld [vmem:[%s2336 + $0x92] sm:$0xff]
        %v2542 = vld [vmem:[%s2336 + $0x9a] sm:$0xff]
        %v2543 = vld [vmem:[%s2336 + $0xaa] sm:$0xff]
        %v2544 = vld [vmem:[%s2336 + $0xb2] sm:$0xff]
        %v2545 = vld [vmem:[%s2336 + $0xc2] sm:$0xff]
        %v2546 = vld [vmem:[%s2336 + $0xca] sm:$0xff]
        %v2547 = vld [vmem:[%s2336 + $0xda] sm:$0xff]
        %v2548 = vld [vmem:[%s2336 + $0xe2] sm:$0xff]
        %v2549 = vld [vmem:[%s2336 + $0xf2] sm:$0xff]
        %v2550 = vld [vmem:[%s2336 + $0xfa] sm:$0xff]
        %v2551 = vld [vmem:[%s2336 + $0x10a] sm:$0xff]
        %v2552 = vld [vmem:[%s2336 + $0x112] sm:$0xff]
        %v2553 = vld [vmem:[%s2336 + $0x122] sm:$0xff]
        %v2554 = vld [vmem:[%s2336 + $0x12a] sm:$0xff]
        %v2555 = vld [vmem:[%s2336 + $0x13a] sm:$0xff]
        %v2556 = vld [vmem:[%s2336 + $0x142] sm:$0xff]
        %v2557 = vld [vmem:[%s2336 + $0x152] sm:$0xff]
        %v2558 = vld [vmem:[%s2336 + $0x15a] sm:$0xff]
        %v2559 = vld [vmem:[%s2336 + $0x16a] sm:$0xff]
        %v2560 = vld [vmem:[%s2336 + $0x172] sm:$0xff]
        %s2561 = scalar_lea.vmem [#allocation3], 48
        %v2562 = vld [vmem:[%s2561] sm:$0xff]
        %v2563 = vld [vmem:[%s2561 + $0x8] sm:$0xff]
        %v2564 = vld [vmem:[%s2561 + $0x18] sm:$0xff]
        %v2565 = vld [vmem:[%s2561 + $0x20] sm:$0xff]
        %v2566 = vld [vmem:[%s2561 + $0x30] sm:$0xff]
        %v2567 = vld [vmem:[%s2561 + $0x38] sm:$0xff]
        %v2568 = vld [vmem:[%s2561 + $0x48] sm:$0xff]
        %v2569 = vld [vmem:[%s2561 + $0x50] sm:$0xff]
        %v2570 = vld [vmem:[%s2561 + $0x60] sm:$0xff]
        %v2571 = vld [vmem:[%s2561 + $0x68] sm:$0xff]
        %v2572 = vld [vmem:[%s2561 + $0x78] sm:$0xff]
        %v2573 = vld [vmem:[%s2561 + $0x80] sm:$0xff]
        %v2574 = vld [vmem:[%s2561 + $0x90] sm:$0xff]
        %v2575 = vld [vmem:[%s2561 + $0x98] sm:$0xff]
        %v2576 = vld [vmem:[%s2561 + $0xa8] sm:$0xff]
        %v2577 = vld [vmem:[%s2561 + $0xb0] sm:$0xff]
        %v2578 = vld [vmem:[%s2561 + $0xc0] sm:$0xff]
        %v2579 = vld [vmem:[%s2561 + $0xc8] sm:$0xff]
        %v2580 = vld [vmem:[%s2561 + $0xd8] sm:$0xff]
        %v2581 = vld [vmem:[%s2561 + $0xe0] sm:$0xff]
        %v2582 = vld [vmem:[%s2561 + $0xf0] sm:$0xff]
        %v2583 = vld [vmem:[%s2561 + $0xf8] sm:$0xff]
        %v2584 = vld [vmem:[%s2561 + $0x108] sm:$0xff]
        %v2585 = vld [vmem:[%s2561 + $0x110] sm:$0xff]
        %v2586 = vld [vmem:[%s2561 + $0x120] sm:$0xff]
        %v2587 = vld [vmem:[%s2561 + $0x128] sm:$0xff]
        %v2588 = vld [vmem:[%s2561 + $0x138] sm:$0xff]
        %v2589 = vld [vmem:[%s2561 + $0x140] sm:$0xff]
        %v2590 = vld [vmem:[%s2561 + $0x150] sm:$0xff]
        %v2591 = vld [vmem:[%s2561 + $0x158] sm:$0xff]
        %v2592 = vld [vmem:[%s2561 + $0x168] sm:$0xff]
        %v2593 = vld [vmem:[%s2561 + $0x170] sm:$0xff]
        %v2594 = vld [vmem:[%s2561 + $0x1] sm:$0xff]
        %v2595 = vld [vmem:[%s2561 + $0x9] sm:$0xff]
        %v2596 = vld [vmem:[%s2561 + $0x19] sm:$0xff]
        %v2597 = vld [vmem:[%s2561 + $0x21] sm:$0xff]
        %v2598 = vld [vmem:[%s2561 + $0x31] sm:$0xff]
        %v2599 = vld [vmem:[%s2561 + $0x39] sm:$0xff]
        %v2600 = vld [vmem:[%s2561 + $0x49] sm:$0xff]
        %v2601 = vld [vmem:[%s2561 + $0x51] sm:$0xff]
        %v2602 = vld [vmem:[%s2561 + $0x61] sm:$0xff]
        %v2603 = vld [vmem:[%s2561 + $0x69] sm:$0xff]
        %v2604 = vld [vmem:[%s2561 + $0x79] sm:$0xff]
        %v2605 = vld [vmem:[%s2561 + $0x81] sm:$0xff]
        %v2606 = vld [vmem:[%s2561 + $0x91] sm:$0xff]
        %v2607 = vld [vmem:[%s2561 + $0x99] sm:$0xff]
        %v2608 = vld [vmem:[%s2561 + $0xa9] sm:$0xff]
        %v2609 = vld [vmem:[%s2561 + $0xb1] sm:$0xff]
        %v2610 = vld [vmem:[%s2561 + $0xc1] sm:$0xff]
        %v2611 = vld [vmem:[%s2561 + $0xc9] sm:$0xff]
        %v2612 = vld [vmem:[%s2561 + $0xd9] sm:$0xff]
        %v2613 = vld [vmem:[%s2561 + $0xe1] sm:$0xff]
        %v2614 = vld [vmem:[%s2561 + $0xf1] sm:$0xff]
        %v2615 = vld [vmem:[%s2561 + $0xf9] sm:$0xff]
        %v2616 = vld [vmem:[%s2561 + $0x109] sm:$0xff]
        %v2617 = vld [vmem:[%s2561 + $0x111] sm:$0xff]
        %v2618 = vld [vmem:[%s2561 + $0x121] sm:$0xff]
        %v2619 = vld [vmem:[%s2561 + $0x129] sm:$0xff]
        %v2620 = vld [vmem:[%s2561 + $0x139] sm:$0xff]
        %v2621 = vld [vmem:[%s2561 + $0x141] sm:$0xff]
        %v2622 = vld [vmem:[%s2561 + $0x151] sm:$0xff]
        %v2623 = vld [vmem:[%s2561 + $0x159] sm:$0xff]
        %v2624 = vld [vmem:[%s2561 + $0x169] sm:$0xff]
        %v2625 = vld [vmem:[%s2561 + $0x171] sm:$0xff]
        %v2626 = vld [vmem:[%s2561 + $0x2] sm:$0xff]
        %v2627 = vld [vmem:[%s2561 + $0xa] sm:$0xff]
        %v2628 = vld [vmem:[%s2561 + $0x1a] sm:$0xff]
        %v2629 = vld [vmem:[%s2561 + $0x22] sm:$0xff]
        %v2630 = vld [vmem:[%s2561 + $0x32] sm:$0xff]
        %v2631 = vld [vmem:[%s2561 + $0x3a] sm:$0xff]
        %v2632 = vld [vmem:[%s2561 + $0x4a] sm:$0xff]
        %v2633 = vld [vmem:[%s2561 + $0x52] sm:$0xff]
        %v2634 = vld [vmem:[%s2561 + $0x62] sm:$0xff]
        %v2635 = vld [vmem:[%s2561 + $0x6a] sm:$0xff]
        %v2636 = vld [vmem:[%s2561 + $0x7a] sm:$0xff]
        %v2637 = vld [vmem:[%s2561 + $0x82] sm:$0xff]
        %v2638 = vld [vmem:[%s2561 + $0x92] sm:$0xff]
        %v2639 = vld [vmem:[%s2561 + $0x9a] sm:$0xff]
        %v2640 = vld [vmem:[%s2561 + $0xaa] sm:$0xff]
        %v2641 = vld [vmem:[%s2561 + $0xb2] sm:$0xff]
        %v2642 = vld [vmem:[%s2561 + $0xc2] sm:$0xff]
        %v2643 = vld [vmem:[%s2561 + $0xca] sm:$0xff]
        %v2644 = vld [vmem:[%s2561 + $0xda] sm:$0xff]
        %v2645 = vld [vmem:[%s2561 + $0xe2] sm:$0xff]
        %v2646 = vld [vmem:[%s2561 + $0xf2] sm:$0xff]
        %v2647 = vld [vmem:[%s2561 + $0xfa] sm:$0xff]
        %v2648 = vld [vmem:[%s2561 + $0x10a] sm:$0xff]
        %v2649 = vld [vmem:[%s2561 + $0x112] sm:$0xff]
        %v2650 = vld [vmem:[%s2561 + $0x122] sm:$0xff]
        %v2651 = vld [vmem:[%s2561 + $0x12a] sm:$0xff]
        %v2652 = vld [vmem:[%s2561 + $0x13a] sm:$0xff]
        %v2653 = vld [vmem:[%s2561 + $0x142] sm:$0xff]
        %v2654 = vld [vmem:[%s2561 + $0x152] sm:$0xff]
        %v2655 = vld [vmem:[%s2561 + $0x15a] sm:$0xff]
        %v2656 = vld [vmem:[%s2561 + $0x16a] sm:$0xff]
        %v2657 = vld [vmem:[%s2561 + $0x172] sm:$0xff]
        %2690 = vrot.lane.b32.xlu0 %v2401, 8
        %v2691 = vpop.permute.xlu0 %2690
        %2692 = vrot.lane.b32.xlu0 %v2402, 8
        %v2693 = vpop.permute.xlu0 %2692
        %2694 = vrot.lane.b32.xlu0 %v2403, 8
        %v2695 = vpop.permute.xlu0 %2694
        %2696 = vrot.lane.b32.xlu0 %v2404, 8
        %v2697 = vpop.permute.xlu0 %2696
        %2698 = vrot.lane.b32.xlu0 %v2405, 8
        %v2699 = vpop.permute.xlu0 %2698
        %2700 = vrot.lane.b32.xlu0 %v2406, 8
        %v2701 = vpop.permute.xlu0 %2700
        %2702 = vrot.lane.b32.xlu0 %v2407, 8
        %v2703 = vpop.permute.xlu0 %2702
        %2704 = vrot.lane.b32.xlu0 %v2408, 8
        %v2705 = vpop.permute.xlu0 %2704
        %2706 = vrot.lane.b32.xlu0 %v2409, 8
        %v2707 = vpop.permute.xlu0 %2706
        %2708 = vrot.lane.b32.xlu0 %v2410, 8
        %v2709 = vpop.permute.xlu0 %2708
        %2710 = vrot.lane.b32.xlu0 %v2411, 8
        %v2711 = vpop.permute.xlu0 %2710
        %2712 = vrot.lane.b32.xlu0 %v2412, 8
        %v2713 = vpop.permute.xlu0 %2712
        %2714 = vrot.lane.b32.xlu0 %v2413, 8
        %v2715 = vpop.permute.xlu0 %2714
        %2716 = vrot.lane.b32.xlu0 %v2414, 8
        %v2717 = vpop.permute.xlu0 %2716
        %2718 = vrot.lane.b32.xlu0 %v2415, 8
        %v2719 = vpop.permute.xlu0 %2718
        %2720 = vrot.lane.b32.xlu0 %v2416, 8
        %v2721 = vpop.permute.xlu0 %2720
        %2722 = vrot.lane.b32.xlu0 %v2417, 8
        %v2723 = vpop.permute.xlu0 %2722
        %2724 = vrot.lane.b32.xlu0 %v2418, 8
        %v2725 = vpop.permute.xlu0 %2724
        %2726 = vrot.lane.b32.xlu0 %v2419, 8
        %v2727 = vpop.permute.xlu0 %2726
        %2728 = vrot.lane.b32.xlu0 %v2420, 8
        %v2729 = vpop.permute.xlu0 %2728
        %2730 = vrot.lane.b32.xlu0 %v2421, 8
        %v2731 = vpop.permute.xlu0 %2730
        %2732 = vrot.lane.b32.xlu0 %v2422, 8
        %v2733 = vpop.permute.xlu0 %2732
        %2734 = vrot.lane.b32.xlu0 %v2423, 8
        %v2735 = vpop.permute.xlu0 %2734
        %2736 = vrot.lane.b32.xlu0 %v2424, 8
        %v2737 = vpop.permute.xlu0 %2736
        %2738 = vrot.lane.b32.xlu0 %v2425, 8
        %v2739 = vpop.permute.xlu0 %2738
        %2740 = vrot.lane.b32.xlu0 %v2426, 8
        %v2741 = vpop.permute.xlu0 %2740
        %2742 = vrot.lane.b32.xlu0 %v2427, 8
        %v2743 = vpop.permute.xlu0 %2742
        %2744 = vrot.lane.b32.xlu0 %v2428, 8
        %v2745 = vpop.permute.xlu0 %2744
        %2746 = vrot.lane.b32.xlu0 %v2429, 8
        %v2747 = vpop.permute.xlu0 %2746
        %2748 = vrot.lane.b32.xlu0 %v2430, 8
        %v2749 = vpop.permute.xlu0 %2748
        %2750 = vrot.lane.b32.xlu0 %v2431, 8
        %v2751 = vpop.permute.xlu0 %2750
        %2752 = vrot.lane.b32.xlu0 %v2432, 8
        %v2753 = vpop.permute.xlu0 %2752
        %2818 = vrot.lane.b32.xlu0 %v2433, 16
        %v2819 = vpop.permute.xlu0 %2818
        %2820 = vrot.lane.b32.xlu0 %v2434, 16
        %v2821 = vpop.permute.xlu0 %2820
        %2822 = vrot.lane.b32.xlu0 %v2435, 16
        %v2823 = vpop.permute.xlu0 %2822
        %2824 = vrot.lane.b32.xlu0 %v2436, 16
        %v2825 = vpop.permute.xlu0 %2824
        %2826 = vrot.lane.b32.xlu0 %v2437, 16
        %v2827 = vpop.permute.xlu0 %2826
        %2828 = vrot.lane.b32.xlu0 %v2438, 16
        %v2829 = vpop.permute.xlu0 %2828
        %2830 = vrot.lane.b32.xlu0 %v2439, 16
        %v2831 = vpop.permute.xlu0 %2830
        %2832 = vrot.lane.b32.xlu0 %v2440, 16
        %v2833 = vpop.permute.xlu0 %2832
        %2834 = vrot.lane.b32.xlu0 %v2441, 16
        %v2835 = vpop.permute.xlu0 %2834
        %2836 = vrot.lane.b32.xlu0 %v2442, 16
        %v2837 = vpop.permute.xlu0 %2836
        %2838 = vrot.lane.b32.xlu0 %v2443, 16
        %v2839 = vpop.permute.xlu0 %2838
        %2840 = vrot.lane.b32.xlu0 %v2444, 16
        %v2841 = vpop.permute.xlu0 %2840
        %2842 = vrot.lane.b32.xlu0 %v2445, 16
        %v2843 = vpop.permute.xlu0 %2842
        %2844 = vrot.lane.b32.xlu0 %v2446, 16
        %v2845 = vpop.permute.xlu0 %2844
        %2846 = vrot.lane.b32.xlu0 %v2447, 16
        %v2847 = vpop.permute.xlu0 %2846
        %2848 = vrot.lane.b32.xlu0 %v2448, 16
        %v2849 = vpop.permute.xlu0 %2848
        %2850 = vrot.lane.b32.xlu0 %v2449, 16
        %v2851 = vpop.permute.xlu0 %2850
        %2852 = vrot.lane.b32.xlu0 %v2450, 16
        %v2853 = vpop.permute.xlu0 %2852
        %2854 = vrot.lane.b32.xlu0 %v2451, 16
        %v2855 = vpop.permute.xlu0 %2854
        %2856 = vrot.lane.b32.xlu0 %v2452, 16
        %v2857 = vpop.permute.xlu0 %2856
        %2858 = vrot.lane.b32.xlu0 %v2453, 16
        %v2859 = vpop.permute.xlu0 %2858
        %2860 = vrot.lane.b32.xlu0 %v2454, 16
        %v2861 = vpop.permute.xlu0 %2860
        %2862 = vrot.lane.b32.xlu0 %v2455, 16
        %v2863 = vpop.permute.xlu0 %2862
        %2864 = vrot.lane.b32.xlu0 %v2456, 16
        %v2865 = vpop.permute.xlu0 %2864
        %2866 = vrot.lane.b32.xlu0 %v2457, 16
        %v2867 = vpop.permute.xlu0 %2866
        %2868 = vrot.lane.b32.xlu0 %v2458, 16
        %v2869 = vpop.permute.xlu0 %2868
        %2870 = vrot.lane.b32.xlu0 %v2459, 16
        %v2871 = vpop.permute.xlu0 %2870
        %2872 = vrot.lane.b32.xlu0 %v2460, 16
        %v2873 = vpop.permute.xlu0 %2872
        %2874 = vrot.lane.b32.xlu0 %v2461, 16
        %v2875 = vpop.permute.xlu0 %2874
        %2876 = vrot.lane.b32.xlu0 %v2462, 16
        %v2877 = vpop.permute.xlu0 %2876
        %2878 = vrot.lane.b32.xlu0 %v2463, 16
        %v2879 = vpop.permute.xlu0 %2878
        %2880 = vrot.lane.b32.xlu0 %v2464, 16
        %v2881 = vpop.permute.xlu0 %2880
        %2946 = vrot.lane.b32.xlu0 %v2465, 24
        %v2947 = vpop.permute.xlu0 %2946
        %2948 = vrot.lane.b32.xlu0 %v2466, 24
        %v2949 = vpop.permute.xlu0 %2948
        %2950 = vrot.lane.b32.xlu0 %v2467, 24
        %v2951 = vpop.permute.xlu0 %2950
        %2952 = vrot.lane.b32.xlu0 %v2468, 24
        %v2953 = vpop.permute.xlu0 %2952
        %2954 = vrot.lane.b32.xlu0 %v2469, 24
        %v2955 = vpop.permute.xlu0 %2954
        %2956 = vrot.lane.b32.xlu0 %v2470, 24
        %v2957 = vpop.permute.xlu0 %2956
        %2958 = vrot.lane.b32.xlu0 %v2471, 24
        %v2959 = vpop.permute.xlu0 %2958
        %2960 = vrot.lane.b32.xlu0 %v2472, 24
        %v2961 = vpop.permute.xlu0 %2960
        %2962 = vrot.lane.b32.xlu0 %v2473, 24
        %v2963 = vpop.permute.xlu0 %2962
        %2964 = vrot.lane.b32.xlu0 %v2474, 24
        %v2965 = vpop.permute.xlu0 %2964
        %2966 = vrot.lane.b32.xlu0 %v2475, 24
        %v2967 = vpop.permute.xlu0 %2966
        %2968 = vrot.lane.b32.xlu0 %v2476, 24
        %v2969 = vpop.permute.xlu0 %2968
        %2970 = vrot.lane.b32.xlu0 %v2477, 24
        %v2971 = vpop.permute.xlu0 %2970
        %2972 = vrot.lane.b32.xlu0 %v2478, 24
        %v2973 = vpop.permute.xlu0 %2972
        %2974 = vrot.lane.b32.xlu0 %v2479, 24
        %v2975 = vpop.permute.xlu0 %2974
        %2976 = vrot.lane.b32.xlu0 %v2480, 24
        %v2977 = vpop.permute.xlu0 %2976
        %2978 = vrot.lane.b32.xlu0 %v2481, 24
        %v2979 = vpop.permute.xlu0 %2978
        %2980 = vrot.lane.b32.xlu0 %v2482, 24
        %v2981 = vpop.permute.xlu0 %2980
        %2982 = vrot.lane.b32.xlu0 %v2483, 24
        %v2983 = vpop.permute.xlu0 %2982
        %2984 = vrot.lane.b32.xlu0 %v2484, 24
        %v2985 = vpop.permute.xlu0 %2984
        %2986 = vrot.lane.b32.xlu0 %v2485, 24
        %v2987 = vpop.permute.xlu0 %2986
        %2988 = vrot.lane.b32.xlu0 %v2486, 24
        %v2989 = vpop.permute.xlu0 %2988
        %2990 = vrot.lane.b32.xlu0 %v2487, 24
        %v2991 = vpop.permute.xlu0 %2990
        %2992 = vrot.lane.b32.xlu0 %v2488, 24
        %v2993 = vpop.permute.xlu0 %2992
        %2994 = vrot.lane.b32.xlu0 %v2489, 24
        %v2995 = vpop.permute.xlu0 %2994
        %2996 = vrot.lane.b32.xlu0 %v2490, 24
        %v2997 = vpop.permute.xlu0 %2996
        %2998 = vrot.lane.b32.xlu0 %v2491, 24
        %v2999 = vpop.permute.xlu0 %2998
        %3000 = vrot.lane.b32.xlu0 %v2492, 24
        %v3001 = vpop.permute.xlu0 %3000
        %3002 = vrot.lane.b32.xlu0 %v2493, 24
        %v3003 = vpop.permute.xlu0 %3002
        %3004 = vrot.lane.b32.xlu0 %v2494, 24
        %v3005 = vpop.permute.xlu0 %3004
        %3006 = vrot.lane.b32.xlu0 %v2495, 24
        %v3007 = vpop.permute.xlu0 %3006
        %3008 = vrot.lane.b32.xlu0 %v2496, 24
        %v3009 = vpop.permute.xlu0 %3008
        %3074 = vrot.lane.b32.xlu0 %v2497, 32
        %v3075 = vpop.permute.xlu0 %3074
        %3076 = vrot.lane.b32.xlu0 %v2498, 32
        %v3077 = vpop.permute.xlu0 %3076
        %3078 = vrot.lane.b32.xlu0 %v2499, 32
        %v3079 = vpop.permute.xlu0 %3078
        %3080 = vrot.lane.b32.xlu0 %v2500, 32
        %v3081 = vpop.permute.xlu0 %3080
        %3082 = vrot.lane.b32.xlu0 %v2501, 32
        %v3083 = vpop.permute.xlu0 %3082
        %3084 = vrot.lane.b32.xlu0 %v2502, 32
        %v3085 = vpop.permute.xlu0 %3084
        %3086 = vrot.lane.b32.xlu0 %v2503, 32
        %v3087 = vpop.permute.xlu0 %3086
        %3088 = vrot.lane.b32.xlu0 %v2504, 32
        %v3089 = vpop.permute.xlu0 %3088
        %3090 = vrot.lane.b32.xlu0 %v2505, 32
        %v3091 = vpop.permute.xlu0 %3090
        %3092 = vrot.lane.b32.xlu0 %v2506, 32
        %v3093 = vpop.permute.xlu0 %3092
        %3094 = vrot.lane.b32.xlu0 %v2507, 32
        %v3095 = vpop.permute.xlu0 %3094
        %3096 = vrot.lane.b32.xlu0 %v2508, 32
        %v3097 = vpop.permute.xlu0 %3096
        %3098 = vrot.lane.b32.xlu0 %v2509, 32
        %v3099 = vpop.permute.xlu0 %3098
        %3100 = vrot.lane.b32.xlu0 %v2510, 32
        %v3101 = vpop.permute.xlu0 %3100
        %3102 = vrot.lane.b32.xlu0 %v2511, 32
        %v3103 = vpop.permute.xlu0 %3102
        %3104 = vrot.lane.b32.xlu0 %v2512, 32
        %v3105 = vpop.permute.xlu0 %3104
        %3106 = vrot.lane.b32.xlu0 %v2513, 32
        %v3107 = vpop.permute.xlu0 %3106
        %3108 = vrot.lane.b32.xlu0 %v2514, 32
        %v3109 = vpop.permute.xlu0 %3108
        %3110 = vrot.lane.b32.xlu0 %v2515, 32
        %v3111 = vpop.permute.xlu0 %3110
        %3112 = vrot.lane.b32.xlu0 %v2516, 32
        %v3113 = vpop.permute.xlu0 %3112
        %3114 = vrot.lane.b32.xlu0 %v2517, 32
        %v3115 = vpop.permute.xlu0 %3114
        %3116 = vrot.lane.b32.xlu0 %v2518, 32
        %v3117 = vpop.permute.xlu0 %3116
        %3118 = vrot.lane.b32.xlu0 %v2519, 32
        %v3119 = vpop.permute.xlu0 %3118
        %3120 = vrot.lane.b32.xlu0 %v2520, 32
        %v3121 = vpop.permute.xlu0 %3120
        %3122 = vrot.lane.b32.xlu0 %v2521, 32
        %v3123 = vpop.permute.xlu0 %3122
        %3124 = vrot.lane.b32.xlu0 %v2522, 32
        %v3125 = vpop.permute.xlu0 %3124
        %3126 = vrot.lane.b32.xlu0 %v2523, 32
        %v3127 = vpop.permute.xlu0 %3126
        %3128 = vrot.lane.b32.xlu0 %v2524, 32
        %v3129 = vpop.permute.xlu0 %3128
        %3130 = vrot.lane.b32.xlu0 %v2525, 32
        %v3131 = vpop.permute.xlu0 %3130
        %3132 = vrot.lane.b32.xlu0 %v2526, 32
        %v3133 = vpop.permute.xlu0 %3132
        %3134 = vrot.lane.b32.xlu0 %v2527, 32
        %v3135 = vpop.permute.xlu0 %3134
        %3136 = vrot.lane.b32.xlu0 %v2528, 32
        %v3137 = vpop.permute.xlu0 %3136
        %3202 = vrot.lane.b32.xlu0 %v2529, 40
        %v3203 = vpop.permute.xlu0 %3202
        %3204 = vrot.lane.b32.xlu0 %v2530, 40
        %v3205 = vpop.permute.xlu0 %3204
        %3206 = vrot.lane.b32.xlu0 %v2531, 40
        %v3207 = vpop.permute.xlu0 %3206
        %3208 = vrot.lane.b32.xlu0 %v2532, 40
        %v3209 = vpop.permute.xlu0 %3208
        %3210 = vrot.lane.b32.xlu0 %v2533, 40
        %v3211 = vpop.permute.xlu0 %3210
        %3212 = vrot.lane.b32.xlu0 %v2534, 40
        %v3213 = vpop.permute.xlu0 %3212
        %3214 = vrot.lane.b32.xlu0 %v2535, 40
        %v3215 = vpop.permute.xlu0 %3214
        %3216 = vrot.lane.b32.xlu0 %v2536, 40
        %v3217 = vpop.permute.xlu0 %3216
        %3218 = vrot.lane.b32.xlu0 %v2537, 40
        %v3219 = vpop.permute.xlu0 %3218
        %3220 = vrot.lane.b32.xlu0 %v2538, 40
        %v3221 = vpop.permute.xlu0 %3220
        %3222 = vrot.lane.b32.xlu0 %v2539, 40
        %v3223 = vpop.permute.xlu0 %3222
        %3224 = vrot.lane.b32.xlu0 %v2540, 40
        %v3225 = vpop.permute.xlu0 %3224
        %3226 = vrot.lane.b32.xlu0 %v2541, 40
        %v3227 = vpop.permute.xlu0 %3226
        %3228 = vrot.lane.b32.xlu0 %v2542, 40
        %v3229 = vpop.permute.xlu0 %3228
        %3230 = vrot.lane.b32.xlu0 %v2543, 40
        %v3231 = vpop.permute.xlu0 %3230
        %3232 = vrot.lane.b32.xlu0 %v2544, 40
        %v3233 = vpop.permute.xlu0 %3232
        %3234 = vrot.lane.b32.xlu0 %v2545, 40
        %v3235 = vpop.permute.xlu0 %3234
        %3236 = vrot.lane.b32.xlu0 %v2546, 40
        %v3237 = vpop.permute.xlu0 %3236
        %3238 = vrot.lane.b32.xlu0 %v2547, 40
        %v3239 = vpop.permute.xlu0 %3238
        %3240 = vrot.lane.b32.xlu0 %v2548, 40
        %v3241 = vpop.permute.xlu0 %3240
        %3242 = vrot.lane.b32.xlu0 %v2549, 40
        %v3243 = vpop.permute.xlu0 %3242
        %3244 = vrot.lane.b32.xlu0 %v2550, 40
        %v3245 = vpop.permute.xlu0 %3244
        %3246 = vrot.lane.b32.xlu0 %v2551, 40
        %v3247 = vpop.permute.xlu0 %3246
        %3248 = vrot.lane.b32.xlu0 %v2552, 40
        %v3249 = vpop.permute.xlu0 %3248
        %3250 = vrot.lane.b32.xlu0 %v2553, 40
        %v3251 = vpop.permute.xlu0 %3250
        %3252 = vrot.lane.b32.xlu0 %v2554, 40
        %v3253 = vpop.permute.xlu0 %3252
        %3254 = vrot.lane.b32.xlu0 %v2555, 40
        %v3255 = vpop.permute.xlu0 %3254
        %3256 = vrot.lane.b32.xlu0 %v2556, 40
        %v3257 = vpop.permute.xlu0 %3256
        %3258 = vrot.lane.b32.xlu0 %v2557, 40
        %v3259 = vpop.permute.xlu0 %3258
        %3260 = vrot.lane.b32.xlu0 %v2558, 40
        %v3261 = vpop.permute.xlu0 %3260
        %3262 = vrot.lane.b32.xlu0 %v2559, 40
        %v3263 = vpop.permute.xlu0 %3262
        %3264 = vrot.lane.b32.xlu0 %v2560, 40
        %v3265 = vpop.permute.xlu0 %3264
        %3330 = vrot.lane.b32.xlu0 %v2562, 48
        %v3331 = vpop.permute.xlu0 %3330
        %3332 = vrot.lane.b32.xlu0 %v2563, 48
        %v3333 = vpop.permute.xlu0 %3332
        %3334 = vrot.lane.b32.xlu0 %v2564, 48
        %v3335 = vpop.permute.xlu0 %3334
        %3336 = vrot.lane.b32.xlu0 %v2565, 48
        %v3337 = vpop.permute.xlu0 %3336
        %3338 = vrot.lane.b32.xlu0 %v2566, 48
        %v3339 = vpop.permute.xlu0 %3338
        %3340 = vrot.lane.b32.xlu0 %v2567, 48
        %v3341 = vpop.permute.xlu0 %3340
        %3342 = vrot.lane.b32.xlu0 %v2568, 48
        %v3343 = vpop.permute.xlu0 %3342
        %3344 = vrot.lane.b32.xlu0 %v2569, 48
        %v3345 = vpop.permute.xlu0 %3344
        %3346 = vrot.lane.b32.xlu0 %v2570, 48
        %v3347 = vpop.permute.xlu0 %3346
        %3348 = vrot.lane.b32.xlu0 %v2571, 48
        %v3349 = vpop.permute.xlu0 %3348
        %3350 = vrot.lane.b32.xlu0 %v2572, 48
        %v3351 = vpop.permute.xlu0 %3350
        %3352 = vrot.lane.b32.xlu0 %v2573, 48
        %v3353 = vpop.permute.xlu0 %3352
        %3354 = vrot.lane.b32.xlu0 %v2574, 48
        %v3355 = vpop.permute.xlu0 %3354
        %3356 = vrot.lane.b32.xlu0 %v2575, 48
        %v3357 = vpop.permute.xlu0 %3356
        %3358 = vrot.lane.b32.xlu0 %v2576, 48
        %v3359 = vpop.permute.xlu0 %3358
        %3360 = vrot.lane.b32.xlu0 %v2577, 48
        %v3361 = vpop.permute.xlu0 %3360
        %3362 = vrot.lane.b32.xlu0 %v2578, 48
        %v3363 = vpop.permute.xlu0 %3362
        %3364 = vrot.lane.b32.xlu0 %v2579, 48
        %v3365 = vpop.permute.xlu0 %3364
        %3366 = vrot.lane.b32.xlu0 %v2580, 48
        %v3367 = vpop.permute.xlu0 %3366
        %3368 = vrot.lane.b32.xlu0 %v2581, 48
        %v3369 = vpop.permute.xlu0 %3368
        %3370 = vrot.lane.b32.xlu0 %v2582, 48
        %v3371 = vpop.permute.xlu0 %3370
        %3372 = vrot.lane.b32.xlu0 %v2583, 48
        %v3373 = vpop.permute.xlu0 %3372
        %3374 = vrot.lane.b32.xlu0 %v2584, 48
        %v3375 = vpop.permute.xlu0 %3374
        %3376 = vrot.lane.b32.xlu0 %v2585, 48
        %v3377 = vpop.permute.xlu0 %3376
        %3378 = vrot.lane.b32.xlu0 %v2586, 48
        %v3379 = vpop.permute.xlu0 %3378
        %3380 = vrot.lane.b32.xlu0 %v2587, 48
        %v3381 = vpop.permute.xlu0 %3380
        %3382 = vrot.lane.b32.xlu0 %v2588, 48
        %v3383 = vpop.permute.xlu0 %3382
        %3384 = vrot.lane.b32.xlu0 %v2589, 48
        %v3385 = vpop.permute.xlu0 %3384
        %3386 = vrot.lane.b32.xlu0 %v2590, 48
        %v3387 = vpop.permute.xlu0 %3386
        %3388 = vrot.lane.b32.xlu0 %v2591, 48
        %v3389 = vpop.permute.xlu0 %3388
        %3390 = vrot.lane.b32.xlu0 %v2592, 48
        %v3391 = vpop.permute.xlu0 %3390
        %3392 = vrot.lane.b32.xlu0 %v2593, 48
        %v3393 = vpop.permute.xlu0 %3392
        %3458 = vrot.lane.b32.xlu0 %v2594, 56
        %v3459 = vpop.permute.xlu0 %3458
        %3460 = vrot.lane.b32.xlu0 %v2595, 56
        %v3461 = vpop.permute.xlu0 %3460
        %3462 = vrot.lane.b32.xlu0 %v2596, 56
        %v3463 = vpop.permute.xlu0 %3462
        %3464 = vrot.lane.b32.xlu0 %v2597, 56
        %v3465 = vpop.permute.xlu0 %3464
        %3466 = vrot.lane.b32.xlu0 %v2598, 56
        %v3467 = vpop.permute.xlu0 %3466
        %3468 = vrot.lane.b32.xlu0 %v2599, 56
        %v3469 = vpop.permute.xlu0 %3468
        %3470 = vrot.lane.b32.xlu0 %v2600, 56
        %v3471 = vpop.permute.xlu0 %3470
        %3472 = vrot.lane.b32.xlu0 %v2601, 56
        %v3473 = vpop.permute.xlu0 %3472
        %3474 = vrot.lane.b32.xlu0 %v2602, 56
        %v3475 = vpop.permute.xlu0 %3474
        %3476 = vrot.lane.b32.xlu0 %v2603, 56
        %v3477 = vpop.permute.xlu0 %3476
        %3478 = vrot.lane.b32.xlu0 %v2604, 56
        %v3479 = vpop.permute.xlu0 %3478
        %3480 = vrot.lane.b32.xlu0 %v2605, 56
        %v3481 = vpop.permute.xlu0 %3480
        %3482 = vrot.lane.b32.xlu0 %v2606, 56
        %v3483 = vpop.permute.xlu0 %3482
        %3484 = vrot.lane.b32.xlu0 %v2607, 56
        %v3485 = vpop.permute.xlu0 %3484
        %3486 = vrot.lane.b32.xlu0 %v2608, 56
        %v3487 = vpop.permute.xlu0 %3486
        %3488 = vrot.lane.b32.xlu0 %v2609, 56
        %v3489 = vpop.permute.xlu0 %3488
        %3490 = vrot.lane.b32.xlu0 %v2610, 56
        %v3491 = vpop.permute.xlu0 %3490
        %3492 = vrot.lane.b32.xlu0 %v2611, 56
        %v3493 = vpop.permute.xlu0 %3492
        %3494 = vrot.lane.b32.xlu0 %v2612, 56
        %v3495 = vpop.permute.xlu0 %3494
        %3496 = vrot.lane.b32.xlu0 %v2613, 56
        %v3497 = vpop.permute.xlu0 %3496
        %3498 = vrot.lane.b32.xlu0 %v2614, 56
        %v3499 = vpop.permute.xlu0 %3498
        %3500 = vrot.lane.b32.xlu0 %v2615, 56
        %v3501 = vpop.permute.xlu0 %3500
        %3502 = vrot.lane.b32.xlu0 %v2616, 56
        %v3503 = vpop.permute.xlu0 %3502
        %3504 = vrot.lane.b32.xlu0 %v2617, 56
        %v3505 = vpop.permute.xlu0 %3504
        %3506 = vrot.lane.b32.xlu0 %v2618, 56
        %v3507 = vpop.permute.xlu0 %3506
        %3508 = vrot.lane.b32.xlu0 %v2619, 56
        %v3509 = vpop.permute.xlu0 %3508
        %3510 = vrot.lane.b32.xlu0 %v2620, 56
        %v3511 = vpop.permute.xlu0 %3510
        %3512 = vrot.lane.b32.xlu0 %v2621, 56
        %v3513 = vpop.permute.xlu0 %3512
        %3514 = vrot.lane.b32.xlu0 %v2622, 56
        %v3515 = vpop.permute.xlu0 %3514
        %3516 = vrot.lane.b32.xlu0 %v2623, 56
        %v3517 = vpop.permute.xlu0 %3516
        %3518 = vrot.lane.b32.xlu0 %v2624, 56
        %v3519 = vpop.permute.xlu0 %3518
        %3520 = vrot.lane.b32.xlu0 %v2625, 56
        %v3521 = vpop.permute.xlu0 %3520
        %3586 = vrot.lane.b32.xlu0 %v2626, 64
        %v3587 = vpop.permute.xlu0 %3586
        %3588 = vrot.lane.b32.xlu0 %v2627, 64
        %v3589 = vpop.permute.xlu0 %3588
        %3590 = vrot.lane.b32.xlu0 %v2628, 64
        %v3591 = vpop.permute.xlu0 %3590
        %3592 = vrot.lane.b32.xlu0 %v2629, 64
        %v3593 = vpop.permute.xlu0 %3592
        %3594 = vrot.lane.b32.xlu0 %v2630, 64
        %v3595 = vpop.permute.xlu0 %3594
        %3596 = vrot.lane.b32.xlu0 %v2631, 64
        %v3597 = vpop.permute.xlu0 %3596
        %3598 = vrot.lane.b32.xlu0 %v2632, 64
        %v3599 = vpop.permute.xlu0 %3598
        %3600 = vrot.lane.b32.xlu0 %v2633, 64
        %v3601 = vpop.permute.xlu0 %3600
        %3602 = vrot.lane.b32.xlu0 %v2634, 64
        %v3603 = vpop.permute.xlu0 %3602
        %3604 = vrot.lane.b32.xlu0 %v2635, 64
        %v3605 = vpop.permute.xlu0 %3604
        %3606 = vrot.lane.b32.xlu0 %v2636, 64
        %v3607 = vpop.permute.xlu0 %3606
        %3608 = vrot.lane.b32.xlu0 %v2637, 64
        %v3609 = vpop.permute.xlu0 %3608
        %3610 = vrot.lane.b32.xlu0 %v2638, 64
        %v3611 = vpop.permute.xlu0 %3610
        %3612 = vrot.lane.b32.xlu0 %v2639, 64
        %v3613 = vpop.permute.xlu0 %3612
        %3614 = vrot.lane.b32.xlu0 %v2640, 64
        %v3615 = vpop.permute.xlu0 %3614
        %3616 = vrot.lane.b32.xlu0 %v2641, 64
        %v3617 = vpop.permute.xlu0 %3616
        %3618 = vrot.lane.b32.xlu0 %v2642, 64
        %v3619 = vpop.permute.xlu0 %3618
        %3620 = vrot.lane.b32.xlu0 %v2643, 64
        %v3621 = vpop.permute.xlu0 %3620
        %3622 = vrot.lane.b32.xlu0 %v2644, 64
        %v3623 = vpop.permute.xlu0 %3622
        %3624 = vrot.lane.b32.xlu0 %v2645, 64
        %v3625 = vpop.permute.xlu0 %3624
        %3626 = vrot.lane.b32.xlu0 %v2646, 64
        %v3627 = vpop.permute.xlu0 %3626
        %3628 = vrot.lane.b32.xlu0 %v2647, 64
        %v3629 = vpop.permute.xlu0 %3628
        %3630 = vrot.lane.b32.xlu0 %v2648, 64
        %v3631 = vpop.permute.xlu0 %3630
        %3632 = vrot.lane.b32.xlu0 %v2649, 64
        %v3633 = vpop.permute.xlu0 %3632
        %3634 = vrot.lane.b32.xlu0 %v2650, 64
        %v3635 = vpop.permute.xlu0 %3634
        %3636 = vrot.lane.b32.xlu0 %v2651, 64
        %v3637 = vpop.permute.xlu0 %3636
        %3638 = vrot.lane.b32.xlu0 %v2652, 64
        %v3639 = vpop.permute.xlu0 %3638
        %3640 = vrot.lane.b32.xlu0 %v2653, 64
        %v3641 = vpop.permute.xlu0 %3640
        %3642 = vrot.lane.b32.xlu0 %v2654, 64
        %v3643 = vpop.permute.xlu0 %3642
        %3644 = vrot.lane.b32.xlu0 %v2655, 64
        %v3645 = vpop.permute.xlu0 %3644
        %3646 = vrot.lane.b32.xlu0 %v2656, 64
        %v3647 = vpop.permute.xlu0 %3646
        %3648 = vrot.lane.b32.xlu0 %v2657, 64
        %v3649 = vpop.permute.xlu0 %3648
        %v3682 = vsel %vm1729, %v2369, %v2691
        %v3683 = vsel %vm1729, %v2370, %v2693
        %v3684 = vsel %vm1729, %v2371, %v2695
        %v3685 = vsel %vm1729, %v2372, %v2697
        %v3686 = vsel %vm1729, %v2373, %v2699
        %v3687 = vsel %vm1729, %v2374, %v2701
        %v3688 = vsel %vm1729, %v2375, %v2703
        %v3689 = vsel %vm1729, %v2376, %v2705
        %v3690 = vsel %vm1729, %v2377, %v2707
        %v3691 = vsel %vm1729, %v2378, %v2709
        %v3692 = vsel %vm1729, %v2379, %v2711
        %v3693 = vsel %vm1729, %v2380, %v2713
        %v3694 = vsel %vm1729, %v2381, %v2715
        %v3695 = vsel %vm1729, %v2382, %v2717
        %v3696 = vsel %vm1729, %v2383, %v2719
        %v3697 = vsel %vm1729, %v2384, %v2721
        %v3698 = vsel %vm1729, %v2385, %v2723
        %v3699 = vsel %vm1729, %v2386, %v2725
        %v3700 = vsel %vm1729, %v2387, %v2727
        %v3701 = vsel %vm1729, %v2388, %v2729
        %v3702 = vsel %vm1729, %v2389, %v2731
        %v3703 = vsel %vm1729, %v2390, %v2733
        %v3704 = vsel %vm1729, %v2391, %v2735
        %v3705 = vsel %vm1729, %v2392, %v2737
        %v3706 = vsel %vm1729, %v2393, %v2739
        %v3707 = vsel %vm1729, %v2394, %v2741
        %v3708 = vsel %vm1729, %v2395, %v2743
        %v3709 = vsel %vm1729, %v2396, %v2745
        %v3710 = vsel %vm1729, %v2397, %v2747
        %v3711 = vsel %vm1729, %v2398, %v2749
        %v3712 = vsel %vm1729, %v2399, %v2751
        %v3713 = vsel %vm1729, %v2400, %v2753
        %v3714 = vsel %vm1795, %v3682, %v2819
        %v3715 = vsel %vm1795, %v3683, %v2821
        %v3716 = vsel %vm1795, %v3684, %v2823
        %v3717 = vsel %vm1795, %v3685, %v2825
        %v3718 = vsel %vm1795, %v3686, %v2827
        %v3719 = vsel %vm1795, %v3687, %v2829
        %v3720 = vsel %vm1795, %v3688, %v2831
        %v3721 = vsel %vm1795, %v3689, %v2833
        %v3722 = vsel %vm1795, %v3690, %v2835
        %v3723 = vsel %vm1795, %v3691, %v2837
        %v3724 = vsel %vm1795, %v3692, %v2839
        %v3725 = vsel %vm1795, %v3693, %v2841
        %v3726 = vsel %vm1795, %v3694, %v2843
        %v3727 = vsel %vm1795, %v3695, %v2845
        %v3728 = vsel %vm1795, %v3696, %v2847
        %v3729 = vsel %vm1795, %v3697, %v2849
        %v3730 = vsel %vm1795, %v3698, %v2851
        %v3731 = vsel %vm1795, %v3699, %v2853
        %v3732 = vsel %vm1795, %v3700, %v2855
        %v3733 = vsel %vm1795, %v3701, %v2857
        %v3734 = vsel %vm1795, %v3702, %v2859
        %v3735 = vsel %vm1795, %v3703, %v2861
        %v3736 = vsel %vm1795, %v3704, %v2863
        %v3737 = vsel %vm1795, %v3705, %v2865
        %v3738 = vsel %vm1795, %v3706, %v2867
        %v3739 = vsel %vm1795, %v3707, %v2869
        %v3740 = vsel %vm1795, %v3708, %v2871
        %v3741 = vsel %vm1795, %v3709, %v2873
        %v3742 = vsel %vm1795, %v3710, %v2875
        %v3743 = vsel %vm1795, %v3711, %v2877
        %v3744 = vsel %vm1795, %v3712, %v2879
        %v3745 = vsel %vm1795, %v3713, %v2881
        %v3746 = vsel %vm1861, %v3714, %v2947
        %v3747 = vsel %vm1861, %v3715, %v2949
        %v3748 = vsel %vm1861, %v3716, %v2951
        %v3749 = vsel %vm1861, %v3717, %v2953
        %v3750 = vsel %vm1861, %v3718, %v2955
        %v3751 = vsel %vm1861, %v3719, %v2957
        %v3752 = vsel %vm1861, %v3720, %v2959
        %v3753 = vsel %vm1861, %v3721, %v2961
        %v3754 = vsel %vm1861, %v3722, %v2963
        %v3755 = vsel %vm1861, %v3723, %v2965
        %v3756 = vsel %vm1861, %v3724, %v2967
        %v3757 = vsel %vm1861, %v3725, %v2969
        %v3758 = vsel %vm1861, %v3726, %v2971
        %v3759 = vsel %vm1861, %v3727, %v2973
        %v3760 = vsel %vm1861, %v3728, %v2975
        %v3761 = vsel %vm1861, %v3729, %v2977
        %v3762 = vsel %vm1861, %v3730, %v2979
        %v3763 = vsel %vm1861, %v3731, %v2981
        %v3764 = vsel %vm1861, %v3732, %v2983
        %v3765 = vsel %vm1861, %v3733, %v2985
        %v3766 = vsel %vm1861, %v3734, %v2987
        %v3767 = vsel %vm1861, %v3735, %v2989
        %v3768 = vsel %vm1861, %v3736, %v2991
        %v3769 = vsel %vm1861, %v3737, %v2993
        %v3770 = vsel %vm1861, %v3738, %v2995
        %v3771 = vsel %vm1861, %v3739, %v2997
        %v3772 = vsel %vm1861, %v3740, %v2999
        %v3773 = vsel %vm1861, %v3741, %v3001
        %v3774 = vsel %vm1861, %v3742, %v3003
        %v3775 = vsel %vm1861, %v3743, %v3005
        %v3776 = vsel %vm1861, %v3744, %v3007
        %v3777 = vsel %vm1861, %v3745, %v3009
        %v3778 = vsel %vm1927, %v3746, %v3075
        %v3779 = vsel %vm1927, %v3747, %v3077
        %v3780 = vsel %vm1927, %v3748, %v3079
        %v3781 = vsel %vm1927, %v3749, %v3081
        %v3782 = vsel %vm1927, %v3750, %v3083
        %v3783 = vsel %vm1927, %v3751, %v3085
        %v3784 = vsel %vm1927, %v3752, %v3087
        %v3785 = vsel %vm1927, %v3753, %v3089
        %v3786 = vsel %vm1927, %v3754, %v3091
        %v3787 = vsel %vm1927, %v3755, %v3093
        %v3788 = vsel %vm1927, %v3756, %v3095
        %v3789 = vsel %vm1927, %v3757, %v3097
        %v3790 = vsel %vm1927, %v3758, %v3099
        %v3791 = vsel %vm1927, %v3759, %v3101
        %v3792 = vsel %vm1927, %v3760, %v3103
        %v3793 = vsel %vm1927, %v3761, %v3105
        %v3794 = vsel %vm1927, %v3762, %v3107
        %v3795 = vsel %vm1927, %v3763, %v3109
        %v3796 = vsel %vm1927, %v3764, %v3111
        %v3797 = vsel %vm1927, %v3765, %v3113
        %v3798 = vsel %vm1927, %v3766, %v3115
        %v3799 = vsel %vm1927, %v3767, %v3117
        %v3800 = vsel %vm1927, %v3768, %v3119
        %v3801 = vsel %vm1927, %v3769, %v3121
        %v3802 = vsel %vm1927, %v3770, %v3123
        %v3803 = vsel %vm1927, %v3771, %v3125
        %v3804 = vsel %vm1927, %v3772, %v3127
        %v3805 = vsel %vm1927, %v3773, %v3129
        %v3806 = vsel %vm1927, %v3774, %v3131
        %v3807 = vsel %vm1927, %v3775, %v3133
        %v3808 = vsel %vm1927, %v3776, %v3135
        %v3809 = vsel %vm1927, %v3777, %v3137
        %vm3810 = vcmask 326656
        %v3811 = vsel %vm3810, %v3778, %v3203
        %v3812 = vsel %vm3810, %v3779, %v3205
        %v3813 = vsel %vm3810, %v3780, %v3207
        %v3814 = vsel %vm3810, %v3781, %v3209
        %v3815 = vsel %vm3810, %v3782, %v3211
        %v3816 = vsel %vm3810, %v3783, %v3213
        %v3817 = vsel %vm3810, %v3784, %v3215
        %v3818 = vsel %vm3810, %v3785, %v3217
        %v3819 = vsel %vm3810, %v3786, %v3219
        %v3820 = vsel %vm3810, %v3787, %v3221
        %v3821 = vsel %vm3810, %v3788, %v3223
        %v3822 = vsel %vm3810, %v3789, %v3225
        %v3823 = vsel %vm3810, %v3790, %v3227
        %v3824 = vsel %vm3810, %v3791, %v3229
        %v3825 = vsel %vm3810, %v3792, %v3231
        %v3826 = vsel %vm3810, %v3793, %v3233
        %v3827 = vsel %vm3810, %v3794, %v3235
        %v3828 = vsel %vm3810, %v3795, %v3237
        %v3829 = vsel %vm3810, %v3796, %v3239
        %v3830 = vsel %vm3810, %v3797, %v3241
        %v3831 = vsel %vm3810, %v3798, %v3243
        %v3832 = vsel %vm3810, %v3799, %v3245
        %v3833 = vsel %vm3810, %v3800, %v3247
        %v3834 = vsel %vm3810, %v3801, %v3249
        %v3835 = vsel %vm3810, %v3802, %v3251
        %v3836 = vsel %vm3810, %v3803, %v3253
        %v3837 = vsel %vm3810, %v3804, %v3255
        %v3838 = vsel %vm3810, %v3805, %v3257
        %v3839 = vsel %vm3810, %v3806, %v3259
        %v3840 = vsel %vm3810, %v3807, %v3261
        %v3841 = vsel %vm3810, %v3808, %v3263
        %v3842 = vsel %vm3810, %v3809, %v3265
        %vm3843 = vcmask 392192
        %v3844 = vsel %vm3843, %v3811, %v3331
        %v3845 = vsel %vm3843, %v3812, %v3333
        %v3846 = vsel %vm3843, %v3813, %v3335
        %v3847 = vsel %vm3843, %v3814, %v3337
        %v3848 = vsel %vm3843, %v3815, %v3339
        %v3849 = vsel %vm3843, %v3816, %v3341
        %v3850 = vsel %vm3843, %v3817, %v3343
        %v3851 = vsel %vm3843, %v3818, %v3345
        %v3852 = vsel %vm3843, %v3819, %v3347
        %v3853 = vsel %vm3843, %v3820, %v3349
        %v3854 = vsel %vm3843, %v3821, %v3351
        %v3855 = vsel %vm3843, %v3822, %v3353
        %v3856 = vsel %vm3843, %v3823, %v3355
        %v3857 = vsel %vm3843, %v3824, %v3357
        %v3858 = vsel %vm3843, %v3825, %v3359
        %v3859 = vsel %vm3843, %v3826, %v3361
        %v3860 = vsel %vm3843, %v3827, %v3363
        %v3861 = vsel %vm3843, %v3828, %v3365
        %v3862 = vsel %vm3843, %v3829, %v3367
        %v3863 = vsel %vm3843, %v3830, %v3369
        %v3864 = vsel %vm3843, %v3831, %v3371
        %v3865 = vsel %vm3843, %v3832, %v3373
        %v3866 = vsel %vm3843, %v3833, %v3375
        %v3867 = vsel %vm3843, %v3834, %v3377
        %v3868 = vsel %vm3843, %v3835, %v3379
        %v3869 = vsel %vm3843, %v3836, %v3381
        %v3870 = vsel %vm3843, %v3837, %v3383
        %v3871 = vsel %vm3843, %v3838, %v3385
        %v3872 = vsel %vm3843, %v3839, %v3387
        %v3873 = vsel %vm3843, %v3840, %v3389
        %v3874 = vsel %vm3843, %v3841, %v3391
        %v3875 = vsel %vm3843, %v3842, %v3393
        %vm3876 = vcmask 457728
        %v3877 = vsel %vm3876, %v3844, %v3459
        %v3878 = vsel %vm3876, %v3845, %v3461
        %v3879 = vsel %vm3876, %v3846, %v3463
        %v3880 = vsel %vm3876, %v3847, %v3465
        %v3881 = vsel %vm3876, %v3848, %v3467
        %v3882 = vsel %vm3876, %v3849, %v3469
        %v3883 = vsel %vm3876, %v3850, %v3471
        %v3884 = vsel %vm3876, %v3851, %v3473
        %v3885 = vsel %vm3876, %v3852, %v3475
        %v3886 = vsel %vm3876, %v3853, %v3477
        %v3887 = vsel %vm3876, %v3854, %v3479
        %v3888 = vsel %vm3876, %v3855, %v3481
        %v3889 = vsel %vm3876, %v3856, %v3483
        %v3890 = vsel %vm3876, %v3857, %v3485
        %v3891 = vsel %vm3876, %v3858, %v3487
        %v3892 = vsel %vm3876, %v3859, %v3489
        %v3893 = vsel %vm3876, %v3860, %v3491
        %v3894 = vsel %vm3876, %v3861, %v3493
        %v3895 = vsel %vm3876, %v3862, %v3495
        %v3896 = vsel %vm3876, %v3863, %v3497
        %v3897 = vsel %vm3876, %v3864, %v3499
        %v3898 = vsel %vm3876, %v3865, %v3501
        %v3899 = vsel %vm3876, %v3866, %v3503
        %v3900 = vsel %vm3876, %v3867, %v3505
        %v3901 = vsel %vm3876, %v3868, %v3507
        %v3902 = vsel %vm3876, %v3869, %v3509
        %v3903 = vsel %vm3876, %v3870, %v3511
        %v3904 = vsel %vm3876, %v3871, %v3513
        %v3905 = vsel %vm3876, %v3872, %v3515
        %v3906 = vsel %vm3876, %v3873, %v3517
        %v3907 = vsel %vm3876, %v3874, %v3519
        %v3908 = vsel %vm3876, %v3875, %v3521
        %vm3909 = vcmask 523264
        %v3910 = vsel %vm3909, %v3877, %v3587
        %v3911 = vsel %vm3909, %v3878, %v3589
        %v3912 = vsel %vm3909, %v3879, %v3591
        %v3913 = vsel %vm3909, %v3880, %v3593
        %v3914 = vsel %vm3909, %v3881, %v3595
        %v3915 = vsel %vm3909, %v3882, %v3597
        %v3916 = vsel %vm3909, %v3883, %v3599
        %v3917 = vsel %vm3909, %v3884, %v3601
        %v3918 = vsel %vm3909, %v3885, %v3603
        %v3919 = vsel %vm3909, %v3886, %v3605
        %v3920 = vsel %vm3909, %v3887, %v3607
        %v3921 = vsel %vm3909, %v3888, %v3609
        %v3922 = vsel %vm3909, %v3889, %v3611
        %v3923 = vsel %vm3909, %v3890, %v3613
        %v3924 = vsel %vm3909, %v3891, %v3615
        %v3925 = vsel %vm3909, %v3892, %v3617
        %v3926 = vsel %vm3909, %v3893, %v3619
        %v3927 = vsel %vm3909, %v3894, %v3621
        %v3928 = vsel %vm3909, %v3895, %v3623
        %v3929 = vsel %vm3909, %v3896, %v3625
        %v3930 = vsel %vm3909, %v3897, %v3627
        %v3931 = vsel %vm3909, %v3898, %v3629
        %v3932 = vsel %vm3909, %v3899, %v3631
        %v3933 = vsel %vm3909, %v3900, %v3633
        %v3934 = vsel %vm3909, %v3901, %v3635
        %v3935 = vsel %vm3909, %v3902, %v3637
        %v3936 = vsel %vm3909, %v3903, %v3639
        %v3937 = vsel %vm3909, %v3904, %v3641
        %v3938 = vsel %vm3909, %v3905, %v3643
        %v3939 = vsel %vm3909, %v3906, %v3645
        %v3940 = vsel %vm3909, %v3907, %v3647
        %v3941 = vsel %vm3909, %v3908, %v3649
        %v3942 = vld [vmem:[%s3] sm:$0xff]
        %v3943 = vld [vmem:[%s3 + $0x8] sm:$0xff]
        %v3944 = vld [vmem:[%s3 + $0x10] sm:$0xff]
        %v3945 = vld [vmem:[%s3 + $0x18] sm:$0xff]
        %v3946 = vld [vmem:[%s3 + $0x20] sm:$0xff]
        %v3947 = vld [vmem:[%s3 + $0x28] sm:$0xff]
        %v3948 = vld [vmem:[%s3 + $0x30] sm:$0xff]
        %v3949 = vld [vmem:[%s3 + $0x38] sm:$0xff]
        %v3950 = vld [vmem:[%s3 + $0x40] sm:$0xff]
        %v3951 = vld [vmem:[%s4] sm:$0x1]
        %v3953 = vperm.slane %v3951, 0
        %vm3955 = vcmask 588800
        %v3957 = vsel %vm3955, %v3910, 0
        %v3960 = vsel %vm3955, %v3911, 0
        %v3963 = vsel %vm3955, %v3912, 0
        %v3966 = vsel %vm3955, %v3913, 0
        %v3969 = vsel %vm3955, %v3914, 0
        %v3972 = vsel %vm3955, %v3915, 0
        %v3975 = vsel %vm3955, %v3916, 0
        %v3978 = vsel %vm3955, %v3917, 0
        %v3981 = vsel %vm3955, %v3918, 0
        %v3984 = vsel %vm3955, %v3919, 0
        %v3987 = vsel %vm3955, %v3920, 0
        %v3990 = vsel %vm3955, %v3921, 0
        %v3993 = vsel %vm3955, %v3922, 0
        %v3996 = vsel %vm3955, %v3923, 0
        %v3999 = vsel %vm3955, %v3924, 0
        %v4002 = vsel %vm3955, %v3925, 0
        %v4005 = vsel %vm3955, %v3926, 0
        %v4008 = vsel %vm3955, %v3927, 0
        %v4011 = vsel %vm3955, %v3928, 0
        %v4014 = vsel %vm3955, %v3929, 0
        %v4017 = vsel %vm3955, %v3930, 0
        %v4020 = vsel %vm3955, %v3931, 0
        %v4023 = vsel %vm3955, %v3932, 0
        %v4026 = vsel %vm3955, %v3933, 0
        %v4029 = vsel %vm3955, %v3934, 0
        %v4032 = vsel %vm3955, %v3935, 0
        %v4035 = vsel %vm3955, %v3936, 0
        %v4038 = vsel %vm3955, %v3937, 0
        %v4041 = vsel %vm3955, %v3938, 0
        %v4044 = vsel %vm3955, %v3939, 0
        %v4047 = vsel %vm3955, %v3940, 0
        %v4050 = vsel %vm3955, %v3941, 0
        %4052 = vmatpush.msra.mxu0 0.0
        %4053 = vmatpush.msra.mxu0 0.0
        %4054 = vmatpush.msra.mxu0 0.0
        %4055 = vmatpush.msra.mxu0 0.0
        %4056 = vmatpush.msra.mxu0 0.0
        %4057 = vmatpush.msra.mxu0 0.0
        %4058 = vmatpush.msra.mxu0 0.0
        %4059 = vmatpush.msra.mxu0 %v3950
        %4060 = vmatpush.msra.mxu0 %v3949
        %4061 = vmatpush.msra.mxu0 %v3948
        %4062 = vmatpush.msra.mxu0 %v3947
        %4063 = vmatpush.msra.mxu0 %v3946
        %4064 = vmatpush.msra.mxu0 %v3945
        %4065 = vmatpush.msra.mxu0 %v3944
        %4066 = vmatpush.msra.mxu0 %v3943
        %4067 = vmatpush.msra.mxu0 %v3942
        %4068 = vmatmul.f32.gmra.mxu0 %v3957
        %v4069 = vpop.f32.mrf.mxu0
        %v4070 = vadd.f32 %v3953, %v4069
        %4071 = vmatmul.f32.gmra.mxu0 %v3960
        %v4072 = vpop.f32.mrf.mxu0
        %v4073 = vadd.f32 %v3953, %v4072
        %4074 = vmatmul.f32.gmra.mxu0 %v3963
        %v4075 = vpop.f32.mrf.mxu0
        %v4076 = vadd.f32 %v3953, %v4075
        %4077 = vmatmul.f32.gmra.mxu0 %v3966
        %v4078 = vpop.f32.mrf.mxu0
        %v4079 = vadd.f32 %v3953, %v4078
        %4080 = vmatmul.f32.gmra.mxu0 %v3969
        %v4081 = vpop.f32.mrf.mxu0
        %v4082 = vadd.f32 %v3953, %v4081
        %4083 = vmatmul.f32.gmra.mxu0 %v3972
        %v4084 = vpop.f32.mrf.mxu0
        %v4085 = vadd.f32 %v3953, %v4084
        %4086 = vmatmul.f32.gmra.mxu0 %v3975
        %v4087 = vpop.f32.mrf.mxu0
        %v4088 = vadd.f32 %v3953, %v4087
        %4089 = vmatmul.f32.gmra.mxu0 %v3978
        %v4090 = vpop.f32.mrf.mxu0
        %v4091 = vadd.f32 %v3953, %v4090
        %4092 = vmatmul.f32.gmra.mxu0 %v3981
        %v4093 = vpop.f32.mrf.mxu0
        %v4094 = vadd.f32 %v3953, %v4093
        %4095 = vmatmul.f32.gmra.mxu0 %v3984
        %v4096 = vpop.f32.mrf.mxu0
        %v4097 = vadd.f32 %v3953, %v4096
        %4098 = vmatmul.f32.gmra.mxu0 %v3987
        %v4099 = vpop.f32.mrf.mxu0
        %v4100 = vadd.f32 %v3953, %v4099
        %4101 = vmatmul.f32.gmra.mxu0 %v3990
        %v4102 = vpop.f32.mrf.mxu0
        %v4103 = vadd.f32 %v3953, %v4102
        %4104 = vmatmul.f32.gmra.mxu0 %v3993
        %v4105 = vpop.f32.mrf.mxu0
        %v4106 = vadd.f32 %v3953, %v4105
        %4107 = vmatmul.f32.gmra.mxu0 %v3996
        %v4108 = vpop.f32.mrf.mxu0
        %v4109 = vadd.f32 %v3953, %v4108
        %4110 = vmatmul.f32.gmra.mxu0 %v3999
        %v4111 = vpop.f32.mrf.mxu0
        %v4112 = vadd.f32 %v3953, %v4111
        %4113 = vmatmul.f32.gmra.mxu0 %v4002
        %v4114 = vpop.f32.mrf.mxu0
        %v4115 = vadd.f32 %v3953, %v4114
        %4116 = vmatmul.f32.gmra.mxu0 %v4005
        %v4117 = vpop.f32.mrf.mxu0
        %v4118 = vadd.f32 %v3953, %v4117
        %4119 = vmatmul.f32.gmra.mxu0 %v4008
        %v4120 = vpop.f32.mrf.mxu0
        %v4121 = vadd.f32 %v3953, %v4120
        %4122 = vmatmul.f32.gmra.mxu0 %v4011
        %v4123 = vpop.f32.mrf.mxu0
        %v4124 = vadd.f32 %v3953, %v4123
        %4125 = vmatmul.f32.gmra.mxu0 %v4014
        %v4126 = vpop.f32.mrf.mxu0
        %v4127 = vadd.f32 %v3953, %v4126
        %4128 = vmatmul.f32.gmra.mxu0 %v4017
        %v4129 = vpop.f32.mrf.mxu0
        %v4130 = vadd.f32 %v3953, %v4129
        %4131 = vmatmul.f32.gmra.mxu0 %v4020
        %v4132 = vpop.f32.mrf.mxu0
        %v4133 = vadd.f32 %v3953, %v4132
        %4134 = vmatmul.f32.gmra.mxu0 %v4023
        %v4135 = vpop.f32.mrf.mxu0
        %v4136 = vadd.f32 %v3953, %v4135
        %4137 = vmatmul.f32.gmra.mxu0 %v4026
        %v4138 = vpop.f32.mrf.mxu0
        %v4139 = vadd.f32 %v3953, %v4138
        %4140 = vmatmul.f32.gmra.mxu0 %v4029
        %v4141 = vpop.f32.mrf.mxu0
        %v4142 = vadd.f32 %v3953, %v4141
        %4143 = vmatmul.f32.gmra.mxu0 %v4032
        %v4144 = vpop.f32.mrf.mxu0
        %v4145 = vadd.f32 %v3953, %v4144
        %4146 = vmatmul.f32.gmra.mxu0 %v4035
        %v4147 = vpop.f32.mrf.mxu0
        %v4148 = vadd.f32 %v3953, %v4147
        %4149 = vmatmul.f32.gmra.mxu0 %v4038
        %v4150 = vpop.f32.mrf.mxu0
        %v4151 = vadd.f32 %v3953, %v4150
        %4152 = vmatmul.f32.gmra.mxu0 %v4041
        %v4153 = vpop.f32.mrf.mxu0
        %v4154 = vadd.f32 %v3953, %v4153
        %4155 = vmatmul.f32.gmra.mxu0 %v4044
        %v4156 = vpop.f32.mrf.mxu0
        %v4157 = vadd.f32 %v3953, %v4156
        %4158 = vmatmul.f32.gmra.mxu0 %v4047
        %v4159 = vpop.f32.mrf.mxu0
        %v4160 = vadd.f32 %v3953, %v4159
        %4161 = vmatmul.f32.gmra.mxu0 %v4050
        %v4162 = vpop.f32.mrf.mxu0
        %v4163 = vadd.f32 %v3953, %v4162
        %4164 = vdwg.mxu0
        %4165 = vxpose.xlu0.b32.start [1/16] %v4070, 128
        %4166 = vxpose.xlu0.b32.cont [2/16] %v4073, 128
        %4167 = vxpose.xlu0.b32.cont [3/16] %v4076, 128
        %4168 = vxpose.xlu0.b32.cont [4/16] %v4079, 128
        %4169 = vxpose.xlu0.b32.cont [5/16] %v4082, 128
        %4170 = vxpose.xlu0.b32.cont [6/16] %v4085, 128
        %4171 = vxpose.xlu0.b32.cont [7/16] %v4088, 128
        %4172 = vxpose.xlu0.b32.cont [8/16] %v4091, 128
        %4173 = vxpose.xlu0.b32.cont [9/16] %v4094, 128
        %4174 = vxpose.xlu0.b32.cont [10/16] %v4097, 128
        %4175 = vxpose.xlu0.b32.cont [11/16] %v4100, 128
        %4176 = vxpose.xlu0.b32.cont [12/16] %v4103, 128
        %4177 = vxpose.xlu0.b32.cont [13/16] %v4106, 128
        %4178 = vxpose.xlu0.b32.cont [14/16] %v4109, 128
        %4179 = vxpose.xlu0.b32.cont [15/16] %v4112, 128
        %4180 = vxpose.xlu0.b32.end [16/16] %v4115, 128
        %v4181 = vpop.trf.xlu0
        %v4182 = vpop.trf.xlu0
        %v4183 = vpop.trf.xlu0
        %v4184 = vpop.trf.xlu0
        %v4185 = vpop.trf.xlu0
        %v4186 = vpop.trf.xlu0
        %v4187 = vpop.trf.xlu0
        %v4188 = vpop.trf.xlu0
        %v4189 = vpop.trf.xlu0
        %v4190 = vpop.trf.xlu0
        %v4191 = vpop.trf.xlu0
        %v4192 = vpop.trf.xlu0
        %v4193 = vpop.trf.xlu0
        %v4194 = vpop.trf.xlu0
        %v4195 = vpop.trf.xlu0
        %v4196 = vpop.trf.xlu0
        %4197 = vxpose.xlu0.b32.start [1/16] %v4118, 128
        %4198 = vxpose.xlu0.b32.cont [2/16] %v4121, 128
        %4199 = vxpose.xlu0.b32.cont [3/16] %v4124, 128
        %4200 = vxpose.xlu0.b32.cont [4/16] %v4127, 128
        %4201 = vxpose.xlu0.b32.cont [5/16] %v4130, 128
        %4202 = vxpose.xlu0.b32.cont [6/16] %v4133, 128
        %4203 = vxpose.xlu0.b32.cont [7/16] %v4136, 128
        %4204 = vxpose.xlu0.b32.cont [8/16] %v4139, 128
        %4205 = vxpose.xlu0.b32.cont [9/16] %v4142, 128
        %4206 = vxpose.xlu0.b32.cont [10/16] %v4145, 128
        %4207 = vxpose.xlu0.b32.cont [11/16] %v4148, 128
        %4208 = vxpose.xlu0.b32.cont [12/16] %v4151, 128
        %4209 = vxpose.xlu0.b32.cont [13/16] %v4154, 128
        %4210 = vxpose.xlu0.b32.cont [14/16] %v4157, 128
        %4211 = vxpose.xlu0.b32.cont [15/16] %v4160, 128
        %4212 = vxpose.xlu0.b32.end [16/16] %v4163, 128
        %v4213 = vpop.trf.xlu0
        %v4214 = vpop.trf.xlu0
        %v4215 = vpop.trf.xlu0
        %v4216 = vpop.trf.xlu0
        %v4217 = vpop.trf.xlu0
        %v4218 = vpop.trf.xlu0
        %v4219 = vpop.trf.xlu0
        %v4220 = vpop.trf.xlu0
        %v4221 = vpop.trf.xlu0
        %v4222 = vpop.trf.xlu0
        %v4223 = vpop.trf.xlu0
        %v4224 = vpop.trf.xlu0
        %v4225 = vpop.trf.xlu0
        %v4226 = vpop.trf.xlu0
        %v4227 = vpop.trf.xlu0
        %v4228 = vpop.trf.xlu0
        %4229 = vst [vmem:[%s252] sm:$0xff] %v4181
        %4230 = vst [vmem:[%s252 + $0x8] sm:$0xff] %v4213
        %p4231 = scmp.lt.s32.totalorder %s21, 1
        %s4232 = scalar_select %p4231, %s21, 1
        %s4233 = smul.addr %s4232, 2
        %s4234 = smul.addr %s4233, 8
        %s4235 = scalar_lea.vmem %s5, %s4234
        %s4236 = sand.u32 %s165, 1
        %s4237 = scalar_lea.sflag [#allocation5], %s4236
        %s4238 = sand.u32 %s165, 1
        %s4239 = smul.addr %s4238, 16
        %s4240 = scalar_lea.vmem [#allocation4], %s4239
        // Predicated region
        $region41: #{model_wrapper_forward.1} parent=39 // pred_check
          %p4241 = pneg %p149
        $region42: #{model_wrapper_forward.1} parent=39 // pred_check_branch
          %4243 = sbr.rel (%p4241) target = $region44
        $region43: #{model_wrapper_forward.1} parent=39 // pred_region
          _
        $region44: #{model_wrapper_forward.1} parent=39 // pred_fallthru
          _
        // Predicated region
        $region45: #{model_wrapper_forward.1} parent=39 // pred_check
          %p4244 = pneg %p175
        $region46: #{model_wrapper_forward.1} parent=39 // pred_check_branch
          %4246 = sbr.rel (%p4244) target = $region48
        $region47: #{model_wrapper_forward.1} parent=39 // pred_region
          %4248 = vsyncadd %s4237, 0
          %s4249 = smul.addr %s21, 2
          %s4250 = smul.addr %s4249, 8
          %s4251 = scalar_lea.hbm %s6, %s4250
          %s4253 = sshll.u32 %s4240, 4
          %s4254 = int_to_ptr.vmem [resolvable:$true] %s4253
          %s4255 = sshll.u32 %s4251, 4
          %s4256 = int_to_ptr.hbm [resolvable:$true] %s4255
          %4258 = dma.vmem_to_hbm [thread:$0]  %s4254, 256, %s4256, %s4237
        $region48: #{model_wrapper_forward.1} parent=39 // pred_fallthru
          _
      $region40: #{model_wrapper_forward.1} parent=5 // pred_fallthru
        _
      %p4259 = scmp.le.s32.totalorder 2, %s16
      // Predicated region
      $region49: #{model_wrapper_forward.1} parent=5 // pred_check
        %p4260 = pneg %p4259
      $region50: #{model_wrapper_forward.1} parent=5 // pred_check_branch
        %4262 = sbr.rel (%p4260) target = $region52
      $region51: #{model_wrapper_forward.1} parent=5 // pred_region
        %s4263 = ssub.s32 %s16, 2
        // Predicated region
        $region53: #{model_wrapper_forward.1} parent=51 // pred_check
          %p4264 = pneg %p155
        $region54: #{model_wrapper_forward.1} parent=51 // pred_check_branch
          %4266 = sbr.rel (%p4264) target = $region56
        $region55: #{model_wrapper_forward.1} parent=51 // pred_region
          %p4267 = scmp.lt.s32.totalorder %s22, 1
          %s4268 = scalar_select %p4267, %s22, 1
          %s4269 = smul.addr %s4268, 2
          %s4270 = smul.addr %s4269, 8
          %s4271 = scalar_lea.vmem %s5, %s4270
        $region56: #{model_wrapper_forward.1} parent=51 // pred_fallthru
          _
        // Predicated region
        $region57: #{model_wrapper_forward.1} parent=51 // pred_check
          %p4272 = pneg %p181
        $region58: #{model_wrapper_forward.1} parent=51 // pred_check_branch
          %4274 = sbr.rel (%p4272) target = $region60
        $region59: #{model_wrapper_forward.1} parent=51 // pred_region
          %s4275 = sand.u32 %s166, 1
          %s4276 = scalar_lea.sflag [#allocation5], %s4275
          %s4277 = sand.u32 %s166, 1
          %s4278 = smul.addr %s4277, 16
          %s4279 = scalar_lea.vmem [#allocation4], %s4278
          %4281 = dma.done %s4276, 256
        $region60: #{model_wrapper_forward.1} parent=51 // pred_fallthru
          _
      $region52: #{model_wrapper_forward.1} parent=5 // pred_fallthru
        _
    $region6: #{model_wrapper_forward.1} parent=1 // loop_footer
      %s20 = sadd.s32 1, %s16
    $region7: #{model_wrapper_forward.1} parent=1 // loop_footer_branch
      %15 = sbr.rel target = $region3
    $region8: #{model_wrapper_forward.1} parent=1 // loop_exit
      _
    %4282 = vsyncpa [#allocation5], 1
    %s4283 = scalar_lea.sflag [#allocation5], 1
    %4284 = vsyncpa %s4283, 1

</llo_original>
